<compile_context>
chip_gen: v7x
topology: tpu7x:2x2x1
jax: 0.10.0
libtpu: 0.0.40
codegen_flags: <defaults>
</compile_context>

<pallas_src>
import jax
import jax.numpy as jnp
from jax.experimental import pallas as pl
from jax.experimental.pallas import tpu as pltpu

# ---------------- small CLIPVisionConfig-like hyperparameters ----------------
BATCH = 2
NUM_CHANNELS = 3
IMAGE_SIZE = 16
PATCH_SIZE = 4
HIDDEN = 64
HEADS = 4
HEAD_DIM = HIDDEN // HEADS
INTERMEDIATE = 128
NUM_LAYERS = 2
LN_EPS = 1e-5

NUM_PATCHES = (IMAGE_SIZE // PATCH_SIZE) ** 2
SEQ = NUM_PATCHES + 1
CPP = NUM_CHANNELS * PATCH_SIZE * PATCH_SIZE
SCALE = HEAD_DIM ** -0.5
# lane-aligned stride so Q / K / V each start on a 128-lane boundary in the fused qkv output
QKV_STRIDE = ((HIDDEN + 127) // 128) * 128


def _layernorm(h, w, b):
    """Two-pass (mean-centered) layernorm — matches the reference exactly."""
    m = jnp.mean(h, axis=-1, keepdims=True)
    c = h - m
    var = jnp.mean(c * c, axis=-1, keepdims=True)
    return c * jax.lax.rsqrt(var + LN_EPS) * w + b


# ---------------------------------------------------------------------------
# Fused kernel: one grid step = one batch element's full forward pass
#   patch-embed + pre-LN  ->  NUM_LAYERS x (attn + MLP)  ->  last-hidden + pooled post-LN
# ---------------------------------------------------------------------------
def fused_clip_vit_kernel(
        patches_ref, convw_ref, poscls_ref, plnw_ref, plnb_ref,
        ln1w_ref, ln1b_ref, qkvw_ref, qkvb_ref, ow_ref, ob_ref,
        ln2w_ref, ln2b_ref, f1w_ref, f1b_ref, f2w_ref, f2b_ref,
        postw_ref, postb_ref,
        hidden_ref, pooled_ref,
        ctx_scr):
    # ---- patch embedding + pre-LN (single aligned matmul; CLS folded into pos) ----
    pe = jnp.dot(patches_ref[0], convw_ref[...],
                 preferred_element_type=jnp.float32)                 # (SEQ, D)
    x = _layernorm(pe + poscls_ref[...], plnw_ref[...], plnb_ref[...])

    # ---- encoder layers: static unroll, weights VMEM-resident (indexed per layer) ----
    for l in range(NUM_LAYERS):
        # -------- self-attention --------
        h = _layernorm(x, ln1w_ref[l], ln1b_ref[l])
        qkv = jnp.dot(h.astype(jnp.bfloat16), qkvw_ref[l],
                      preferred_element_type=jnp.float32) + qkvb_ref[l]  # (SEQ, 3*QKV_STRIDE)
        q = qkv[:, 0 * QKV_STRIDE:0 * QKV_STRIDE + HIDDEN] * SCALE       # 128-lane aligned starts
        k = qkv[:, 1 * QKV_STRIDE:1 * QKV_STRIDE + HIDDEN]
        v = qkv[:, 2 * QKV_STRIDE:2 * QKV_STRIDE + HIDDEN]

        # per-head softmax; contexts assembled into lane bands of one (SEQ, HIDDEN) buffer
        for hh in range(HEADS):                                      # static unroll
            sl = slice(hh * HEAD_DIM, (hh + 1) * HEAD_DIM)
            s = jnp.dot(q[:, sl], k[:, sl].T,
                        preferred_element_type=jnp.float32)          # (SEQ, SEQ)
            s = s - jnp.max(s, axis=-1, keepdims=True)
            p = jnp.exp(s)
            p = p * pl.reciprocal(jnp.sum(p, axis=-1, keepdims=True), approx=True)
            ctx_h = jnp.dot(p, v[:, sl], preferred_element_type=jnp.float32)
            ctx_scr[:, sl] = ctx_h.astype(jnp.bfloat16)

        # single out-projection matmul contracting the full HIDDEN (no K=16 matmuls)
        x = x + jnp.dot(ctx_scr[...], ow_ref[l],
                        preferred_element_type=jnp.float32) + ob_ref[l]

        # -------- MLP (QuickGELU) --------
        m = _layernorm(x, ln2w_ref[l], ln2b_ref[l])
        m = jnp.dot(m.astype(jnp.bfloat16), f1w_ref[l],
                    preferred_element_type=jnp.float32) + f1b_ref[l]
        m = m * jax.nn.sigmoid(1.702 * m)
        m = jnp.dot(m.astype(jnp.bfloat16), f2w_ref[l],
                    preferred_element_type=jnp.float32) + f2b_ref[l]
        x = x + m

    # ---- epilogue: last hidden state + post-LN pooled CLS ----
    hidden_ref[0] = x
    pooled_ref[0] = _layernorm(x[0:1, :], postw_ref[...], postb_ref[...])


# ---------------------------------------------------------------------------
# Glue: im2col patch extraction (stride == kernel == PATCH_SIZE conv)
# ---------------------------------------------------------------------------
def im2col(pixel_values):
    B = pixel_values.shape[0]
    gp = IMAGE_SIZE // PATCH_SIZE
    x = pixel_values.reshape(B, NUM_CHANNELS, gp, PATCH_SIZE, gp, PATCH_SIZE)
    x = x.transpose(0, 2, 4, 1, 3, 5)                 # (B, gh, gw, C, P, P)
    return x.reshape(B, NUM_PATCHES, CPP)


def _pad_qkv(w, b):
    """Zero-pad fused QKV weight/bias so each projection starts on a 128-lane boundary."""
    if QKV_STRIDE == HIDDEN:
        return w, b
    L = w.shape[0]
    wp = jnp.zeros((L, HIDDEN, 3 * QKV_STRIDE), w.dtype)
    bp = jnp.zeros((L, 1, 3 * QKV_STRIDE), b.dtype)
    for i in range(3):
        wp = wp.at[:, :, i * QKV_STRIDE:i * QKV_STRIDE + HIDDEN].set(
            w[:, :, i * HIDDEN:(i + 1) * HIDDEN])
        bp = bp.at[:, :, i * QKV_STRIDE:i * QKV_STRIDE + HIDDEN].set(
            b[:, :, i * HIDDEN:(i + 1) * HIDDEN])
    return wp, bp


def clip_vision_transformer(pixel_values, params):
    # wrapper-side layout plumbing (plain XLA, runs once per call):
    #   * zero CLS row prepended to patches, CLS token folded into position embedding
    #     -> kernel prologue is one aligned matmul + add (no in-kernel concat / stores)
    #   * patches pre-cast to bf16 (halves DMA bytes; same rounding as an in-kernel cast)
    #   * fused QKV weight lane-padded to 128-aligned projection offsets
    patches = im2col(pixel_values.astype(jnp.float32))
    patches_ext = jnp.concatenate(
        [jnp.zeros((BATCH, 1, CPP), jnp.float32), patches], axis=1).astype(jnp.bfloat16)
    pos_cls = params["pos"].at[0:1, :].add(params["cls"])
    qkv_w_p, qkv_b_p = _pad_qkv(params["qkv_w"], params["qkv_b"])

    inputs = (patches_ext,
              params["conv_w_t"], pos_cls,
              params["pre_ln_w"], params["pre_ln_b"],
              params["ln1_w"], params["ln1_b"],
              qkv_w_p, qkv_b_p,
              params["o_w"], params["o_b"],
              params["ln2_w"], params["ln2_b"],
              params["f1_w"], params["f1_b"],
              params["f2_w"], params["f2_b"],
              params["post_ln_w"], params["post_ln_b"])

    def stacked(shape):
        return pl.BlockSpec(shape, lambda b, _n=len(shape): (0,) * _n)

    in_specs = [
        pl.BlockSpec((1, SEQ, CPP), lambda b: (b, 0, 0)),            # patches (+zero CLS row)
        stacked((CPP, HIDDEN)),                                      # conv weight (bf16)
        stacked((SEQ, HIDDEN)),                                      # pos embed (+CLS folded)
        stacked((1, HIDDEN)), stacked((1, HIDDEN)),                  # pre-LN w,b
        stacked((NUM_LAYERS, 1, HIDDEN)), stacked((NUM_LAYERS, 1, HIDDEN)),      # ln1 w,b
        stacked((NUM_LAYERS, HIDDEN, 3 * QKV_STRIDE)),                           # qkv w
        stacked((NUM_LAYERS, 1, 3 * QKV_STRIDE)),                                # qkv b
        stacked((NUM_LAYERS, HIDDEN, HIDDEN)), stacked((NUM_LAYERS, 1, HIDDEN)), # out-proj w,b
        stacked((NUM_LAYERS, 1, HIDDEN)), stacked((NUM_LAYERS, 1, HIDDEN)),      # ln2 w,b
        stacked((NUM_LAYERS, HIDDEN, INTERMEDIATE)),                             # fc1 w
        stacked((NUM_LAYERS, 1, INTERMEDIATE)),                                  # fc1 b
        stacked((NUM_LAYERS, INTERMEDIATE, HIDDEN)),                             # fc2 w
        stacked((NUM_LAYERS, 1, HIDDEN)),                                        # fc2 b
        stacked((1, HIDDEN)), stacked((1, HIDDEN)),                  # post-LN w,b
    ]
    out_shapes = (jax.ShapeDtypeStruct((BATCH, SEQ, HIDDEN), jnp.float32),
                  jax.ShapeDtypeStruct((BATCH, 1, HIDDEN), jnp.float32))

    # advisory cost estimate for the XLA scheduler around the fused custom call
    flops_layer = (2 * SEQ * HIDDEN * 3 * HIDDEN
                   + 2 * 2 * HEADS * SEQ * SEQ * HEAD_DIM
                   + 2 * SEQ * HIDDEN * HIDDEN
                   + 2 * 2 * SEQ * HIDDEN * INTERMEDIATE)
    flops = BATCH * (2 * SEQ * CPP * HIDDEN + NUM_LAYERS * flops_layer)
    transcendentals = BATCH * (NUM_LAYERS * (HEADS * SEQ * SEQ + SEQ * INTERMEDIATE)
                               + SEQ * (1 + 2 * NUM_LAYERS) + 1)
    bytes_accessed = int(sum(int(a.size) * a.dtype.itemsize for a in inputs)
                         + (BATCH * SEQ * HIDDEN + BATCH * HIDDEN) * 4)

    last_hidden, pooled3 = pl.pallas_call(
        fused_clip_vit_kernel,
        out_shape=out_shapes,
        grid=(BATCH,),
        in_specs=in_specs,
        out_specs=(pl.BlockSpec((1, SEQ, HIDDEN), lambda b: (b, 0, 0)),
                   pl.BlockSpec((1, 1, HIDDEN), lambda b: (b, 0, 0))),
        scratch_shapes=[pltpu.VMEM((SEQ, HIDDEN), jnp.bfloat16)],    # per-head ctx assembly
        compiler_params=pltpu.CompilerParams(
            dimension_semantics=("parallel",)),                      # batch -> 2 TCs on v7x
        cost_estimate=pl.CostEstimate(flops=flops, transcendentals=transcendentals,
                                      bytes_accessed=bytes_accessed),
    )(*inputs)
    return last_hidden, pooled3[:, 0, :]


# ---------------------------------------------------------------------------
# Pure-JAX f32 reference (same weights; bf16 weights upcast) for checking
# ---------------------------------------------------------------------------
def reference_forward(pixel_values, params):
    f32 = lambda a: a.astype(jnp.float32)
    pe = im2col(pixel_values) @ f32(params["conv_w_t"])
    emb = jnp.concatenate(
        [jnp.broadcast_to(params["cls"], (BATCH, 1, HIDDEN)), pe], axis=1)
    emb = emb + params["pos"][None]
    h = _layernorm(emb, params["pre_ln_w"], params["pre_ln_b"])
    for l in range(NUM_LAYERS):
        res = h
        x = _layernorm(h, params["ln1_w"][l], params["ln1_b"][l])
        qkv = x @ f32(params["qkv_w"][l]) + params["qkv_b"][l]
        q = qkv[..., 0 * HIDDEN:1 * HIDDEN] * SCALE
        k = qkv[..., 1 * HIDDEN:2 * HIDDEN]
        v = qkv[..., 2 * HIDDEN:3 * HIDDEN]
        q = q.reshape(BATCH, SEQ, HEADS, HEAD_DIM).transpose(0, 2, 1, 3)
        k = k.reshape(BATCH, SEQ, HEADS, HEAD_DIM).transpose(0, 2, 1, 3)
        v = v.reshape(BATCH, SEQ, HEADS, HEAD_DIM).transpose(0, 2, 1, 3)
        p = jax.nn.softmax(q @ jnp.swapaxes(k, -1, -2), axis=-1)
        o = (p @ v).transpose(0, 2, 1, 3).reshape(BATCH, SEQ, HIDDEN)
        h = res + (o @ f32(params["o_w"][l]) + params["o_b"][l])
        res = h
        x = _layernorm(h, params["ln2_w"][l], params["ln2_b"][l])
        x = x @ f32(params["f1_w"][l]) + params["f1_b"][l]
        x = x * jax.nn.sigmoid(1.702 * x)
        h = res + (x @ f32(params["f2_w"][l]) + params["f2_b"][l])
    pooled = _layernorm(h[:, 0, :], params["post_ln_w"], params["post_ln_b"])
    return h, pooled


# ---------------------------------------------------------------------------
# Deterministic parameter init (matmul weights stored bf16, stacked per layer)
# ---------------------------------------------------------------------------
def init_params(key):
    ks = iter(jax.random.split(key, 32))

    def nrm(shape, s=0.02, dtype=jnp.float32):
        return (jax.random.normal(next(ks), shape, jnp.float32) * s).astype(dtype)

    conv_w = nrm((HIDDEN, NUM_CHANNELS, PATCH_SIZE, PATCH_SIZE))   # (D, C, P, P)
    return {
        "conv_w_t": conv_w.reshape(HIDDEN, CPP).T.astype(jnp.bfloat16),
        "cls": nrm((1, HIDDEN), 1.0),
        "pos": nrm((SEQ, HIDDEN)),
        "pre_ln_w": 1.0 + nrm((1, HIDDEN)),
        "pre_ln_b": nrm((1, HIDDEN)),
        "post_ln_w": 1.0 + nrm((1, HIDDEN)),
        "post_ln_b": nrm((1, HIDDEN)),
        # per-layer params stacked on a leading layer axis (kept VMEM-resident in-kernel)
        "ln1_w": 1.0 + nrm((NUM_LAYERS, 1, HIDDEN)),
        "ln1_b": nrm((NUM_LAYERS, 1, HIDDEN)),
        "qkv_w": nrm((NUM_LAYERS, HIDDEN, 3 * HIDDEN), dtype=jnp.bfloat16),
        "qkv_b": nrm((NUM_LAYERS, 1, 3 * HIDDEN)),
        "o_w": nrm((NUM_LAYERS, HIDDEN, HIDDEN), dtype=jnp.bfloat16),
        "o_b": nrm((NUM_LAYERS, 1, HIDDEN)),
        "ln2_w": 1.0 + nrm((NUM_LAYERS, 1, HIDDEN)),
        "ln2_b": nrm((NUM_LAYERS, 1, HIDDEN)),
        "f1_w": nrm((NUM_LAYERS, HIDDEN, INTERMEDIATE), dtype=jnp.bfloat16),
        "f1_b": nrm((NUM_LAYERS, 1, INTERMEDIATE)),
        "f2_w": nrm((NUM_LAYERS, INTERMEDIATE, HIDDEN), dtype=jnp.bfloat16),
        "f2_b": nrm((NUM_LAYERS, 1, HIDDEN)),
    }


if __name__ == "__main__":
    key = jax.random.PRNGKey(0)
    pkey, xkey = jax.random.split(key)
    params = init_params(pkey)
    pixel_values = jax.random.normal(
        xkey, (BATCH, NUM_CHANNELS, IMAGE_SIZE, IMAGE_SIZE), jnp.float32)

    last_hidden, pooled = clip_vision_transformer(pixel_values, params)
    jax.block_until_ready(last_hidden)
    jax.block_until_ready(pooled)

    ref_last, ref_pooled = reference_forward(pixel_values, params)
    assert last_hidden.shape == (BATCH, SEQ, HIDDEN)
    assert pooled.shape == (BATCH, HIDDEN)
    # bf16 MXU operands (f32 accumulate) + approx softmax reciprocal -> loose tolerance
    assert jnp.allclose(last_hidden, ref_last, atol=2e-2, rtol=2e-2), \
        float(jnp.max(jnp.abs(last_hidden - ref_last)))
    assert jnp.allclose(pooled, ref_pooled, atol=2e-2, rtol=2e-2), \
        float(jnp.max(jnp.abs(pooled - ref_pooled)))

    print("KERNEL_OK")
</pallas_src>

<mosaic_0001>
module attributes {stable_mosaic.version = 11 : i64} {
  func.func @fused_clip_vit_kernel(%arg0: i32, %arg1: memref<1x17x48xbf16, #tpu.memory_space<vmem>>, %arg2: memref<48x64xbf16, #tpu.memory_space<vmem>>, %arg3: memref<17x64xf32, #tpu.memory_space<vmem>>, %arg4: memref<1x64xf32, #tpu.memory_space<vmem>>, %arg5: memref<1x64xf32, #tpu.memory_space<vmem>>, %arg6: memref<2x1x64xf32, #tpu.memory_space<vmem>>, %arg7: memref<2x1x64xf32, #tpu.memory_space<vmem>>, %arg8: memref<2x64x384xbf16, #tpu.memory_space<vmem>>, %arg9: memref<2x1x384xf32, #tpu.memory_space<vmem>>, %arg10: memref<2x64x64xbf16, #tpu.memory_space<vmem>>, %arg11: memref<2x1x64xf32, #tpu.memory_space<vmem>>, %arg12: memref<2x1x64xf32, #tpu.memory_space<vmem>>, %arg13: memref<2x1x64xf32, #tpu.memory_space<vmem>>, %arg14: memref<2x64x128xbf16, #tpu.memory_space<vmem>>, %arg15: memref<2x1x128xf32, #tpu.memory_space<vmem>>, %arg16: memref<2x128x64xbf16, #tpu.memory_space<vmem>>, %arg17: memref<2x1x64xf32, #tpu.memory_space<vmem>>, %arg18: memref<1x64xf32, #tpu.memory_space<vmem>>, %arg19: memref<1x64xf32, #tpu.memory_space<vmem>>, %arg20: memref<1x17x64xf32, #tpu.memory_space<vmem>>, %arg21: memref<1x1x64xf32, #tpu.memory_space<vmem>>, %arg22: memref<17x64xbf16, #tpu.memory_space<vmem>>) attributes {dimension_semantics = [#tpu.dimension_semantics<parallel>], iteration_bounds = array<i64: 2>, scalar_prefetch = 0 : i64, scratch_operands = 1 : i64, tpu.core_type = #tpu.core_type<tc>, window_params = [{transform_indices = @transform_0, window_bounds = array<i64: 1, 17, 48>}, {pipeline_mode = #tpu.pipeline_mode<synchronous>, transform_indices = @transform_1, window_bounds = array<i64: 48, 64>}, {pipeline_mode = #tpu.pipeline_mode<synchronous>, transform_indices = @transform_2, window_bounds = array<i64: 17, 64>}, {pipeline_mode = #tpu.pipeline_mode<synchronous>, transform_indices = @transform_3, window_bounds = array<i64: 1, 64>}, {pipeline_mode = #tpu.pipeline_mode<synchronous>, transform_indices = @transform_4, window_bounds = array<i64: 1, 64>}, {pipeline_mode = #tpu.pipeline_mode<synchronous>, transform_indices = @transform_5, window_bounds = array<i64: 2, 1, 64>}, {pipeline_mode = #tpu.pipeline_mode<synchronous>, transform_indices = @transform_6, window_bounds = array<i64: 2, 1, 64>}, {pipeline_mode = #tpu.pipeline_mode<synchronous>, transform_indices = @transform_7, window_bounds = array<i64: 2, 64, 384>}, {pipeline_mode = #tpu.pipeline_mode<synchronous>, transform_indices = @transform_8, window_bounds = array<i64: 2, 1, 384>}, {pipeline_mode = #tpu.pipeline_mode<synchronous>, transform_indices = @transform_9, window_bounds = array<i64: 2, 64, 64>}, {pipeline_mode = #tpu.pipeline_mode<synchronous>, transform_indices = @transform_10, window_bounds = array<i64: 2, 1, 64>}, {pipeline_mode = #tpu.pipeline_mode<synchronous>, transform_indices = @transform_11, window_bounds = array<i64: 2, 1, 64>}, {pipeline_mode = #tpu.pipeline_mode<synchronous>, transform_indices = @transform_12, window_bounds = array<i64: 2, 1, 64>}, {pipeline_mode = #tpu.pipeline_mode<synchronous>, transform_indices = @transform_13, window_bounds = array<i64: 2, 64, 128>}, {pipeline_mode = #tpu.pipeline_mode<synchronous>, transform_indices = @transform_14, window_bounds = array<i64: 2, 1, 128>}, {pipeline_mode = #tpu.pipeline_mode<synchronous>, transform_indices = @transform_15, window_bounds = array<i64: 2, 128, 64>}, {pipeline_mode = #tpu.pipeline_mode<synchronous>, transform_indices = @transform_16, window_bounds = array<i64: 2, 1, 64>}, {pipeline_mode = #tpu.pipeline_mode<synchronous>, transform_indices = @transform_17, window_bounds = array<i64: 1, 64>}, {pipeline_mode = #tpu.pipeline_mode<synchronous>, transform_indices = @transform_18, window_bounds = array<i64: 1, 64>}, {transform_indices = @transform_19, window_bounds = array<i64: 1, 17, 64>}, {transform_indices = @transform_20, window_bounds = array<i64: 1, 1, 64>}]} {
    %c0 = arith.constant 0 : index
    %c0_0 = arith.constant 0 : index
    %c0_1 = arith.constant 0 : index
    %0 = vector.load %arg1[%c0, %c0_0, %c0_1] : memref<1x17x48xbf16, #tpu.memory_space<vmem>>, vector<1x17x48xbf16>
    %1 = vector.shape_cast %0 : vector<1x17x48xbf16> to vector<17x48xbf16>
    %c0_2 = arith.constant 0 : index
    %c0_3 = arith.constant 0 : index
    %2 = vector.load %arg2[%c0_2, %c0_3] : memref<48x64xbf16, #tpu.memory_space<vmem>>, vector<48x64xbf16>
    %cst = arith.constant dense<0.000000e+00> : vector<17x64xf32>
    %3 = tpu.matmul %1, %2, %cst {dimension_numbers = #tpu.dot_dimension_numbers<[1], [0], [0], [1], [0, 0, 1, 1], [], []>} : vector<17x48xbf16>, vector<48x64xbf16>, vector<17x64xf32> -> vector<17x64xf32>
    %c0_4 = arith.constant 0 : index
    %c0_5 = arith.constant 0 : index
    %4 = vector.load %arg3[%c0_4, %c0_5] : memref<17x64xf32, #tpu.memory_space<vmem>>, vector<17x64xf32>
    %5 = arith.addf %3, %4 : vector<17x64xf32>
    %c0_6 = arith.constant 0 : index
    %c0_7 = arith.constant 0 : index
    %6 = vector.load %arg4[%c0_6, %c0_7] : memref<1x64xf32, #tpu.memory_space<vmem>>, vector<1x64xf32>
    %c0_8 = arith.constant 0 : index
    %c0_9 = arith.constant 0 : index
    %7 = vector.load %arg5[%c0_8, %c0_9] : memref<1x64xf32, #tpu.memory_space<vmem>>, vector<1x64xf32>
    %cst_10 = arith.constant dense<0.000000e+00> : vector<17xf32>
    %8 = vector.multi_reduction <add>, %5, %cst_10 [1] : vector<17x64xf32> to vector<17xf32>
    %9 = vector.shape_cast %8 : vector<17xf32> to vector<17x1xf32>
    %cst_11 = arith.constant 6.400000e+01 : f32
    %10 = vector.broadcast %cst_11 : f32 to vector<17x1xf32>
    %11 = arith.divf %9, %10 : vector<17x1xf32>
    %12 = vector.broadcast %11 : vector<17x1xf32> to vector<17x64xf32>
    %13 = arith.subf %5, %12 : vector<17x64xf32>
    %14 = arith.mulf %13, %13 : vector<17x64xf32>
    %cst_12 = arith.constant dense<0.000000e+00> : vector<17xf32>
    %15 = vector.multi_reduction <add>, %14, %cst_12 [1] : vector<17x64xf32> to vector<17xf32>
    %16 = vector.shape_cast %15 : vector<17xf32> to vector<17x1xf32>
    %cst_13 = arith.constant 6.400000e+01 : f32
    %17 = vector.broadcast %cst_13 : f32 to vector<17x1xf32>
    %18 = arith.divf %16, %17 : vector<17x1xf32>
    %cst_14 = arith.constant 9.99999974E-6 : f32
    %19 = vector.broadcast %cst_14 : f32 to vector<17x1xf32>
    %20 = arith.addf %18, %19 : vector<17x1xf32>
    %21 = math.rsqrt %20 : vector<17x1xf32>
    %22 = vector.broadcast %21 : vector<17x1xf32> to vector<17x64xf32>
    %23 = arith.mulf %13, %22 : vector<17x64xf32>
    %24 = vector.broadcast %6 : vector<1x64xf32> to vector<17x64xf32>
    %25 = arith.mulf %23, %24 : vector<17x64xf32>
    %26 = vector.broadcast %7 : vector<1x64xf32> to vector<17x64xf32>
    %27 = arith.addf %25, %26 : vector<17x64xf32>
    %c0_15 = arith.constant 0 : index
    %c0_16 = arith.constant 0 : index
    %c0_17 = arith.constant 0 : index
    %28 = vector.load %arg6[%c0_15, %c0_16, %c0_17] : memref<2x1x64xf32, #tpu.memory_space<vmem>>, vector<1x1x64xf32>
    %29 = vector.shape_cast %28 : vector<1x1x64xf32> to vector<1x64xf32>
    %c0_18 = arith.constant 0 : index
    %c0_19 = arith.constant 0 : index
    %c0_20 = arith.constant 0 : index
    %30 = vector.load %arg7[%c0_18, %c0_19, %c0_20] : memref<2x1x64xf32, #tpu.memory_space<vmem>>, vector<1x1x64xf32>
    %31 = vector.shape_cast %30 : vector<1x1x64xf32> to vector<1x64xf32>
    %cst_21 = arith.constant dense<0.000000e+00> : vector<17xf32>
    %32 = vector.multi_reduction <add>, %27, %cst_21 [1] : vector<17x64xf32> to vector<17xf32>
    %33 = vector.shape_cast %32 : vector<17xf32> to vector<17x1xf32>
    %cst_22 = arith.constant 6.400000e+01 : f32
    %34 = vector.broadcast %cst_22 : f32 to vector<17x1xf32>
    %35 = arith.divf %33, %34 : vector<17x1xf32>
    %36 = vector.broadcast %35 : vector<17x1xf32> to vector<17x64xf32>
    %37 = arith.subf %27, %36 : vector<17x64xf32>
    %38 = arith.mulf %37, %37 : vector<17x64xf32>
    %cst_23 = arith.constant dense<0.000000e+00> : vector<17xf32>
    %39 = vector.multi_reduction <add>, %38, %cst_23 [1] : vector<17x64xf32> to vector<17xf32>
    %40 = vector.shape_cast %39 : vector<17xf32> to vector<17x1xf32>
    %cst_24 = arith.constant 6.400000e+01 : f32
    %41 = vector.broadcast %cst_24 : f32 to vector<17x1xf32>
    %42 = arith.divf %40, %41 : vector<17x1xf32>
    %cst_25 = arith.constant 9.99999974E-6 : f32
    %43 = vector.broadcast %cst_25 : f32 to vector<17x1xf32>
    %44 = arith.addf %42, %43 : vector<17x1xf32>
    %45 = math.rsqrt %44 : vector<17x1xf32>
    %46 = vector.broadcast %45 : vector<17x1xf32> to vector<17x64xf32>
    %47 = arith.mulf %37, %46 : vector<17x64xf32>
    %48 = vector.broadcast %29 : vector<1x64xf32> to vector<17x64xf32>
    %49 = arith.mulf %47, %48 : vector<17x64xf32>
    %50 = vector.broadcast %31 : vector<1x64xf32> to vector<17x64xf32>
    %51 = arith.addf %49, %50 : vector<17x64xf32>
    %52 = arith.truncf %51 : vector<17x64xf32> to vector<17x64xbf16>
    %c0_26 = arith.constant 0 : index
    %c0_27 = arith.constant 0 : index
    %c0_28 = arith.constant 0 : index
    %53 = vector.load %arg8[%c0_26, %c0_27, %c0_28] : memref<2x64x384xbf16, #tpu.memory_space<vmem>>, vector<1x64x384xbf16>
    %54 = vector.shape_cast %53 : vector<1x64x384xbf16> to vector<64x384xbf16>
    %cst_29 = arith.constant dense<0.000000e+00> : vector<17x384xf32>
    %55 = tpu.matmul %52, %54, %cst_29 {dimension_numbers = #tpu.dot_dimension_numbers<[1], [0], [0], [1], [0, 0, 1, 1], [], []>} : vector<17x64xbf16>, vector<64x384xbf16>, vector<17x384xf32> -> vector<17x384xf32>
    %c0_30 = arith.constant 0 : index
    %c0_31 = arith.constant 0 : index
    %c0_32 = arith.constant 0 : index
    %56 = vector.load %arg9[%c0_30, %c0_31, %c0_32] : memref<2x1x384xf32, #tpu.memory_space<vmem>>, vector<1x1x384xf32>
    %57 = vector.shape_cast %56 : vector<1x1x384xf32> to vector<1x384xf32>
    %58 = vector.broadcast %57 : vector<1x384xf32> to vector<17x384xf32>
    %59 = arith.addf %55, %58 : vector<17x384xf32>
    %60 = vector.extract_strided_slice %59 {offsets = [0, 0], sizes = [17, 64], strides = [1, 1]} : vector<17x384xf32> to vector<17x64xf32>
    %cst_33 = arith.constant 2.500000e-01 : f32
    %61 = vector.broadcast %cst_33 : f32 to vector<17x64xf32>
    %62 = arith.mulf %60, %61 : vector<17x64xf32>
    %63 = vector.extract_strided_slice %59 {offsets = [0, 128], sizes = [17, 64], strides = [1, 1]} : vector<17x384xf32> to vector<17x64xf32>
    %64 = vector.extract_strided_slice %59 {offsets = [0, 256], sizes = [17, 64], strides = [1, 1]} : vector<17x384xf32> to vector<17x64xf32>
    %65 = vector.extract_strided_slice %62 {offsets = [0, 0], sizes = [17, 16], strides = [1, 1]} : vector<17x64xf32> to vector<17x16xf32>
    %66 = vector.extract_strided_slice %63 {offsets = [0, 0], sizes = [17, 16], strides = [1, 1]} : vector<17x64xf32> to vector<17x16xf32>
    %67 = tpu.transpose %66, [1, 0] : vector<17x16xf32> -> vector<16x17xf32>
    %cst_34 = arith.constant dense<0.000000e+00> : vector<17x17xf32>
    %68 = tpu.matmul %65, %67, %cst_34 {dimension_numbers = #tpu.dot_dimension_numbers<[1], [0], [0], [1], [0, 0, 1, 1], [], []>} : vector<17x16xf32>, vector<16x17xf32>, vector<17x17xf32> -> vector<17x17xf32>
    %cst_35 = arith.constant dense<0xFF800000> : vector<17xf32>
    %69 = vector.multi_reduction <maximumf>, %68, %cst_35 [1] : vector<17x17xf32> to vector<17xf32>
    %70 = vector.shape_cast %69 : vector<17xf32> to vector<17x1xf32>
    %71 = vector.broadcast %70 : vector<17x1xf32> to vector<17x17xf32>
    %72 = arith.subf %68, %71 : vector<17x17xf32>
    %73 = math.exp %72 : vector<17x17xf32>
    %cst_36 = arith.constant dense<0.000000e+00> : vector<17xf32>
    %74 = vector.multi_reduction <add>, %73, %cst_36 [1] : vector<17x17xf32> to vector<17xf32>
    %75 = vector.shape_cast %74 : vector<17xf32> to vector<17x1xf32>
    %76 = tpu.reciprocal %75 {approx = true} : vector<17x1xf32> -> vector<17x1xf32>
    %77 = vector.broadcast %76 : vector<17x1xf32> to vector<17x17xf32>
    %78 = arith.mulf %73, %77 : vector<17x17xf32>
    %79 = vector.extract_strided_slice %64 {offsets = [0, 0], sizes = [17, 16], strides = [1, 1]} : vector<17x64xf32> to vector<17x16xf32>
    %cst_37 = arith.constant dense<0.000000e+00> : vector<17x16xf32>
    %80 = tpu.matmul %78, %79, %cst_37 {dimension_numbers = #tpu.dot_dimension_numbers<[1], [0], [0], [1], [0, 0, 1, 1], [], []>} : vector<17x17xf32>, vector<17x16xf32>, vector<17x16xf32> -> vector<17x16xf32>
    %81 = arith.truncf %80 : vector<17x16xf32> to vector<17x16xbf16>
    %c0_38 = arith.constant 0 : index
    %c0_39 = arith.constant 0 : index
    %82 = vector.load %arg22[%c0_38, %c0_39] : memref<17x64xbf16, #tpu.memory_space<vmem>>, vector<17x16xbf16>
    tpu.vector_store %arg22[%c0_38, %c0_39], %81 {strides = array<i32>} : memref<17x64xbf16, #tpu.memory_space<vmem>>, vector<17x16xbf16>,
    %83 = vector.extract_strided_slice %62 {offsets = [0, 16], sizes = [17, 16], strides = [1, 1]} : vector<17x64xf32> to vector<17x16xf32>
    %84 = vector.extract_strided_slice %63 {offsets = [0, 16], sizes = [17, 16], strides = [1, 1]} : vector<17x64xf32> to vector<17x16xf32>
    %85 = tpu.transpose %84, [1, 0] : vector<17x16xf32> -> vector<16x17xf32>
    %cst_40 = arith.constant dense<0.000000e+00> : vector<17x17xf32>
    %86 = tpu.matmul %83, %85, %cst_40 {dimension_numbers = #tpu.dot_dimension_numbers<[1], [0], [0], [1], [0, 0, 1, 1], [], []>} : vector<17x16xf32>, vector<16x17xf32>, vector<17x17xf32> -> vector<17x17xf32>
    %cst_41 = arith.constant dense<0xFF800000> : vector<17xf32>
    %87 = vector.multi_reduction <maximumf>, %86, %cst_41 [1] : vector<17x17xf32> to vector<17xf32>
    %88 = vector.shape_cast %87 : vector<17xf32> to vector<17x1xf32>
    %89 = vector.broadcast %88 : vector<17x1xf32> to vector<17x17xf32>
    %90 = arith.subf %86, %89 : vector<17x17xf32>
    %91 = math.exp %90 : vector<17x17xf32>
    %cst_42 = arith.constant dense<0.000000e+00> : vector<17xf32>
    %92 = vector.multi_reduction <add>, %91, %cst_42 [1] : vector<17x17xf32> to vector<17xf32>
    %93 = vector.shape_cast %92 : vector<17xf32> to vector<17x1xf32>
    %94 = tpu.reciprocal %93 {approx = true} : vector<17x1xf32> -> vector<17x1xf32>
    %95 = vector.broadcast %94 : vector<17x1xf32> to vector<17x17xf32>
    %96 = arith.mulf %91, %95 : vector<17x17xf32>
    %97 = vector.extract_strided_slice %64 {offsets = [0, 16], sizes = [17, 16], strides = [1, 1]} : vector<17x64xf32> to vector<17x16xf32>
    %cst_43 = arith.constant dense<0.000000e+00> : vector<17x16xf32>
    %98 = tpu.matmul %96, %97, %cst_43 {dimension_numbers = #tpu.dot_dimension_numbers<[1], [0], [0], [1], [0, 0, 1, 1], [], []>} : vector<17x17xf32>, vector<17x16xf32>, vector<17x16xf32> -> vector<17x16xf32>
    %99 = arith.truncf %98 : vector<17x16xf32> to vector<17x16xbf16>
    %c0_44 = arith.constant 0 : index
    %c16 = arith.constant 16 : index
    %100 = vector.load %arg22[%c0_44, %c16] : memref<17x64xbf16, #tpu.memory_space<vmem>>, vector<17x16xbf16>
    tpu.vector_store %arg22[%c0_44, %c16], %99 {strides = array<i32>} : memref<17x64xbf16, #tpu.memory_space<vmem>>, vector<17x16xbf16>,
    %101 = vector.extract_strided_slice %62 {offsets = [0, 32], sizes = [17, 16], strides = [1, 1]} : vector<17x64xf32> to vector<17x16xf32>
    %102 = vector.extract_strided_slice %63 {offsets = [0, 32], sizes = [17, 16], strides = [1, 1]} : vector<17x64xf32> to vector<17x16xf32>
    %103 = tpu.transpose %102, [1, 0] : vector<17x16xf32> -> vector<16x17xf32>
    %cst_45 = arith.constant dense<0.000000e+00> : vector<17x17xf32>
    %104 = tpu.matmul %101, %103, %cst_45 {dimension_numbers = #tpu.dot_dimension_numbers<[1], [0], [0], [1], [0, 0, 1, 1], [], []>} : vector<17x16xf32>, vector<16x17xf32>, vector<17x17xf32> -> vector<17x17xf32>
    %cst_46 = arith.constant dense<0xFF800000> : vector<17xf32>
    %105 = vector.multi_reduction <maximumf>, %104, %cst_46 [1] : vector<17x17xf32> to vector<17xf32>
    %106 = vector.shape_cast %105 : vector<17xf32> to vector<17x1xf32>
    %107 = vector.broadcast %106 : vector<17x1xf32> to vector<17x17xf32>
    %108 = arith.subf %104, %107 : vector<17x17xf32>
    %109 = math.exp %108 : vector<17x17xf32>
    %cst_47 = arith.constant dense<0.000000e+00> : vector<17xf32>
    %110 = vector.multi_reduction <add>, %109, %cst_47 [1] : vector<17x17xf32> to vector<17xf32>
    %111 = vector.shape_cast %110 : vector<17xf32> to vector<17x1xf32>
    %112 = tpu.reciprocal %111 {approx = true} : vector<17x1xf32> -> vector<17x1xf32>
    %113 = vector.broadcast %112 : vector<17x1xf32> to vector<17x17xf32>
    %114 = arith.mulf %109, %113 : vector<17x17xf32>
    %115 = vector.extract_strided_slice %64 {offsets = [0, 32], sizes = [17, 16], strides = [1, 1]} : vector<17x64xf32> to vector<17x16xf32>
    %cst_48 = arith.constant dense<0.000000e+00> : vector<17x16xf32>
    %116 = tpu.matmul %114, %115, %cst_48 {dimension_numbers = #tpu.dot_dimension_numbers<[1], [0], [0], [1], [0, 0, 1, 1], [], []>} : vector<17x17xf32>, vector<17x16xf32>, vector<17x16xf32> -> vector<17x16xf32>
    %117 = arith.truncf %116 : vector<17x16xf32> to vector<17x16xbf16>
    %c0_49 = arith.constant 0 : index
    %c32 = arith.constant 32 : index
    %118 = vector.load %arg22[%c0_49, %c32] : memref<17x64xbf16, #tpu.memory_space<vmem>>, vector<17x16xbf16>
    tpu.vector_store %arg22[%c0_49, %c32], %117 {strides = array<i32>} : memref<17x64xbf16, #tpu.memory_space<vmem>>, vector<17x16xbf16>,
    %119 = vector.extract_strided_slice %62 {offsets = [0, 48], sizes = [17, 16], strides = [1, 1]} : vector<17x64xf32> to vector<17x16xf32>
    %120 = vector.extract_strided_slice %63 {offsets = [0, 48], sizes = [17, 16], strides = [1, 1]} : vector<17x64xf32> to vector<17x16xf32>
    %121 = tpu.transpose %120, [1, 0] : vector<17x16xf32> -> vector<16x17xf32>
    %cst_50 = arith.constant dense<0.000000e+00> : vector<17x17xf32>
    %122 = tpu.matmul %119, %121, %cst_50 {dimension_numbers = #tpu.dot_dimension_numbers<[1], [0], [0], [1], [0, 0, 1, 1], [], []>} : vector<17x16xf32>, vector<16x17xf32>, vector<17x17xf32> -> vector<17x17xf32>
    %cst_51 = arith.constant dense<0xFF800000> : vector<17xf32>
    %123 = vector.multi_reduction <maximumf>, %122, %cst_51 [1] : vector<17x17xf32> to vector<17xf32>
    %124 = vector.shape_cast %123 : vector<17xf32> to vector<17x1xf32>
    %125 = vector.broadcast %124 : vector<17x1xf32> to vector<17x17xf32>
    %126 = arith.subf %122, %125 : vector<17x17xf32>
    %127 = math.exp %126 : vector<17x17xf32>
    %cst_52 = arith.constant dense<0.000000e+00> : vector<17xf32>
    %128 = vector.multi_reduction <add>, %127, %cst_52 [1] : vector<17x17xf32> to vector<17xf32>
    %129 = vector.shape_cast %128 : vector<17xf32> to vector<17x1xf32>
    %130 = tpu.reciprocal %129 {approx = true} : vector<17x1xf32> -> vector<17x1xf32>
    %131 = vector.broadcast %130 : vector<17x1xf32> to vector<17x17xf32>
    %132 = arith.mulf %127, %131 : vector<17x17xf32>
    %133 = vector.extract_strided_slice %64 {offsets = [0, 48], sizes = [17, 16], strides = [1, 1]} : vector<17x64xf32> to vector<17x16xf32>
    %cst_53 = arith.constant dense<0.000000e+00> : vector<17x16xf32>
    %134 = tpu.matmul %132, %133, %cst_53 {dimension_numbers = #tpu.dot_dimension_numbers<[1], [0], [0], [1], [0, 0, 1, 1], [], []>} : vector<17x17xf32>, vector<17x16xf32>, vector<17x16xf32> -> vector<17x16xf32>
    %135 = arith.truncf %134 : vector<17x16xf32> to vector<17x16xbf16>
    %c0_54 = arith.constant 0 : index
    %c48 = arith.constant 48 : index
    %136 = vector.load %arg22[%c0_54, %c48] : memref<17x64xbf16, #tpu.memory_space<vmem>>, vector<17x16xbf16>
    tpu.vector_store %arg22[%c0_54, %c48], %135 {strides = array<i32>} : memref<17x64xbf16, #tpu.memory_space<vmem>>, vector<17x16xbf16>,
    %c0_55 = arith.constant 0 : index
    %c0_56 = arith.constant 0 : index
    %137 = vector.load %arg22[%c0_55, %c0_56] : memref<17x64xbf16, #tpu.memory_space<vmem>>, vector<17x64xbf16>
    %c0_57 = arith.constant 0 : index
    %c0_58 = arith.constant 0 : index
    %c0_59 = arith.constant 0 : index
    %138 = vector.load %arg10[%c0_57, %c0_58, %c0_59] : memref<2x64x64xbf16, #tpu.memory_space<vmem>>, vector<1x64x64xbf16>
    %139 = vector.shape_cast %138 : vector<1x64x64xbf16> to vector<64x64xbf16>
    %cst_60 = arith.constant dense<0.000000e+00> : vector<17x64xf32>
    %140 = tpu.matmul %137, %139, %cst_60 {dimension_numbers = #tpu.dot_dimension_numbers<[1], [0], [0], [1], [0, 0, 1, 1], [], []>} : vector<17x64xbf16>, vector<64x64xbf16>, vector<17x64xf32> -> vector<17x64xf32>
    %141 = arith.addf %27, %140 : vector<17x64xf32>
    %c0_61 = arith.constant 0 : index
    %c0_62 = arith.constant 0 : index
    %c0_63 = arith.constant 0 : index
    %142 = vector.load %arg11[%c0_61, %c0_62, %c0_63] : memref<2x1x64xf32, #tpu.memory_space<vmem>>, vector<1x1x64xf32>
    %143 = vector.shape_cast %142 : vector<1x1x64xf32> to vector<1x64xf32>
    %144 = vector.broadcast %143 : vector<1x64xf32> to vector<17x64xf32>
    %145 = arith.addf %141, %144 : vector<17x64xf32>
    %c0_64 = arith.constant 0 : index
    %c0_65 = arith.constant 0 : index
    %c0_66 = arith.constant 0 : index
    %146 = vector.load %arg12[%c0_64, %c0_65, %c0_66] : memref<2x1x64xf32, #tpu.memory_space<vmem>>, vector<1x1x64xf32>
    %147 = vector.shape_cast %146 : vector<1x1x64xf32> to vector<1x64xf32>
    %c0_67 = arith.constant 0 : index
    %c0_68 = arith.constant 0 : index
    %c0_69 = arith.constant 0 : index
    %148 = vector.load %arg13[%c0_67, %c0_68, %c0_69] : memref<2x1x64xf32, #tpu.memory_space<vmem>>, vector<1x1x64xf32>
    %149 = vector.shape_cast %148 : vector<1x1x64xf32> to vector<1x64xf32>
    %cst_70 = arith.constant dense<0.000000e+00> : vector<17xf32>
    %150 = vector.multi_reduction <add>, %145, %cst_70 [1] : vector<17x64xf32> to vector<17xf32>
    %151 = vector.shape_cast %150 : vector<17xf32> to vector<17x1xf32>
    %cst_71 = arith.constant 6.400000e+01 : f32
    %152 = vector.broadcast %cst_71 : f32 to vector<17x1xf32>
    %153 = arith.divf %151, %152 : vector<17x1xf32>
    %154 = vector.broadcast %153 : vector<17x1xf32> to vector<17x64xf32>
    %155 = arith.subf %145, %154 : vector<17x64xf32>
    %156 = arith.mulf %155, %155 : vector<17x64xf32>
    %cst_72 = arith.constant dense<0.000000e+00> : vector<17xf32>
    %157 = vector.multi_reduction <add>, %156, %cst_72 [1] : vector<17x64xf32> to vector<17xf32>
    %158 = vector.shape_cast %157 : vector<17xf32> to vector<17x1xf32>
    %cst_73 = arith.constant 6.400000e+01 : f32
    %159 = vector.broadcast %cst_73 : f32 to vector<17x1xf32>
    %160 = arith.divf %158, %159 : vector<17x1xf32>
    %cst_74 = arith.constant 9.99999974E-6 : f32
    %161 = vector.broadcast %cst_74 : f32 to vector<17x1xf32>
    %162 = arith.addf %160, %161 : vector<17x1xf32>
    %163 = math.rsqrt %162 : vector<17x1xf32>
    %164 = vector.broadcast %163 : vector<17x1xf32> to vector<17x64xf32>
    %165 = arith.mulf %155, %164 : vector<17x64xf32>
    %166 = vector.broadcast %147 : vector<1x64xf32> to vector<17x64xf32>
    %167 = arith.mulf %165, %166 : vector<17x64xf32>
    %168 = vector.broadcast %149 : vector<1x64xf32> to vector<17x64xf32>
    %169 = arith.addf %167, %168 : vector<17x64xf32>
    %170 = arith.truncf %169 : vector<17x64xf32> to vector<17x64xbf16>
    %c0_75 = arith.constant 0 : index
    %c0_76 = arith.constant 0 : index
    %c0_77 = arith.constant 0 : index
    %171 = vector.load %arg14[%c0_75, %c0_76, %c0_77] : memref<2x64x128xbf16, #tpu.memory_space<vmem>>, vector<1x64x128xbf16>
    %172 = vector.shape_cast %171 : vector<1x64x128xbf16> to vector<64x128xbf16>
    %cst_78 = arith.constant dense<0.000000e+00> : vector<17x128xf32>
    %173 = tpu.matmul %170, %172, %cst_78 {dimension_numbers = #tpu.dot_dimension_numbers<[1], [0], [0], [1], [0, 0, 1, 1], [], []>} : vector<17x64xbf16>, vector<64x128xbf16>, vector<17x128xf32> -> vector<17x128xf32>
    %c0_79 = arith.constant 0 : index
    %c0_80 = arith.constant 0 : index
    %c0_81 = arith.constant 0 : index
    %174 = vector.load %arg15[%c0_79, %c0_80, %c0_81] : memref<2x1x128xf32, #tpu.memory_space<vmem>>, vector<1x1x128xf32>
    %175 = vector.shape_cast %174 : vector<1x1x128xf32> to vector<1x128xf32>
    %176 = vector.broadcast %175 : vector<1x128xf32> to vector<17x128xf32>
    %177 = arith.addf %173, %176 : vector<17x128xf32>
    %cst_82 = arith.constant 1.702000e+00 : f32
    %178 = vector.broadcast %cst_82 : f32 to vector<17x128xf32>
    %179 = arith.mulf %178, %177 : vector<17x128xf32>
    %180 = arith.negf %179 : vector<17x128xf32>
    %181 = math.exp %180 : vector<17x128xf32>
    %cst_83 = arith.constant 1.000000e+00 : f32
    %182 = vector.broadcast %cst_83 : f32 to vector<17x128xf32>
    %183 = arith.addf %182, %181 : vector<17x128xf32>
    %184 = arith.divf %182, %183 : vector<17x128xf32>
    %185 = arith.mulf %177, %184 : vector<17x128xf32>
    %186 = arith.truncf %185 : vector<17x128xf32> to vector<17x128xbf16>
    %c0_84 = arith.constant 0 : index
    %c0_85 = arith.constant 0 : index
    %c0_86 = arith.constant 0 : index
    %187 = vector.load %arg16[%c0_84, %c0_85, %c0_86] : memref<2x128x64xbf16, #tpu.memory_space<vmem>>, vector<1x128x64xbf16>
    %188 = vector.shape_cast %187 : vector<1x128x64xbf16> to vector<128x64xbf16>
    %cst_87 = arith.constant dense<0.000000e+00> : vector<17x64xf32>
    %189 = tpu.matmul %186, %188, %cst_87 {dimension_numbers = #tpu.dot_dimension_numbers<[1], [0], [0], [1], [0, 0, 1, 1], [], []>} : vector<17x128xbf16>, vector<128x64xbf16>, vector<17x64xf32> -> vector<17x64xf32>
    %c0_88 = arith.constant 0 : index
    %c0_89 = arith.constant 0 : index
    %c0_90 = arith.constant 0 : index
    %190 = vector.load %arg17[%c0_88, %c0_89, %c0_90] : memref<2x1x64xf32, #tpu.memory_space<vmem>>, vector<1x1x64xf32>
    %191 = vector.shape_cast %190 : vector<1x1x64xf32> to vector<1x64xf32>
    %192 = vector.broadcast %191 : vector<1x64xf32> to vector<17x64xf32>
    %193 = arith.addf %189, %192 : vector<17x64xf32>
    %194 = arith.addf %145, %193 : vector<17x64xf32>
    %c1 = arith.constant 1 : index
    %c0_91 = arith.constant 0 : index
    %c0_92 = arith.constant 0 : index
    %195 = vector.load %arg6[%c1, %c0_91, %c0_92] : memref<2x1x64xf32, #tpu.memory_space<vmem>>, vector<1x1x64xf32>
    %196 = vector.shape_cast %195 : vector<1x1x64xf32> to vector<1x64xf32>
    %c1_93 = arith.constant 1 : index
    %c0_94 = arith.constant 0 : index
    %c0_95 = arith.constant 0 : index
    %197 = vector.load %arg7[%c1_93, %c0_94, %c0_95] : memref<2x1x64xf32, #tpu.memory_space<vmem>>, vector<1x1x64xf32>
    %198 = vector.shape_cast %197 : vector<1x1x64xf32> to vector<1x64xf32>
    %cst_96 = arith.constant dense<0.000000e+00> : vector<17xf32>
    %199 = vector.multi_reduction <add>, %194, %cst_96 [1] : vector<17x64xf32> to vector<17xf32>
    %200 = vector.shape_cast %199 : vector<17xf32> to vector<17x1xf32>
    %cst_97 = arith.constant 6.400000e+01 : f32
    %201 = vector.broadcast %cst_97 : f32 to vector<17x1xf32>
    %202 = arith.divf %200, %201 : vector<17x1xf32>
    %203 = vector.broadcast %202 : vector<17x1xf32> to vector<17x64xf32>
    %204 = arith.subf %194, %203 : vector<17x64xf32>
    %205 = arith.mulf %204, %204 : vector<17x64xf32>
    %cst_98 = arith.constant dense<0.000000e+00> : vector<17xf32>
    %206 = vector.multi_reduction <add>, %205, %cst_98 [1] : vector<17x64xf32> to vector<17xf32>
    %207 = vector.shape_cast %206 : vector<17xf32> to vector<17x1xf32>
    %cst_99 = arith.constant 6.400000e+01 : f32
    %208 = vector.broadcast %cst_99 : f32 to vector<17x1xf32>
    %209 = arith.divf %207, %208 : vector<17x1xf32>
    %cst_100 = arith.constant 9.99999974E-6 : f32
    %210 = vector.broadcast %cst_100 : f32 to vector<17x1xf32>
    %211 = arith.addf %209, %210 : vector<17x1xf32>
    %212 = math.rsqrt %211 : vector<17x1xf32>
    %213 = vector.broadcast %212 : vector<17x1xf32> to vector<17x64xf32>
    %214 = arith.mulf %204, %213 : vector<17x64xf32>
    %215 = vector.broadcast %196 : vector<1x64xf32> to vector<17x64xf32>
    %216 = arith.mulf %214, %215 : vector<17x64xf32>
    %217 = vector.broadcast %198 : vector<1x64xf32> to vector<17x64xf32>
    %218 = arith.addf %216, %217 : vector<17x64xf32>
    %219 = arith.truncf %218 : vector<17x64xf32> to vector<17x64xbf16>
    %c1_101 = arith.constant 1 : index
    %c0_102 = arith.constant 0 : index
    %c0_103 = arith.constant 0 : index
    %220 = vector.load %arg8[%c1_101, %c0_102, %c0_103] : memref<2x64x384xbf16, #tpu.memory_space<vmem>>, vector<1x64x384xbf16>
    %221 = vector.shape_cast %220 : vector<1x64x384xbf16> to vector<64x384xbf16>
    %cst_104 = arith.constant dense<0.000000e+00> : vector<17x384xf32>
    %222 = tpu.matmul %219, %221, %cst_104 {dimension_numbers = #tpu.dot_dimension_numbers<[1], [0], [0], [1], [0, 0, 1, 1], [], []>} : vector<17x64xbf16>, vector<64x384xbf16>, vector<17x384xf32> -> vector<17x384xf32>
    %c1_105 = arith.constant 1 : index
    %c0_106 = arith.constant 0 : index
    %c0_107 = arith.constant 0 : index
    %223 = vector.load %arg9[%c1_105, %c0_106, %c0_107] : memref<2x1x384xf32, #tpu.memory_space<vmem>>, vector<1x1x384xf32>
    %224 = vector.shape_cast %223 : vector<1x1x384xf32> to vector<1x384xf32>
    %225 = vector.broadcast %224 : vector<1x384xf32> to vector<17x384xf32>
    %226 = arith.addf %222, %225 : vector<17x384xf32>
    %227 = vector.extract_strided_slice %226 {offsets = [0, 0], sizes = [17, 64], strides = [1, 1]} : vector<17x384xf32> to vector<17x64xf32>
    %cst_108 = arith.constant 2.500000e-01 : f32
    %228 = vector.broadcast %cst_108 : f32 to vector<17x64xf32>
    %229 = arith.mulf %227, %228 : vector<17x64xf32>
    %230 = vector.extract_strided_slice %226 {offsets = [0, 128], sizes = [17, 64], strides = [1, 1]} : vector<17x384xf32> to vector<17x64xf32>
    %231 = vector.extract_strided_slice %226 {offsets = [0, 256], sizes = [17, 64], strides = [1, 1]} : vector<17x384xf32> to vector<17x64xf32>
    %232 = vector.extract_strided_slice %229 {offsets = [0, 0], sizes = [17, 16], strides = [1, 1]} : vector<17x64xf32> to vector<17x16xf32>
    %233 = vector.extract_strided_slice %230 {offsets = [0, 0], sizes = [17, 16], strides = [1, 1]} : vector<17x64xf32> to vector<17x16xf32>
    %234 = tpu.transpose %233, [1, 0] : vector<17x16xf32> -> vector<16x17xf32>
    %cst_109 = arith.constant dense<0.000000e+00> : vector<17x17xf32>
    %235 = tpu.matmul %232, %234, %cst_109 {dimension_numbers = #tpu.dot_dimension_numbers<[1], [0], [0], [1], [0, 0, 1, 1], [], []>} : vector<17x16xf32>, vector<16x17xf32>, vector<17x17xf32> -> vector<17x17xf32>
    %cst_110 = arith.constant dense<0xFF800000> : vector<17xf32>
    %236 = vector.multi_reduction <maximumf>, %235, %cst_110 [1] : vector<17x17xf32> to vector<17xf32>
    %237 = vector.shape_cast %236 : vector<17xf32> to vector<17x1xf32>
    %238 = vector.broadcast %237 : vector<17x1xf32> to vector<17x17xf32>
    %239 = arith.subf %235, %238 : vector<17x17xf32>
    %240 = math.exp %239 : vector<17x17xf32>
    %cst_111 = arith.constant dense<0.000000e+00> : vector<17xf32>
    %241 = vector.multi_reduction <add>, %240, %cst_111 [1] : vector<17x17xf32> to vector<17xf32>
    %242 = vector.shape_cast %241 : vector<17xf32> to vector<17x1xf32>
    %243 = tpu.reciprocal %242 {approx = true} : vector<17x1xf32> -> vector<17x1xf32>
    %244 = vector.broadcast %243 : vector<17x1xf32> to vector<17x17xf32>
    %245 = arith.mulf %240, %244 : vector<17x17xf32>
    %246 = vector.extract_strided_slice %231 {offsets = [0, 0], sizes = [17, 16], strides = [1, 1]} : vector<17x64xf32> to vector<17x16xf32>
    %cst_112 = arith.constant dense<0.000000e+00> : vector<17x16xf32>
    %247 = tpu.matmul %245, %246, %cst_112 {dimension_numbers = #tpu.dot_dimension_numbers<[1], [0], [0], [1], [0, 0, 1, 1], [], []>} : vector<17x17xf32>, vector<17x16xf32>, vector<17x16xf32> -> vector<17x16xf32>
    %248 = arith.truncf %247 : vector<17x16xf32> to vector<17x16xbf16>
    %c0_113 = arith.constant 0 : index
    %c0_114 = arith.constant 0 : index
    %249 = vector.load %arg22[%c0_113, %c0_114] : memref<17x64xbf16, #tpu.memory_space<vmem>>, vector<17x16xbf16>
    tpu.vector_store %arg22[%c0_113, %c0_114], %248 {strides = array<i32>} : memref<17x64xbf16, #tpu.memory_space<vmem>>, vector<17x16xbf16>,
    %250 = vector.extract_strided_slice %229 {offsets = [0, 16], sizes = [17, 16], strides = [1, 1]} : vector<17x64xf32> to vector<17x16xf32>
    %251 = vector.extract_strided_slice %230 {offsets = [0, 16], sizes = [17, 16], strides = [1, 1]} : vector<17x64xf32> to vector<17x16xf32>
    %252 = tpu.transpose %251, [1, 0] : vector<17x16xf32> -> vector<16x17xf32>
    %cst_115 = arith.constant dense<0.000000e+00> : vector<17x17xf32>
    %253 = tpu.matmul %250, %252, %cst_115 {dimension_numbers = #tpu.dot_dimension_numbers<[1], [0], [0], [1], [0, 0, 1, 1], [], []>} : vector<17x16xf32>, vector<16x17xf32>, vector<17x17xf32> -> vector<17x17xf32>
    %cst_116 = arith.constant dense<0xFF800000> : vector<17xf32>
    %254 = vector.multi_reduction <maximumf>, %253, %cst_116 [1] : vector<17x17xf32> to vector<17xf32>
    %255 = vector.shape_cast %254 : vector<17xf32> to vector<17x1xf32>
    %256 = vector.broadcast %255 : vector<17x1xf32> to vector<17x17xf32>
    %257 = arith.subf %253, %256 : vector<17x17xf32>
    %258 = math.exp %257 : vector<17x17xf32>
    %cst_117 = arith.constant dense<0.000000e+00> : vector<17xf32>
    %259 = vector.multi_reduction <add>, %258, %cst_117 [1] : vector<17x17xf32> to vector<17xf32>
    %260 = vector.shape_cast %259 : vector<17xf32> to vector<17x1xf32>
    %261 = tpu.reciprocal %260 {approx = true} : vector<17x1xf32> -> vector<17x1xf32>
    %262 = vector.broadcast %261 : vector<17x1xf32> to vector<17x17xf32>
    %263 = arith.mulf %258, %262 : vector<17x17xf32>
    %264 = vector.extract_strided_slice %231 {offsets = [0, 16], sizes = [17, 16], strides = [1, 1]} : vector<17x64xf32> to vector<17x16xf32>
    %cst_118 = arith.constant dense<0.000000e+00> : vector<17x16xf32>
    %265 = tpu.matmul %263, %264, %cst_118 {dimension_numbers = #tpu.dot_dimension_numbers<[1], [0], [0], [1], [0, 0, 1, 1], [], []>} : vector<17x17xf32>, vector<17x16xf32>, vector<17x16xf32> -> vector<17x16xf32>
    %266 = arith.truncf %265 : vector<17x16xf32> to vector<17x16xbf16>
    %c0_119 = arith.constant 0 : index
    %c16_120 = arith.constant 16 : index
    %267 = vector.load %arg22[%c0_119, %c16_120] : memref<17x64xbf16, #tpu.memory_space<vmem>>, vector<17x16xbf16>
    tpu.vector_store %arg22[%c0_119, %c16_120], %266 {strides = array<i32>} : memref<17x64xbf16, #tpu.memory_space<vmem>>, vector<17x16xbf16>,
    %268 = vector.extract_strided_slice %229 {offsets = [0, 32], sizes = [17, 16], strides = [1, 1]} : vector<17x64xf32> to vector<17x16xf32>
    %269 = vector.extract_strided_slice %230 {offsets = [0, 32], sizes = [17, 16], strides = [1, 1]} : vector<17x64xf32> to vector<17x16xf32>
    %270 = tpu.transpose %269, [1, 0] : vector<17x16xf32> -> vector<16x17xf32>
    %cst_121 = arith.constant dense<0.000000e+00> : vector<17x17xf32>
    %271 = tpu.matmul %268, %270, %cst_121 {dimension_numbers = #tpu.dot_dimension_numbers<[1], [0], [0], [1], [0, 0, 1, 1], [], []>} : vector<17x16xf32>, vector<16x17xf32>, vector<17x17xf32> -> vector<17x17xf32>
    %cst_122 = arith.constant dense<0xFF800000> : vector<17xf32>
    %272 = vector.multi_reduction <maximumf>, %271, %cst_122 [1] : vector<17x17xf32> to vector<17xf32>
    %273 = vector.shape_cast %272 : vector<17xf32> to vector<17x1xf32>
    %274 = vector.broadcast %273 : vector<17x1xf32> to vector<17x17xf32>
    %275 = arith.subf %271, %274 : vector<17x17xf32>
    %276 = math.exp %275 : vector<17x17xf32>
    %cst_123 = arith.constant dense<0.000000e+00> : vector<17xf32>
    %277 = vector.multi_reduction <add>, %276, %cst_123 [1] : vector<17x17xf32> to vector<17xf32>
    %278 = vector.shape_cast %277 : vector<17xf32> to vector<17x1xf32>
    %279 = tpu.reciprocal %278 {approx = true} : vector<17x1xf32> -> vector<17x1xf32>
    %280 = vector.broadcast %279 : vector<17x1xf32> to vector<17x17xf32>
    %281 = arith.mulf %276, %280 : vector<17x17xf32>
    %282 = vector.extract_strided_slice %231 {offsets = [0, 32], sizes = [17, 16], strides = [1, 1]} : vector<17x64xf32> to vector<17x16xf32>
    %cst_124 = arith.constant dense<0.000000e+00> : vector<17x16xf32>
    %283 = tpu.matmul %281, %282, %cst_124 {dimension_numbers = #tpu.dot_dimension_numbers<[1], [0], [0], [1], [0, 0, 1, 1], [], []>} : vector<17x17xf32>, vector<17x16xf32>, vector<17x16xf32> -> vector<17x16xf32>
    %284 = arith.truncf %283 : vector<17x16xf32> to vector<17x16xbf16>
    %c0_125 = arith.constant 0 : index
    %c32_126 = arith.constant 32 : index
    %285 = vector.load %arg22[%c0_125, %c32_126] : memref<17x64xbf16, #tpu.memory_space<vmem>>, vector<17x16xbf16>
    tpu.vector_store %arg22[%c0_125, %c32_126], %284 {strides = array<i32>} : memref<17x64xbf16, #tpu.memory_space<vmem>>, vector<17x16xbf16>,
    %286 = vector.extract_strided_slice %229 {offsets = [0, 48], sizes = [17, 16], strides = [1, 1]} : vector<17x64xf32> to vector<17x16xf32>
    %287 = vector.extract_strided_slice %230 {offsets = [0, 48], sizes = [17, 16], strides = [1, 1]} : vector<17x64xf32> to vector<17x16xf32>
    %288 = tpu.transpose %287, [1, 0] : vector<17x16xf32> -> vector<16x17xf32>
    %cst_127 = arith.constant dense<0.000000e+00> : vector<17x17xf32>
    %289 = tpu.matmul %286, %288, %cst_127 {dimension_numbers = #tpu.dot_dimension_numbers<[1], [0], [0], [1], [0, 0, 1, 1], [], []>} : vector<17x16xf32>, vector<16x17xf32>, vector<17x17xf32> -> vector<17x17xf32>
    %cst_128 = arith.constant dense<0xFF800000> : vector<17xf32>
    %290 = vector.multi_reduction <maximumf>, %289, %cst_128 [1] : vector<17x17xf32> to vector<17xf32>
    %291 = vector.shape_cast %290 : vector<17xf32> to vector<17x1xf32>
    %292 = vector.broadcast %291 : vector<17x1xf32> to vector<17x17xf32>
    %293 = arith.subf %289, %292 : vector<17x17xf32>
    %294 = math.exp %293 : vector<17x17xf32>
    %cst_129 = arith.constant dense<0.000000e+00> : vector<17xf32>
    %295 = vector.multi_reduction <add>, %294, %cst_129 [1] : vector<17x17xf32> to vector<17xf32>
    %296 = vector.shape_cast %295 : vector<17xf32> to vector<17x1xf32>
    %297 = tpu.reciprocal %296 {approx = true} : vector<17x1xf32> -> vector<17x1xf32>
    %298 = vector.broadcast %297 : vector<17x1xf32> to vector<17x17xf32>
    %299 = arith.mulf %294, %298 : vector<17x17xf32>
    %300 = vector.extract_strided_slice %231 {offsets = [0, 48], sizes = [17, 16], strides = [1, 1]} : vector<17x64xf32> to vector<17x16xf32>
    %cst_130 = arith.constant dense<0.000000e+00> : vector<17x16xf32>
    %301 = tpu.matmul %299, %300, %cst_130 {dimension_numbers = #tpu.dot_dimension_numbers<[1], [0], [0], [1], [0, 0, 1, 1], [], []>} : vector<17x17xf32>, vector<17x16xf32>, vector<17x16xf32> -> vector<17x16xf32>
    %302 = arith.truncf %301 : vector<17x16xf32> to vector<17x16xbf16>
    %c0_131 = arith.constant 0 : index
    %c48_132 = arith.constant 48 : index
    %303 = vector.load %arg22[%c0_131, %c48_132] : memref<17x64xbf16, #tpu.memory_space<vmem>>, vector<17x16xbf16>
    tpu.vector_store %arg22[%c0_131, %c48_132], %302 {strides = array<i32>} : memref<17x64xbf16, #tpu.memory_space<vmem>>, vector<17x16xbf16>,
    %c0_133 = arith.constant 0 : index
    %c0_134 = arith.constant 0 : index
    %304 = vector.load %arg22[%c0_133, %c0_134] : memref<17x64xbf16, #tpu.memory_space<vmem>>, vector<17x64xbf16>
    %c1_135 = arith.constant 1 : index
    %c0_136 = arith.constant 0 : index
    %c0_137 = arith.constant 0 : index
    %305 = vector.load %arg10[%c1_135, %c0_136, %c0_137] : memref<2x64x64xbf16, #tpu.memory_space<vmem>>, vector<1x64x64xbf16>
    %306 = vector.shape_cast %305 : vector<1x64x64xbf16> to vector<64x64xbf16>
    %cst_138 = arith.constant dense<0.000000e+00> : vector<17x64xf32>
    %307 = tpu.matmul %304, %306, %cst_138 {dimension_numbers = #tpu.dot_dimension_numbers<[1], [0], [0], [1], [0, 0, 1, 1], [], []>} : vector<17x64xbf16>, vector<64x64xbf16>, vector<17x64xf32> -> vector<17x64xf32>
    %308 = arith.addf %194, %307 : vector<17x64xf32>
    %c1_139 = arith.constant 1 : index
    %c0_140 = arith.constant 0 : index
    %c0_141 = arith.constant 0 : index
    %309 = vector.load %arg11[%c1_139, %c0_140, %c0_141] : memref<2x1x64xf32, #tpu.memory_space<vmem>>, vector<1x1x64xf32>
    %310 = vector.shape_cast %309 : vector<1x1x64xf32> to vector<1x64xf32>
    %311 = vector.broadcast %310 : vector<1x64xf32> to vector<17x64xf32>
    %312 = arith.addf %308, %311 : vector<17x64xf32>
    %c1_142 = arith.constant 1 : index
    %c0_143 = arith.constant 0 : index
    %c0_144 = arith.constant 0 : index
    %313 = vector.load %arg12[%c1_142, %c0_143, %c0_144] : memref<2x1x64xf32, #tpu.memory_space<vmem>>, vector<1x1x64xf32>
    %314 = vector.shape_cast %313 : vector<1x1x64xf32> to vector<1x64xf32>
    %c1_145 = arith.constant 1 : index
    %c0_146 = arith.constant 0 : index
    %c0_147 = arith.constant 0 : index
    %315 = vector.load %arg13[%c1_145, %c0_146, %c0_147] : memref<2x1x64xf32, #tpu.memory_space<vmem>>, vector<1x1x64xf32>
    %316 = vector.shape_cast %315 : vector<1x1x64xf32> to vector<1x64xf32>
    %cst_148 = arith.constant dense<0.000000e+00> : vector<17xf32>
    %317 = vector.multi_reduction <add>, %312, %cst_148 [1] : vector<17x64xf32> to vector<17xf32>
    %318 = vector.shape_cast %317 : vector<17xf32> to vector<17x1xf32>
    %cst_149 = arith.constant 6.400000e+01 : f32
    %319 = vector.broadcast %cst_149 : f32 to vector<17x1xf32>
    %320 = arith.divf %318, %319 : vector<17x1xf32>
    %321 = vector.broadcast %320 : vector<17x1xf32> to vector<17x64xf32>
    %322 = arith.subf %312, %321 : vector<17x64xf32>
    %323 = arith.mulf %322, %322 : vector<17x64xf32>
    %cst_150 = arith.constant dense<0.000000e+00> : vector<17xf32>
    %324 = vector.multi_reduction <add>, %323, %cst_150 [1] : vector<17x64xf32> to vector<17xf32>
    %325 = vector.shape_cast %324 : vector<17xf32> to vector<17x1xf32>
    %cst_151 = arith.constant 6.400000e+01 : f32
    %326 = vector.broadcast %cst_151 : f32 to vector<17x1xf32>
    %327 = arith.divf %325, %326 : vector<17x1xf32>
    %cst_152 = arith.constant 9.99999974E-6 : f32
    %328 = vector.broadcast %cst_152 : f32 to vector<17x1xf32>
    %329 = arith.addf %327, %328 : vector<17x1xf32>
    %330 = math.rsqrt %329 : vector<17x1xf32>
    %331 = vector.broadcast %330 : vector<17x1xf32> to vector<17x64xf32>
    %332 = arith.mulf %322, %331 : vector<17x64xf32>
    %333 = vector.broadcast %314 : vector<1x64xf32> to vector<17x64xf32>
    %334 = arith.mulf %332, %333 : vector<17x64xf32>
    %335 = vector.broadcast %316 : vector<1x64xf32> to vector<17x64xf32>
    %336 = arith.addf %334, %335 : vector<17x64xf32>
    %337 = arith.truncf %336 : vector<17x64xf32> to vector<17x64xbf16>
    %c1_153 = arith.constant 1 : index
    %c0_154 = arith.constant 0 : index
    %c0_155 = arith.constant 0 : index
    %338 = vector.load %arg14[%c1_153, %c0_154, %c0_155] : memref<2x64x128xbf16, #tpu.memory_space<vmem>>, vector<1x64x128xbf16>
    %339 = vector.shape_cast %338 : vector<1x64x128xbf16> to vector<64x128xbf16>
    %cst_156 = arith.constant dense<0.000000e+00> : vector<17x128xf32>
    %340 = tpu.matmul %337, %339, %cst_156 {dimension_numbers = #tpu.dot_dimension_numbers<[1], [0], [0], [1], [0, 0, 1, 1], [], []>} : vector<17x64xbf16>, vector<64x128xbf16>, vector<17x128xf32> -> vector<17x128xf32>
    %c1_157 = arith.constant 1 : index
    %c0_158 = arith.constant 0 : index
    %c0_159 = arith.constant 0 : index
    %341 = vector.load %arg15[%c1_157, %c0_158, %c0_159] : memref<2x1x128xf32, #tpu.memory_space<vmem>>, vector<1x1x128xf32>
    %342 = vector.shape_cast %341 : vector<1x1x128xf32> to vector<1x128xf32>
    %343 = vector.broadcast %342 : vector<1x128xf32> to vector<17x128xf32>
    %344 = arith.addf %340, %343 : vector<17x128xf32>
    %cst_160 = arith.constant 1.702000e+00 : f32
    %345 = vector.broadcast %cst_160 : f32 to vector<17x128xf32>
    %346 = arith.mulf %345, %344 : vector<17x128xf32>
    %347 = arith.negf %346 : vector<17x128xf32>
    %348 = math.exp %347 : vector<17x128xf32>
    %cst_161 = arith.constant 1.000000e+00 : f32
    %349 = vector.broadcast %cst_161 : f32 to vector<17x128xf32>
    %350 = arith.addf %349, %348 : vector<17x128xf32>
    %351 = arith.divf %349, %350 : vector<17x128xf32>
    %352 = arith.mulf %344, %351 : vector<17x128xf32>
    %353 = arith.truncf %352 : vector<17x128xf32> to vector<17x128xbf16>
    %c1_162 = arith.constant 1 : index
    %c0_163 = arith.constant 0 : index
    %c0_164 = arith.constant 0 : index
    %354 = vector.load %arg16[%c1_162, %c0_163, %c0_164] : memref<2x128x64xbf16, #tpu.memory_space<vmem>>, vector<1x128x64xbf16>
    %355 = vector.shape_cast %354 : vector<1x128x64xbf16> to vector<128x64xbf16>
    %cst_165 = arith.constant dense<0.000000e+00> : vector<17x64xf32>
    %356 = tpu.matmul %353, %355, %cst_165 {dimension_numbers = #tpu.dot_dimension_numbers<[1], [0], [0], [1], [0, 0, 1, 1], [], []>} : vector<17x128xbf16>, vector<128x64xbf16>, vector<17x64xf32> -> vector<17x64xf32>
    %c1_166 = arith.constant 1 : index
    %c0_167 = arith.constant 0 : index
    %c0_168 = arith.constant 0 : index
    %357 = vector.load %arg17[%c1_166, %c0_167, %c0_168] : memref<2x1x64xf32, #tpu.memory_space<vmem>>, vector<1x1x64xf32>
    %358 = vector.shape_cast %357 : vector<1x1x64xf32> to vector<1x64xf32>
    %359 = vector.broadcast %358 : vector<1x64xf32> to vector<17x64xf32>
    %360 = arith.addf %356, %359 : vector<17x64xf32>
    %361 = arith.addf %312, %360 : vector<17x64xf32>
    %c0_169 = arith.constant 0 : index
    %c0_170 = arith.constant 0 : index
    %c0_171 = arith.constant 0 : index
    %362 = vector.load %arg20[%c0_169, %c0_170, %c0_171] : memref<1x17x64xf32, #tpu.memory_space<vmem>>, vector<1x17x64xf32>
    %363 = vector.shape_cast %362 : vector<1x17x64xf32> to vector<17x64xf32>
    %364 = vector.shape_cast %361 : vector<17x64xf32> to vector<1x17x64xf32>
    tpu.vector_store %arg20[%c0_169, %c0_170, %c0_171], %364 {strides = array<i32>} : memref<1x17x64xf32, #tpu.memory_space<vmem>>, vector<1x17x64xf32>,
    %365 = vector.extract_strided_slice %361 {offsets = [0, 0], sizes = [1, 64], strides = [1, 1]} : vector<17x64xf32> to vector<1x64xf32>
    %c0_172 = arith.constant 0 : index
    %c0_173 = arith.constant 0 : index
    %366 = vector.load %arg18[%c0_172, %c0_173] : memref<1x64xf32, #tpu.memory_space<vmem>>, vector<1x64xf32>
    %c0_174 = arith.constant 0 : index
    %c0_175 = arith.constant 0 : index
    %367 = vector.load %arg19[%c0_174, %c0_175] : memref<1x64xf32, #tpu.memory_space<vmem>>, vector<1x64xf32>
    %cst_176 = arith.constant dense<0.000000e+00> : vector<1xf32>
    %368 = vector.multi_reduction <add>, %365, %cst_176 [1] : vector<1x64xf32> to vector<1xf32>
    %369 = vector.shape_cast %368 : vector<1xf32> to vector<1x1xf32>
    %cst_177 = arith.constant 6.400000e+01 : f32
    %370 = vector.broadcast %cst_177 : f32 to vector<1x1xf32>
    %371 = arith.divf %369, %370 : vector<1x1xf32>
    %372 = vector.broadcast %371 : vector<1x1xf32> to vector<1x64xf32>
    %373 = arith.subf %365, %372 : vector<1x64xf32>
    %374 = arith.mulf %373, %373 : vector<1x64xf32>
    %cst_178 = arith.constant dense<0.000000e+00> : vector<1xf32>
    %375 = vector.multi_reduction <add>, %374, %cst_178 [1] : vector<1x64xf32> to vector<1xf32>
    %376 = vector.shape_cast %375 : vector<1xf32> to vector<1x1xf32>
    %cst_179 = arith.constant 6.400000e+01 : f32
    %377 = vector.broadcast %cst_179 : f32 to vector<1x1xf32>
    %378 = arith.divf %376, %377 : vector<1x1xf32>
    %cst_180 = arith.constant 9.99999974E-6 : f32
    %379 = vector.broadcast %cst_180 : f32 to vector<1x1xf32>
    %380 = arith.addf %378, %379 : vector<1x1xf32>
    %381 = math.rsqrt %380 : vector<1x1xf32>
    %382 = vector.broadcast %381 : vector<1x1xf32> to vector<1x64xf32>
    %383 = arith.mulf %373, %382 : vector<1x64xf32>
    %384 = arith.mulf %383, %366 : vector<1x64xf32>
    %385 = arith.addf %384, %367 : vector<1x64xf32>
    %c0_181 = arith.constant 0 : index
    %c0_182 = arith.constant 0 : index
    %c0_183 = arith.constant 0 : index
    %386 = vector.load %arg21[%c0_181, %c0_182, %c0_183] : memref<1x1x64xf32, #tpu.memory_space<vmem>>, vector<1x1x64xf32>
    %387 = vector.shape_cast %386 : vector<1x1x64xf32> to vector<1x64xf32>
    %388 = vector.shape_cast %385 : vector<1x64xf32> to vector<1x1x64xf32>
    tpu.vector_store %arg21[%c0_181, %c0_182, %c0_183], %388 {strides = array<i32>} : memref<1x1x64xf32, #tpu.memory_space<vmem>>, vector<1x1x64xf32>,
    return
  }
  func.func @transform_0(%arg0: i32) -> (i32, i32, i32) {
    %c0_i32 = arith.constant 0 : i32
    %c0_i32_0 = arith.constant 0 : i32
    %c0_i32_1 = arith.constant 0 : i32
    return %arg0, %c0_i32, %c0_i32_0 : i32, i32, i32
  }
  func.func @transform_1(%arg0: i32) -> (i32, i32) {
    %c0_i32 = arith.constant 0 : i32
    %c0_i32_0 = arith.constant 0 : i32
    %c0_i32_1 = arith.constant 0 : i32
    return %c0_i32, %c0_i32_0 : i32, i32
  }
  func.func @transform_2(%arg0: i32) -> (i32, i32) {
    %c0_i32 = arith.constant 0 : i32
    %c0_i32_0 = arith.constant 0 : i32
    %c0_i32_1 = arith.constant 0 : i32
    return %c0_i32, %c0_i32_0 : i32, i32
  }
  func.func @transform_3(%arg0: i32) -> (i32, i32) {
    %c0_i32 = arith.constant 0 : i32
    %c0_i32_0 = arith.constant 0 : i32
    %c0_i32_1 = arith.constant 0 : i32
    return %c0_i32, %c0_i32_0 : i32, i32
  }
  func.func @transform_4(%arg0: i32) -> (i32, i32) {
    %c0_i32 = arith.constant 0 : i32
    %c0_i32_0 = arith.constant 0 : i32
    %c0_i32_1 = arith.constant 0 : i32
    return %c0_i32, %c0_i32_0 : i32, i32
  }
  func.func @transform_5(%arg0: i32) -> (i32, i32, i32) {
    %c0_i32 = arith.constant 0 : i32
    %c0_i32_0 = arith.constant 0 : i32
    %c0_i32_1 = arith.constant 0 : i32
    %c0_i32_2 = arith.constant 0 : i32
    return %c0_i32, %c0_i32_0, %c0_i32_1 : i32, i32, i32
  }
  func.func @transform_6(%arg0: i32) -> (i32, i32, i32) {
    %c0_i32 = arith.constant 0 : i32
    %c0_i32_0 = arith.constant 0 : i32
    %c0_i32_1 = arith.constant 0 : i32
    %c0_i32_2 = arith.constant 0 : i32
    return %c0_i32, %c0_i32_0, %c0_i32_1 : i32, i32, i32
  }
  func.func @transform_7(%arg0: i32) -> (i32, i32, i32) {
    %c0_i32 = arith.constant 0 : i32
    %c0_i32_0 = arith.constant 0 : i32
    %c0_i32_1 = arith.constant 0 : i32
    %c0_i32_2 = arith.constant 0 : i32
    return %c0_i32, %c0_i32_0, %c0_i32_1 : i32, i32, i32
  }
  func.func @transform_8(%arg0: i32) -> (i32, i32, i32) {
    %c0_i32 = arith.constant 0 : i32
    %c0_i32_0 = arith.constant 0 : i32
    %c0_i32_1 = arith.constant 0 : i32
    %c0_i32_2 = arith.constant 0 : i32
    return %c0_i32, %c0_i32_0, %c0_i32_1 : i32, i32, i32
  }
  func.func @transform_9(%arg0: i32) -> (i32, i32, i32) {
    %c0_i32 = arith.constant 0 : i32
    %c0_i32_0 = arith.constant 0 : i32
    %c0_i32_1 = arith.constant 0 : i32
    %c0_i32_2 = arith.constant 0 : i32
    return %c0_i32, %c0_i32_0, %c0_i32_1 : i32, i32, i32
  }
  func.func @transform_10(%arg0: i32) -> (i32, i32, i32) {
    %c0_i32 = arith.constant 0 : i32
    %c0_i32_0 = arith.constant 0 : i32
    %c0_i32_1 = arith.constant 0 : i32
    %c0_i32_2 = arith.constant 0 : i32
    return %c0_i32, %c0_i32_0, %c0_i32_1 : i32, i32, i32
  }
  func.func @transform_11(%arg0: i32) -> (i32, i32, i32) {
    %c0_i32 = arith.constant 0 : i32
    %c0_i32_0 = arith.constant 0 : i32
    %c0_i32_1 = arith.constant 0 : i32
    %c0_i32_2 = arith.constant 0 : i32
    return %c0_i32, %c0_i32_0, %c0_i32_1 : i32, i32, i32
  }
  func.func @transform_12(%arg0: i32) -> (i32, i32, i32) {
    %c0_i32 = arith.constant 0 : i32
    %c0_i32_0 = arith.constant 0 : i32
    %c0_i32_1 = arith.constant 0 : i32
    %c0_i32_2 = arith.constant 0 : i32
    return %c0_i32, %c0_i32_0, %c0_i32_1 : i32, i32, i32
  }
  func.func @transform_13(%arg0: i32) -> (i32, i32, i32) {
    %c0_i32 = arith.constant 0 : i32
    %c0_i32_0 = arith.constant 0 : i32
    %c0_i32_1 = arith.constant 0 : i32
    %c0_i32_2 = arith.constant 0 : i32
    return %c0_i32, %c0_i32_0, %c0_i32_1 : i32, i32, i32
  }
  func.func @transform_14(%arg0: i32) -> (i32, i32, i32) {
    %c0_i32 = arith.constant 0 : i32
    %c0_i32_0 = arith.constant 0 : i32
    %c0_i32_1 = arith.constant 0 : i32
    %c0_i32_2 = arith.constant 0 : i32
    return %c0_i32, %c0_i32_0, %c0_i32_1 : i32, i32, i32
  }
  func.func @transform_15(%arg0: i32) -> (i32, i32, i32) {
    %c0_i32 = arith.constant 0 : i32
    %c0_i32_0 = arith.constant 0 : i32
    %c0_i32_1 = arith.constant 0 : i32
    %c0_i32_2 = arith.constant 0 : i32
    return %c0_i32, %c0_i32_0, %c0_i32_1 : i32, i32, i32
  }
  func.func @transform_16(%arg0: i32) -> (i32, i32, i32) {
    %c0_i32 = arith.constant 0 : i32
    %c0_i32_0 = arith.constant 0 : i32
    %c0_i32_1 = arith.constant 0 : i32
    %c0_i32_2 = arith.constant 0 : i32
    return %c0_i32, %c0_i32_0, %c0_i32_1 : i32, i32, i32
  }
  func.func @transform_17(%arg0: i32) -> (i32, i32) {
    %c0_i32 = arith.constant 0 : i32
    %c0_i32_0 = arith.constant 0 : i32
    %c0_i32_1 = arith.constant 0 : i32
    return %c0_i32, %c0_i32_0 : i32, i32
  }
  func.func @transform_18(%arg0: i32) -> (i32, i32) {
    %c0_i32 = arith.constant 0 : i32
    %c0_i32_0 = arith.constant 0 : i32
    %c0_i32_1 = arith.constant 0 : i32
    return %c0_i32, %c0_i32_0 : i32, i32
  }
  func.func @transform_19(%arg0: i32) -> (i32, i32, i32) {
    %c0_i32 = arith.constant 0 : i32
    %c0_i32_0 = arith.constant 0 : i32
    %c0_i32_1 = arith.constant 0 : i32
    return %arg0, %c0_i32, %c0_i32_0 : i32, i32, i32
  }
  func.func @transform_20(%arg0: i32) -> (i32, i32, i32) {
    %c0_i32 = arith.constant 0 : i32
    %c0_i32_0 = arith.constant 0 : i32
    %c0_i32_1 = arith.constant 0 : i32
    return %arg0, %c0_i32, %c0_i32_0 : i32, i32, i32
  }
}

</mosaic_0001>

<llo_original>
// kernel: tpu_custom_call.1
$region0: #{tpu_custom_call.1}
  #allocation0 [shape = 'u32[]', space=smem, size = 0x4, offset = 0x4, fixed_abs, tag = 'smem constant byte address 0x4 - core index']
  #allocation1 [shape = 'u32[144,128]{1,0:T(1,128)}', space=vmem, size = 0x12000, scoped, tag = 'internal scratch']
  #allocation2 [shape = 'bf16[17,64]{1,0:T(8,128)(2,1)}', space=vmem, size = 0x1800, scoped, tag = 'scratch operand']
  %s0 = inlined_call_operand.vmem [shape: bf16[2,17,48], index: 0, kind: input, shape index: {}]
  %s1 = inlined_call_operand.vmem [shape: bf16[48,64], index: 1, kind: input, shape index: {}]
  %s2 = inlined_call_operand.hbm [shape: f32[17,64], index: 2, kind: input, shape index: {}]
  %s3 = inlined_call_operand.vmem [shape: f32[1,64], index: 3, kind: input, shape index: {}]
  %s4 = inlined_call_operand.hbm [shape: f32[1,64], index: 4, kind: input, shape index: {}]
  %s5 = inlined_call_operand.vmem [shape: f32[2,1,64], index: 5, kind: input, shape index: {}]
  %s6 = inlined_call_operand.hbm [shape: f32[2,1,64], index: 6, kind: input, shape index: {}]
  %s7 = inlined_call_operand.vmem [shape: bf16[2,64,384], index: 7, kind: input, shape index: {}]
  %s8 = inlined_call_operand.vmem [shape: f32[2,1,384], index: 8, kind: input, shape index: {}]
  %s9 = inlined_call_operand.hbm [shape: bf16[2,64,64], index: 9, kind: input, shape index: {}]
  %s10 = inlined_call_operand.hbm [shape: f32[2,1,64], index: 10, kind: input, shape index: {}]
  %s11 = inlined_call_operand.hbm [shape: f32[2,1,64], index: 11, kind: input, shape index: {}]
  %s12 = inlined_call_operand.hbm [shape: f32[2,1,64], index: 12, kind: input, shape index: {}]
  %s13 = inlined_call_operand.hbm [shape: bf16[2,64,128], index: 13, kind: input, shape index: {}]
  %s14 = inlined_call_operand.hbm [shape: f32[2,1,128], index: 14, kind: input, shape index: {}]
  %s15 = inlined_call_operand.vmem [shape: bf16[2,128,64], index: 15, kind: input, shape index: {}]
  %s16 = inlined_call_operand.vmem [shape: f32[2,1,64], index: 16, kind: input, shape index: {}]
  %s17 = inlined_call_operand.vmem [shape: f32[1,64], index: 17, kind: input, shape index: {}]
  %s18 = inlined_call_operand.vmem [shape: f32[1,64], index: 18, kind: input, shape index: {}]
  %s19 = inlined_call_operand.vmem [shape: f32[2,17,64], index: 19, kind: output, shape index: {0}]
  %s20 = inlined_call_operand.hbm [shape: f32[2,1,64], index: 20, kind: output, shape index: {1}]
  %21 = xla_tuple %s19, %s20
  %s22 = sld [smem:[#allocation0]]
  $region153: #{tpu_custom_call.1} parent=0
    _
  %s24 = ssub.s32 1, %s22
  %s25 = scalar_select 0, %s24, %s22
  $region1: #{tpu_custom_call.1} parent=0
    #allocation3 [shape = 'u8[12288]{0}', space=vmem, size = 0x3000, scoped, tag = 'input window, operand 2, single buffered']
    #allocation4 [shape = 's32[2]{0}', space=sflag, size = 0x8, scoped, tag = 'scoped memory for tpu_custom_call.1']
    #allocation5 [shape = 's32[2]{0}', space=sflag, size = 0x8, scoped, tag = 'scoped memory for tpu_custom_call.1']
    #allocation6 [shape = 'u8[512]{0}', space=vmem, size = 0x400, scoped, tag = 'input window, operand 4, single buffered']
    #allocation7 [shape = 's32[1]{0}', space=sflag, size = 0x4, scoped, tag = 'scoped memory for tpu_custom_call.1']
    #allocation8 [shape = 'u8[1024]{0}', space=vmem, size = 0x400, scoped, tag = 'input window, operand 6, single buffered']
    #allocation9 [shape = 'u8[32768]{0}', space=vmem, size = 0x8000, scoped, tag = 'input window, operand 9, single buffered']
    #allocation10 [shape = 's32[1]{0}', space=sflag, size = 0x4, scoped, tag = 'scoped memory for tpu_custom_call.1']
    #allocation11 [shape = 'u8[1024]{0}', space=vmem, size = 0x400, scoped, tag = 'input window, operand 10, single buffered']
    #allocation12 [shape = 'u8[1024]{0}', space=vmem, size = 0x400, scoped, tag = 'input window, operand 11, single buffered']
    #allocation13 [shape = 's32[1]{0}', space=sflag, size = 0x4, scoped, tag = 'scoped memory for tpu_custom_call.1']
    #allocation14 [shape = 'u8[1024]{0}', space=vmem, size = 0x400, scoped, tag = 'input window, operand 12, single buffered']
    #allocation15 [shape = 'u8[32768]{0}', space=vmem, size = 0x8000, scoped, tag = 'input window, operand 13, single buffered']
    #allocation16 [shape = 's32[1]{0}', space=sflag, size = 0x4, scoped, tag = 'scoped memory for tpu_custom_call.1']
    #allocation17 [shape = 'u8[1024]{0}', space=vmem, size = 0x400, scoped, tag = 'input window, operand 14, single buffered']
    #allocation18 [shape = 'u8[1024]{0}', space=vmem, size = 0x400, scoped, tag = 'output window, operand 1']
    %26 = vsyncpa [#allocation4], 0
    %27 = vsyncpa [#allocation7], 0
    %28 = vsyncpa [#allocation10], 0
    %29 = vsyncpa [#allocation13], 0
    %30 = vsyncpa [#allocation16], 0
    %31 = vsyncpa [#allocation5], 0
    %s32 = scalar_lea.sflag [#allocation5], 1
    %33 = vsyncpa %s32, 0
    loop: start=0, step=1, limit=4
    $region2: #{tpu_custom_call.1} parent=1 // loop_pre_header
      _
    $region3: #{tpu_custom_call.1} parent=1 // loop_header
      %s35 = sphi 0, %s39
      %p36 = scmp.ge.s32.totalorder %s35, 4
      %s45 = sphi 0, %s47
      %s48 = sphi 0, %s45
      %s49 = sphi 0, %s48
      %s65 = sphi 0, %s49
      %s69 = sphi 0, %s69
      %s71 = sphi 0, %s69
      %s72 = sphi 0, %s71
      %s86 = sphi 0, %s72
      %s90 = sphi 0, %s90
      %s92 = sphi 0, %s90
      %s93 = sphi 0, %s92
      %s107 = sphi 0, %s93
      %s111 = sphi 0, %s111
      %s113 = sphi 0, %s111
      %s114 = sphi 0, %s113
      %s128 = sphi 0, %s114
      %s132 = sphi 0, %s132
      %s134 = sphi 0, %s132
      %s135 = sphi 0, %s134
      %s149 = sphi 0, %s135
      %s153 = sphi 0, %s153
      %s155 = sphi 0, %s153
      %s156 = sphi 0, %s155
      %s170 = sphi 0, %s156
      %s174 = sphi 0, %s174
      %s176 = sphi 0, %s174
      %s177 = sphi 0, %s176
      %s191 = sphi 0, %s177
      %s195 = sphi 0, %s195
      %s197 = sphi 0, %s195
      %s198 = sphi 0, %s197
      %s212 = sphi 0, %s198
      %s216 = sphi 0, %s216
      %s218 = sphi 0, %s216
      %s219 = sphi 0, %s218
      %s233 = sphi 0, %s219
      %s237 = sphi 0, %s237
      %s239 = sphi 0, %s237
      %s240 = sphi 0, %s239
      %s254 = sphi 0, %s240
      %s258 = sphi 0, %s258
      %s260 = sphi 0, %s258
      %s261 = sphi 0, %s260
      %s275 = sphi 0, %s261
      %s279 = sphi 0, %s279
      %s281 = sphi 0, %s279
      %s282 = sphi 0, %s281
      %s296 = sphi 0, %s282
      %s300 = sphi 0, %s300
      %s302 = sphi 0, %s300
      %s303 = sphi 0, %s302
      %s317 = sphi 0, %s303
      %s321 = sphi 0, %s321
      %s323 = sphi 0, %s321
      %s324 = sphi 0, %s323
      %s338 = sphi 0, %s324
      %s342 = sphi 0, %s342
      %s344 = sphi 0, %s342
      %s345 = sphi 0, %s344
      %s359 = sphi 0, %s345
      %s363 = sphi 0, %s363
      %s365 = sphi 0, %s363
      %s366 = sphi 0, %s365
      %s380 = sphi 0, %s366
      %s384 = sphi 0, %s384
      %s386 = sphi 0, %s384
      %s387 = sphi 0, %s386
      %s401 = sphi 0, %s387
      %s405 = sphi 0, %s405
      %s407 = sphi 0, %s405
      %s408 = sphi 0, %s407
      %s422 = sphi 0, %s408
      %s426 = sphi 0, %s426
      %s428 = sphi 0, %s426
      %s429 = sphi 0, %s428
      %s443 = sphi 0, %s429
      %s449 = sphi 0, %s451
      %s452 = sphi 0, %s449
      %s453 = sphi 0, %s452
      %s469 = sphi 0, %s453
      %s475 = sphi 0, %s477
      %s478 = sphi 0, %s475
      %s479 = sphi 0, %s478
      %s495 = sphi 0, %s479
    $region4: #{tpu_custom_call.1} parent=1 // loop_header_branch
      %38 = sbr.rel (%p36) target = $region8
    $region5: #{tpu_custom_call.1} parent=1 // loop_body
      %s40 = ssub.s32 %s35, 1
      %s41 = ssub.s32 %s35, 2
      %s42 = sadd.s32 %s35, 1
      %s43 = ssub.s32 %s35, %s42
      %p44 = scmp.eq.s32.totalorder %s43, 0
      %s46 = sadd.s32 %s45, 1
      %s47 = scalar_select %p44, %s45, %s46
      %p50 = pneg %p44
      %p51 = scmp.eq.s32.totalorder %s35, 1
      %p52 = por %p50, %p51
      %p53 = scmp.ne.s32.totalorder %s45, %s48
      %p54 = scmp.eq.s32.totalorder %s35, 0
      %p55 = por %p53, %p54
      %p56 = scmp.ne.s32.totalorder %s45, %s48
      %p57 = scmp.eq.s32.totalorder %s40, 1
      %p58 = por %p56, %p57
      %p59 = scmp.ne.s32.totalorder %s48, %s49
      %p60 = scmp.eq.s32.totalorder %s40, 0
      %p61 = por %p59, %p60
      %p62 = scmp.ne.s32.totalorder %s48, %s49
      %p63 = scmp.eq.s32.totalorder %s41, 1
      %p64 = por %p62, %p63
      %p66 = scmp.ne.s32.totalorder %s49, %s65
      %p67 = scmp.eq.s32.totalorder %s41, 0
      %p68 = por %p66, %p67
      %s70 = sadd.s32 %s69, 1
      %p73 = scmp.eq.s32.totalorder %s35, 1
      %p74 = scmp.ne.s32.totalorder %s69, %s71
      %p75 = scmp.eq.s32.totalorder %s35, 0
      %p76 = por %p74, %p75
      %p77 = scmp.ne.s32.totalorder %s69, %s71
      %p78 = scmp.eq.s32.totalorder %s40, 1
      %p79 = por %p77, %p78
      %p80 = scmp.ne.s32.totalorder %s71, %s72
      %p81 = scmp.eq.s32.totalorder %s40, 0
      %p82 = por %p80, %p81
      %p83 = scmp.ne.s32.totalorder %s71, %s72
      %p84 = scmp.eq.s32.totalorder %s41, 1
      %p85 = por %p83, %p84
      %p87 = scmp.ne.s32.totalorder %s72, %s86
      %p88 = scmp.eq.s32.totalorder %s41, 0
      %p89 = por %p87, %p88
      %s91 = sadd.s32 %s90, 1
      %p94 = scmp.eq.s32.totalorder %s35, 1
      %p95 = scmp.ne.s32.totalorder %s90, %s92
      %p96 = scmp.eq.s32.totalorder %s35, 0
      %p97 = por %p95, %p96
      %p98 = scmp.ne.s32.totalorder %s90, %s92
      %p99 = scmp.eq.s32.totalorder %s40, 1
      %p100 = por %p98, %p99
      %p101 = scmp.ne.s32.totalorder %s92, %s93
      %p102 = scmp.eq.s32.totalorder %s40, 0
      %p103 = por %p101, %p102
      %p104 = scmp.ne.s32.totalorder %s92, %s93
      %p105 = scmp.eq.s32.totalorder %s41, 1
      %p106 = por %p104, %p105
      %p108 = scmp.ne.s32.totalorder %s93, %s107
      %p109 = scmp.eq.s32.totalorder %s41, 0
      %p110 = por %p108, %p109
      %s112 = sadd.s32 %s111, 1
      %p115 = scmp.eq.s32.totalorder %s35, 1
      %p116 = scmp.ne.s32.totalorder %s111, %s113
      %p117 = scmp.eq.s32.totalorder %s35, 0
      %p118 = por %p116, %p117
      %p119 = scmp.ne.s32.totalorder %s111, %s113
      %p120 = scmp.eq.s32.totalorder %s40, 1
      %p121 = por %p119, %p120
      %p122 = scmp.ne.s32.totalorder %s113, %s114
      %p123 = scmp.eq.s32.totalorder %s40, 0
      %p124 = por %p122, %p123
      %p125 = scmp.ne.s32.totalorder %s113, %s114
      %p126 = scmp.eq.s32.totalorder %s41, 1
      %p127 = por %p125, %p126
      %p129 = scmp.ne.s32.totalorder %s114, %s128
      %p130 = scmp.eq.s32.totalorder %s41, 0
      %p131 = por %p129, %p130
      %s133 = sadd.s32 %s132, 1
      %p136 = scmp.eq.s32.totalorder %s35, 1
      %p137 = scmp.ne.s32.totalorder %s132, %s134
      %p138 = scmp.eq.s32.totalorder %s35, 0
      %p139 = por %p137, %p138
      %p140 = scmp.ne.s32.totalorder %s132, %s134
      %p141 = scmp.eq.s32.totalorder %s40, 1
      %p142 = por %p140, %p141
      %p143 = scmp.ne.s32.totalorder %s134, %s135
      %p144 = scmp.eq.s32.totalorder %s40, 0
      %p145 = por %p143, %p144
      %p146 = scmp.ne.s32.totalorder %s134, %s135
      %p147 = scmp.eq.s32.totalorder %s41, 1
      %p148 = por %p146, %p147
      %p150 = scmp.ne.s32.totalorder %s135, %s149
      %p151 = scmp.eq.s32.totalorder %s41, 0
      %p152 = por %p150, %p151
      %s154 = sadd.s32 %s153, 1
      %p157 = scmp.eq.s32.totalorder %s35, 1
      %p158 = scmp.ne.s32.totalorder %s153, %s155
      %p159 = scmp.eq.s32.totalorder %s35, 0
      %p160 = por %p158, %p159
      %p161 = scmp.ne.s32.totalorder %s153, %s155
      %p162 = scmp.eq.s32.totalorder %s40, 1
      %p163 = por %p161, %p162
      %p164 = scmp.ne.s32.totalorder %s155, %s156
      %p165 = scmp.eq.s32.totalorder %s40, 0
      %p166 = por %p164, %p165
      %p167 = scmp.ne.s32.totalorder %s155, %s156
      %p168 = scmp.eq.s32.totalorder %s41, 1
      %p169 = por %p167, %p168
      %p171 = scmp.ne.s32.totalorder %s156, %s170
      %p172 = scmp.eq.s32.totalorder %s41, 0
      %p173 = por %p171, %p172
      %s175 = sadd.s32 %s174, 1
      %p178 = scmp.eq.s32.totalorder %s35, 1
      %p179 = scmp.ne.s32.totalorder %s174, %s176
      %p180 = scmp.eq.s32.totalorder %s35, 0
      %p181 = por %p179, %p180
      %p182 = scmp.ne.s32.totalorder %s174, %s176
      %p183 = scmp.eq.s32.totalorder %s40, 1
      %p184 = por %p182, %p183
      %p185 = scmp.ne.s32.totalorder %s176, %s177
      %p186 = scmp.eq.s32.totalorder %s40, 0
      %p187 = por %p185, %p186
      %p188 = scmp.ne.s32.totalorder %s176, %s177
      %p189 = scmp.eq.s32.totalorder %s41, 1
      %p190 = por %p188, %p189
      %p192 = scmp.ne.s32.totalorder %s177, %s191
      %p193 = scmp.eq.s32.totalorder %s41, 0
      %p194 = por %p192, %p193
      %s196 = sadd.s32 %s195, 1
      %p199 = scmp.eq.s32.totalorder %s35, 1
      %p200 = scmp.ne.s32.totalorder %s195, %s197
      %p201 = scmp.eq.s32.totalorder %s35, 0
      %p202 = por %p200, %p201
      %p203 = scmp.ne.s32.totalorder %s195, %s197
      %p204 = scmp.eq.s32.totalorder %s40, 1
      %p205 = por %p203, %p204
      %p206 = scmp.ne.s32.totalorder %s197, %s198
      %p207 = scmp.eq.s32.totalorder %s40, 0
      %p208 = por %p206, %p207
      %p209 = scmp.ne.s32.totalorder %s197, %s198
      %p210 = scmp.eq.s32.totalorder %s41, 1
      %p211 = por %p209, %p210
      %p213 = scmp.ne.s32.totalorder %s198, %s212
      %p214 = scmp.eq.s32.totalorder %s41, 0
      %p215 = por %p213, %p214
      %s217 = sadd.s32 %s216, 1
      %p220 = scmp.eq.s32.totalorder %s35, 1
      %p221 = scmp.ne.s32.totalorder %s216, %s218
      %p222 = scmp.eq.s32.totalorder %s35, 0
      %p223 = por %p221, %p222
      %p224 = scmp.ne.s32.totalorder %s216, %s218
      %p225 = scmp.eq.s32.totalorder %s40, 1
      %p226 = por %p224, %p225
      %p227 = scmp.ne.s32.totalorder %s218, %s219
      %p228 = scmp.eq.s32.totalorder %s40, 0
      %p229 = por %p227, %p228
      %p230 = scmp.ne.s32.totalorder %s218, %s219
      %p231 = scmp.eq.s32.totalorder %s41, 1
      %p232 = por %p230, %p231
      %p234 = scmp.ne.s32.totalorder %s219, %s233
      %p235 = scmp.eq.s32.totalorder %s41, 0
      %p236 = por %p234, %p235
      %s238 = sadd.s32 %s237, 1
      %p241 = scmp.eq.s32.totalorder %s35, 1
      %p242 = scmp.ne.s32.totalorder %s237, %s239
      %p243 = scmp.eq.s32.totalorder %s35, 0
      %p244 = por %p242, %p243
      %p245 = scmp.ne.s32.totalorder %s237, %s239
      %p246 = scmp.eq.s32.totalorder %s40, 1
      %p247 = por %p245, %p246
      %p248 = scmp.ne.s32.totalorder %s239, %s240
      %p249 = scmp.eq.s32.totalorder %s40, 0
      %p250 = por %p248, %p249
      %p251 = scmp.ne.s32.totalorder %s239, %s240
      %p252 = scmp.eq.s32.totalorder %s41, 1
      %p253 = por %p251, %p252
      %p255 = scmp.ne.s32.totalorder %s240, %s254
      %p256 = scmp.eq.s32.totalorder %s41, 0
      %p257 = por %p255, %p256
      %s259 = sadd.s32 %s258, 1
      %p262 = scmp.eq.s32.totalorder %s35, 1
      %p263 = scmp.ne.s32.totalorder %s258, %s260
      %p264 = scmp.eq.s32.totalorder %s35, 0
      %p265 = por %p263, %p264
      %p266 = scmp.ne.s32.totalorder %s258, %s260
      %p267 = scmp.eq.s32.totalorder %s40, 1
      %p268 = por %p266, %p267
      %p269 = scmp.ne.s32.totalorder %s260, %s261
      %p270 = scmp.eq.s32.totalorder %s40, 0
      %p271 = por %p269, %p270
      %p272 = scmp.ne.s32.totalorder %s260, %s261
      %p273 = scmp.eq.s32.totalorder %s41, 1
      %p274 = por %p272, %p273
      %p276 = scmp.ne.s32.totalorder %s261, %s275
      %p277 = scmp.eq.s32.totalorder %s41, 0
      %p278 = por %p276, %p277
      %s280 = sadd.s32 %s279, 1
      %p283 = scmp.eq.s32.totalorder %s35, 1
      %p284 = scmp.ne.s32.totalorder %s279, %s281
      %p285 = scmp.eq.s32.totalorder %s35, 0
      %p286 = por %p284, %p285
      %p287 = scmp.ne.s32.totalorder %s279, %s281
      %p288 = scmp.eq.s32.totalorder %s40, 1
      %p289 = por %p287, %p288
      %p290 = scmp.ne.s32.totalorder %s281, %s282
      %p291 = scmp.eq.s32.totalorder %s40, 0
      %p292 = por %p290, %p291
      %p293 = scmp.ne.s32.totalorder %s281, %s282
      %p294 = scmp.eq.s32.totalorder %s41, 1
      %p295 = por %p293, %p294
      %p297 = scmp.ne.s32.totalorder %s282, %s296
      %p298 = scmp.eq.s32.totalorder %s41, 0
      %p299 = por %p297, %p298
      %s301 = sadd.s32 %s300, 1
      %p304 = scmp.eq.s32.totalorder %s35, 1
      %p305 = scmp.ne.s32.totalorder %s300, %s302
      %p306 = scmp.eq.s32.totalorder %s35, 0
      %p307 = por %p305, %p306
      %p308 = scmp.ne.s32.totalorder %s300, %s302
      %p309 = scmp.eq.s32.totalorder %s40, 1
      %p310 = por %p308, %p309
      %p311 = scmp.ne.s32.totalorder %s302, %s303
      %p312 = scmp.eq.s32.totalorder %s40, 0
      %p313 = por %p311, %p312
      %p314 = scmp.ne.s32.totalorder %s302, %s303
      %p315 = scmp.eq.s32.totalorder %s41, 1
      %p316 = por %p314, %p315
      %p318 = scmp.ne.s32.totalorder %s303, %s317
      %p319 = scmp.eq.s32.totalorder %s41, 0
      %p320 = por %p318, %p319
      %s322 = sadd.s32 %s321, 1
      %p325 = scmp.eq.s32.totalorder %s35, 1
      %p326 = scmp.ne.s32.totalorder %s321, %s323
      %p327 = scmp.eq.s32.totalorder %s35, 0
      %p328 = por %p326, %p327
      %p329 = scmp.ne.s32.totalorder %s321, %s323
      %p330 = scmp.eq.s32.totalorder %s40, 1
      %p331 = por %p329, %p330
      %p332 = scmp.ne.s32.totalorder %s323, %s324
      %p333 = scmp.eq.s32.totalorder %s40, 0
      %p334 = por %p332, %p333
      %p335 = scmp.ne.s32.totalorder %s323, %s324
      %p336 = scmp.eq.s32.totalorder %s41, 1
      %p337 = por %p335, %p336
      %p339 = scmp.ne.s32.totalorder %s324, %s338
      %p340 = scmp.eq.s32.totalorder %s41, 0
      %p341 = por %p339, %p340
      %s343 = sadd.s32 %s342, 1
      %p346 = scmp.eq.s32.totalorder %s35, 1
      %p347 = scmp.ne.s32.totalorder %s342, %s344
      %p348 = scmp.eq.s32.totalorder %s35, 0
      %p349 = por %p347, %p348
      %p350 = scmp.ne.s32.totalorder %s342, %s344
      %p351 = scmp.eq.s32.totalorder %s40, 1
      %p352 = por %p350, %p351
      %p353 = scmp.ne.s32.totalorder %s344, %s345
      %p354 = scmp.eq.s32.totalorder %s40, 0
      %p355 = por %p353, %p354
      %p356 = scmp.ne.s32.totalorder %s344, %s345
      %p357 = scmp.eq.s32.totalorder %s41, 1
      %p358 = por %p356, %p357
      %p360 = scmp.ne.s32.totalorder %s345, %s359
      %p361 = scmp.eq.s32.totalorder %s41, 0
      %p362 = por %p360, %p361
      %s364 = sadd.s32 %s363, 1
      %p367 = scmp.eq.s32.totalorder %s35, 1
      %p368 = scmp.ne.s32.totalorder %s363, %s365
      %p369 = scmp.eq.s32.totalorder %s35, 0
      %p370 = por %p368, %p369
      %p371 = scmp.ne.s32.totalorder %s363, %s365
      %p372 = scmp.eq.s32.totalorder %s40, 1
      %p373 = por %p371, %p372
      %p374 = scmp.ne.s32.totalorder %s365, %s366
      %p375 = scmp.eq.s32.totalorder %s40, 0
      %p376 = por %p374, %p375
      %p377 = scmp.ne.s32.totalorder %s365, %s366
      %p378 = scmp.eq.s32.totalorder %s41, 1
      %p379 = por %p377, %p378
      %p381 = scmp.ne.s32.totalorder %s366, %s380
      %p382 = scmp.eq.s32.totalorder %s41, 0
      %p383 = por %p381, %p382
      %s385 = sadd.s32 %s384, 1
      %p388 = scmp.eq.s32.totalorder %s35, 1
      %p389 = scmp.ne.s32.totalorder %s384, %s386
      %p390 = scmp.eq.s32.totalorder %s35, 0
      %p391 = por %p389, %p390
      %p392 = scmp.ne.s32.totalorder %s384, %s386
      %p393 = scmp.eq.s32.totalorder %s40, 1
      %p394 = por %p392, %p393
      %p395 = scmp.ne.s32.totalorder %s386, %s387
      %p396 = scmp.eq.s32.totalorder %s40, 0
      %p397 = por %p395, %p396
      %p398 = scmp.ne.s32.totalorder %s386, %s387
      %p399 = scmp.eq.s32.totalorder %s41, 1
      %p400 = por %p398, %p399
      %p402 = scmp.ne.s32.totalorder %s387, %s401
      %p403 = scmp.eq.s32.totalorder %s41, 0
      %p404 = por %p402, %p403
      %s406 = sadd.s32 %s405, 1
      %p409 = scmp.eq.s32.totalorder %s35, 1
      %p410 = scmp.ne.s32.totalorder %s405, %s407
      %p411 = scmp.eq.s32.totalorder %s35, 0
      %p412 = por %p410, %p411
      %p413 = scmp.ne.s32.totalorder %s405, %s407
      %p414 = scmp.eq.s32.totalorder %s40, 1
      %p415 = por %p413, %p414
      %p416 = scmp.ne.s32.totalorder %s407, %s408
      %p417 = scmp.eq.s32.totalorder %s40, 0
      %p418 = por %p416, %p417
      %p419 = scmp.ne.s32.totalorder %s407, %s408
      %p420 = scmp.eq.s32.totalorder %s41, 1
      %p421 = por %p419, %p420
      %p423 = scmp.ne.s32.totalorder %s408, %s422
      %p424 = scmp.eq.s32.totalorder %s41, 0
      %p425 = por %p423, %p424
      %s427 = sadd.s32 %s426, 1
      %p430 = scmp.eq.s32.totalorder %s35, 1
      %p431 = scmp.ne.s32.totalorder %s426, %s428
      %p432 = scmp.eq.s32.totalorder %s35, 0
      %p433 = por %p431, %p432
      %p434 = scmp.ne.s32.totalorder %s426, %s428
      %p435 = scmp.eq.s32.totalorder %s40, 1
      %p436 = por %p434, %p435
      %p437 = scmp.ne.s32.totalorder %s428, %s429
      %p438 = scmp.eq.s32.totalorder %s40, 0
      %p439 = por %p437, %p438
      %p440 = scmp.ne.s32.totalorder %s428, %s429
      %p441 = scmp.eq.s32.totalorder %s41, 1
      %p442 = por %p440, %p441
      %p444 = scmp.ne.s32.totalorder %s429, %s443
      %p445 = scmp.eq.s32.totalorder %s41, 0
      %p446 = por %p444, %p445
      %s447 = ssub.s32 %s35, %s42
      %p448 = scmp.eq.s32.totalorder %s447, 0
      %s450 = sadd.s32 %s449, 1
      %s451 = scalar_select %p448, %s449, %s450
      %p454 = pneg %p448
      %p455 = scmp.eq.s32.totalorder %s35, 1
      %p456 = por %p454, %p455
      %p457 = scmp.ne.s32.totalorder %s449, %s452
      %p458 = scmp.eq.s32.totalorder %s35, 0
      %p459 = por %p457, %p458
      %p460 = scmp.ne.s32.totalorder %s449, %s452
      %p461 = scmp.eq.s32.totalorder %s40, 1
      %p462 = por %p460, %p461
      %p463 = scmp.ne.s32.totalorder %s452, %s453
      %p464 = scmp.eq.s32.totalorder %s40, 0
      %p465 = por %p463, %p464
      %p466 = scmp.ne.s32.totalorder %s452, %s453
      %p467 = scmp.eq.s32.totalorder %s41, 1
      %p468 = por %p466, %p467
      %p470 = scmp.ne.s32.totalorder %s453, %s469
      %p471 = scmp.eq.s32.totalorder %s41, 0
      %p472 = por %p470, %p471
      %s473 = ssub.s32 %s35, %s42
      %p474 = scmp.eq.s32.totalorder %s473, 0
      %s476 = sadd.s32 %s475, 1
      %s477 = scalar_select %p474, %s475, %s476
      %p480 = pneg %p474
      %p481 = scmp.eq.s32.totalorder %s35, 1
      %p482 = por %p480, %p481
      %p483 = scmp.ne.s32.totalorder %s475, %s478
      %p484 = scmp.eq.s32.totalorder %s35, 0
      %p485 = por %p483, %p484
      %p486 = scmp.ne.s32.totalorder %s475, %s478
      %p487 = scmp.eq.s32.totalorder %s40, 1
      %p488 = por %p486, %p487
      %p489 = scmp.ne.s32.totalorder %s478, %s479
      %p490 = scmp.eq.s32.totalorder %s40, 0
      %p491 = por %p489, %p490
      %p492 = scmp.ne.s32.totalorder %s478, %s479
      %p493 = scmp.eq.s32.totalorder %s41, 1
      %p494 = por %p492, %p493
      %p496 = scmp.ne.s32.totalorder %s479, %s495
      %p497 = scmp.eq.s32.totalorder %s41, 0
      %p498 = por %p496, %p497
      %p499 = scmp.le.s32.totalorder 1, %s35
      %p500 = scmp.lt.s32.totalorder %s35, 3
      %p501 = pnand %p499, %p500
      %p502 = pneg %p501
      // Predicated region
      $region9: #{tpu_custom_call.1} parent=5 // pred_check
        _
      $region10: #{tpu_custom_call.1} parent=5 // pred_check_branch
        %504 = sbr.rel (%p501) target = $region12
      $region11: #{tpu_custom_call.1} parent=5 // pred_region
        %s505 = ssub.s32 %s35, 1
        // Predicated region
        $region13: #{tpu_custom_call.1} parent=11 // pred_check
          %p506 = pneg %p82
        $region14: #{tpu_custom_call.1} parent=11 // pred_check_branch
          %508 = sbr.rel (%p506) target = $region16
        $region15: #{tpu_custom_call.1} parent=11 // pred_region
          _
        $region16: #{tpu_custom_call.1} parent=11 // pred_fallthru
          _
        // Predicated region
        $region17: #{tpu_custom_call.1} parent=11 // pred_check
          %p509 = pneg %p103
        $region18: #{tpu_custom_call.1} parent=11 // pred_check_branch
          %511 = sbr.rel (%p509) target = $region20
        $region19: #{tpu_custom_call.1} parent=11 // pred_region
          %s513 = ssub.s32 384, 384
          %514 = vsyncadd [#allocation4], %s513
          %s515 = sshll.u32 [#allocation3], 4
          %s516 = int_to_ptr.vmem [resolvable:$true] %s515
          %521 = dma.hbm_to_vmem [thread:$0]  %s2, 384, %s516, [#allocation4], 128, 128, 8
        $region20: #{tpu_custom_call.1} parent=11 // pred_fallthru
          _
        // Predicated region
        $region21: #{tpu_custom_call.1} parent=11 // pred_check
          %p522 = pneg %p124
        $region22: #{tpu_custom_call.1} parent=11 // pred_check_branch
          %524 = sbr.rel (%p522) target = $region24
        $region23: #{tpu_custom_call.1} parent=11 // pred_region
          _
        $region24: #{tpu_custom_call.1} parent=11 // pred_fallthru
          _
        // Predicated region
        $region25: #{tpu_custom_call.1} parent=11 // pred_check
          %p525 = pneg %p145
        $region26: #{tpu_custom_call.1} parent=11 // pred_check_branch
          %527 = sbr.rel (%p525) target = $region28
        $region27: #{tpu_custom_call.1} parent=11 // pred_region
          %s529 = ssub.s32 16, 16
          %530 = vsyncadd [#allocation7], %s529
          %s532 = sshll.u32 [#allocation6], 4
          %s533 = int_to_ptr.vmem [resolvable:$true] %s532
          %535 = dma.hbm_to_vmem [thread:$0]  %s4, 16, %s533, [#allocation7]
        $region28: #{tpu_custom_call.1} parent=11 // pred_fallthru
          _
        // Predicated region
        $region29: #{tpu_custom_call.1} parent=11 // pred_check
          %p536 = pneg %p166
        $region30: #{tpu_custom_call.1} parent=11 // pred_check_branch
          %538 = sbr.rel (%p536) target = $region32
        $region31: #{tpu_custom_call.1} parent=11 // pred_region
          _
        $region32: #{tpu_custom_call.1} parent=11 // pred_fallthru
          _
        // Predicated region
        $region33: #{tpu_custom_call.1} parent=11 // pred_check
          %p539 = pneg %p187
        $region34: #{tpu_custom_call.1} parent=11 // pred_check_branch
          %541 = sbr.rel (%p539) target = $region36
        $region35: #{tpu_custom_call.1} parent=11 // pred_region
          %s543 = ssub.s32 32, 32
          %544 = vsyncadd [#allocation7], %s543
          %s545 = sshll.u32 [#allocation8], 4
          %s546 = int_to_ptr.vmem [resolvable:$true] %s545
          %551 = dma.hbm_to_vmem [thread:$0]  %s6, 32, %s546, [#allocation7], 16, 16, 1
        $region36: #{tpu_custom_call.1} parent=11 // pred_fallthru
          _
        // Predicated region
        $region37: #{tpu_custom_call.1} parent=11 // pred_check
          %p552 = pneg %p208
        $region38: #{tpu_custom_call.1} parent=11 // pred_check_branch
          %554 = sbr.rel (%p552) target = $region40
        $region39: #{tpu_custom_call.1} parent=11 // pred_region
          _
        $region40: #{tpu_custom_call.1} parent=11 // pred_fallthru
          _
        // Predicated region
        $region41: #{tpu_custom_call.1} parent=11 // pred_check
          %p555 = pneg %p229
        $region42: #{tpu_custom_call.1} parent=11 // pred_check_branch
          %557 = sbr.rel (%p555) target = $region44
        $region43: #{tpu_custom_call.1} parent=11 // pred_region
          _
        $region44: #{tpu_custom_call.1} parent=11 // pred_fallthru
          _
        // Predicated region
        $region45: #{tpu_custom_call.1} parent=11 // pred_check
          %p558 = pneg %p250
        $region46: #{tpu_custom_call.1} parent=11 // pred_check_branch
          %560 = sbr.rel (%p558) target = $region48
        $region47: #{tpu_custom_call.1} parent=11 // pred_region
          %s562 = ssub.s32 1024, 1024
          %563 = vsyncadd [#allocation10], %s562
          %s564 = sshll.u32 [#allocation9], 4
          %s565 = int_to_ptr.vmem [resolvable:$true] %s564
          %570 = dma.hbm_to_vmem [thread:$0]  %s9, 1024, %s565, [#allocation10], 64, 64, 4
        $region48: #{tpu_custom_call.1} parent=11 // pred_fallthru
          _
        // Predicated region
        $region49: #{tpu_custom_call.1} parent=11 // pred_check
          %p571 = pneg %p271
        $region50: #{tpu_custom_call.1} parent=11 // pred_check_branch
          %573 = sbr.rel (%p571) target = $region52
        $region51: #{tpu_custom_call.1} parent=11 // pred_region
          %s575 = ssub.s32 32, 32
          %576 = vsyncadd [#allocation10], %s575
          %s577 = sshll.u32 [#allocation11], 4
          %s578 = int_to_ptr.vmem [resolvable:$true] %s577
          %583 = dma.hbm_to_vmem [thread:$0]  %s10, 32, %s578, [#allocation10], 16, 16, 1
        $region52: #{tpu_custom_call.1} parent=11 // pred_fallthru
          _
        // Predicated region
        $region53: #{tpu_custom_call.1} parent=11 // pred_check
          %p584 = pneg %p292
        $region54: #{tpu_custom_call.1} parent=11 // pred_check_branch
          %586 = sbr.rel (%p584) target = $region56
        $region55: #{tpu_custom_call.1} parent=11 // pred_region
          %s588 = ssub.s32 32, 32
          %589 = vsyncadd [#allocation13], %s588
          %s590 = sshll.u32 [#allocation12], 4
          %s591 = int_to_ptr.vmem [resolvable:$true] %s590
          %596 = dma.hbm_to_vmem [thread:$0]  %s11, 32, %s591, [#allocation13], 16, 16, 1
        $region56: #{tpu_custom_call.1} parent=11 // pred_fallthru
          _
        // Predicated region
        $region57: #{tpu_custom_call.1} parent=11 // pred_check
          %p597 = pneg %p313
        $region58: #{tpu_custom_call.1} parent=11 // pred_check_branch
          %599 = sbr.rel (%p597) target = $region60
        $region59: #{tpu_custom_call.1} parent=11 // pred_region
          %s601 = ssub.s32 32, 32
          %602 = vsyncadd [#allocation13], %s601
          %s603 = sshll.u32 [#allocation14], 4
          %s604 = int_to_ptr.vmem [resolvable:$true] %s603
          %609 = dma.hbm_to_vmem [thread:$0]  %s12, 32, %s604, [#allocation13], 16, 16, 1
        $region60: #{tpu_custom_call.1} parent=11 // pred_fallthru
          _
        // Predicated region
        $region61: #{tpu_custom_call.1} parent=11 // pred_check
          %p610 = pneg %p334
        $region62: #{tpu_custom_call.1} parent=11 // pred_check_branch
          %612 = sbr.rel (%p610) target = $region64
        $region63: #{tpu_custom_call.1} parent=11 // pred_region
          %s614 = ssub.s32 1024, 1024
          %615 = vsyncadd [#allocation16], %s614
          %s616 = sshll.u32 [#allocation15], 4
          %s617 = int_to_ptr.vmem [resolvable:$true] %s616
          %622 = dma.hbm_to_vmem [thread:$0]  %s13, 1024, %s617, [#allocation16], 64, 64, 4
        $region64: #{tpu_custom_call.1} parent=11 // pred_fallthru
          _
        // Predicated region
        $region65: #{tpu_custom_call.1} parent=11 // pred_check
          %p623 = pneg %p355
        $region66: #{tpu_custom_call.1} parent=11 // pred_check_branch
          %625 = sbr.rel (%p623) target = $region68
        $region67: #{tpu_custom_call.1} parent=11 // pred_region
          %s627 = ssub.s32 32, 32
          %628 = vsyncadd [#allocation16], %s627
          %s629 = sshll.u32 [#allocation17], 4
          %s630 = int_to_ptr.vmem [resolvable:$true] %s629
          %635 = dma.hbm_to_vmem [thread:$0]  %s14, 32, %s630, [#allocation16], 16, 16, 1
        $region68: #{tpu_custom_call.1} parent=11 // pred_fallthru
          _
        // Predicated region
        $region69: #{tpu_custom_call.1} parent=11 // pred_check
          %p636 = pneg %p376
        $region70: #{tpu_custom_call.1} parent=11 // pred_check_branch
          %638 = sbr.rel (%p636) target = $region72
        $region71: #{tpu_custom_call.1} parent=11 // pred_region
          _
        $region72: #{tpu_custom_call.1} parent=11 // pred_fallthru
          _
        // Predicated region
        $region73: #{tpu_custom_call.1} parent=11 // pred_check
          %p639 = pneg %p397
        $region74: #{tpu_custom_call.1} parent=11 // pred_check_branch
          %641 = sbr.rel (%p639) target = $region76
        $region75: #{tpu_custom_call.1} parent=11 // pred_region
          _
        $region76: #{tpu_custom_call.1} parent=11 // pred_fallthru
          _
        // Predicated region
        $region77: #{tpu_custom_call.1} parent=11 // pred_check
          %p642 = pneg %p418
        $region78: #{tpu_custom_call.1} parent=11 // pred_check_branch
          %644 = sbr.rel (%p642) target = $region80
        $region79: #{tpu_custom_call.1} parent=11 // pred_region
          _
        $region80: #{tpu_custom_call.1} parent=11 // pred_fallthru
          _
        // Predicated region
        $region81: #{tpu_custom_call.1} parent=11 // pred_check
          %p645 = pneg %p439
        $region82: #{tpu_custom_call.1} parent=11 // pred_check_branch
          %647 = sbr.rel (%p645) target = $region84
        $region83: #{tpu_custom_call.1} parent=11 // pred_region
          _
        $region84: #{tpu_custom_call.1} parent=11 // pred_fallthru
          _
      $region12: #{tpu_custom_call.1} parent=5 // pred_fallthru
        _
      %p648 = scmp.lt.s32.totalorder %s35, 2
      // Predicated region
      $region85: #{tpu_custom_call.1} parent=5 // pred_check
        %p649 = pneg %p648
      $region86: #{tpu_custom_call.1} parent=5 // pred_check_branch
        %651 = sbr.rel (%p649) target = $region88
      $region87: #{tpu_custom_call.1} parent=5 // pred_region
        // Predicated region
        $region89: #{tpu_custom_call.1} parent=87 // pred_check
          %p652 = pneg %p55
        $region90: #{tpu_custom_call.1} parent=87 // pred_check_branch
          %654 = sbr.rel (%p652) target = $region92
        $region91: #{tpu_custom_call.1} parent=87 // pred_region
          %p655 = scmp.lt.s32.totalorder %s35, 1
          %s656 = scalar_select %p655, %s35, 1
          %s657 = smul.addr %s656, 3
          %s658 = smul.addr %s657, 4
          %s659 = scalar_lea.vmem %s0, %s658
        $region92: #{tpu_custom_call.1} parent=87 // pred_fallthru
          _
      $region88: #{tpu_custom_call.1} parent=5 // pred_fallthru
        _
      %p660 = scmp.le.s32.totalorder 1, %s35
      %p661 = scmp.lt.s32.totalorder %s35, 3
      %p662 = pnand %p660, %p661
      %p663 = pneg %p662
      // Predicated region
      $region93: #{tpu_custom_call.1} parent=5 // pred_check
        _
      $region94: #{tpu_custom_call.1} parent=5 // pred_check_branch
        %665 = sbr.rel (%p662) target = $region96
      $region95: #{tpu_custom_call.1} parent=5 // pred_region
        %s666 = ssub.s32 %s35, 1
        // Predicated region
        $region97: #{tpu_custom_call.1} parent=95 // pred_check
          %p667 = pneg %p103
        $region98: #{tpu_custom_call.1} parent=95 // pred_check_branch
          %669 = sbr.rel (%p667) target = $region100
        $region99: #{tpu_custom_call.1} parent=95 // pred_region
          %670 = dma.done [#allocation4], 384
        $region100: #{tpu_custom_call.1} parent=95 // pred_fallthru
          _
        // Predicated region
        $region101: #{tpu_custom_call.1} parent=95 // pred_check
          %p671 = pneg %p145
        $region102: #{tpu_custom_call.1} parent=95 // pred_check_branch
          %673 = sbr.rel (%p671) target = $region104
        $region103: #{tpu_custom_call.1} parent=95 // pred_region
          %674 = dma.done [#allocation7], 16
        $region104: #{tpu_custom_call.1} parent=95 // pred_fallthru
          _
        // Predicated region
        $region105: #{tpu_custom_call.1} parent=95 // pred_check
          %p675 = pneg %p187
        $region106: #{tpu_custom_call.1} parent=95 // pred_check_branch
          %677 = sbr.rel (%p675) target = $region108
        $region107: #{tpu_custom_call.1} parent=95 // pred_region
          %678 = dma.done [#allocation7], 32
        $region108: #{tpu_custom_call.1} parent=95 // pred_fallthru
          _
        // Predicated region
        $region109: #{tpu_custom_call.1} parent=95 // pred_check
          %p679 = pneg %p250
        $region110: #{tpu_custom_call.1} parent=95 // pred_check_branch
          %681 = sbr.rel (%p679) target = $region112
        $region111: #{tpu_custom_call.1} parent=95 // pred_region
          %682 = dma.done [#allocation10], 1024
        $region112: #{tpu_custom_call.1} parent=95 // pred_fallthru
          _
        // Predicated region
        $region113: #{tpu_custom_call.1} parent=95 // pred_check
          %p683 = pneg %p271
        $region114: #{tpu_custom_call.1} parent=95 // pred_check_branch
          %685 = sbr.rel (%p683) target = $region116
        $region115: #{tpu_custom_call.1} parent=95 // pred_region
          %686 = dma.done [#allocation10], 32
        $region116: #{tpu_custom_call.1} parent=95 // pred_fallthru
          _
        // Predicated region
        $region117: #{tpu_custom_call.1} parent=95 // pred_check
          %p687 = pneg %p292
        $region118: #{tpu_custom_call.1} parent=95 // pred_check_branch
          %689 = sbr.rel (%p687) target = $region120
        $region119: #{tpu_custom_call.1} parent=95 // pred_region
          %690 = dma.done [#allocation13], 32
        $region120: #{tpu_custom_call.1} parent=95 // pred_fallthru
          _
        // Predicated region
        $region121: #{tpu_custom_call.1} parent=95 // pred_check
          %p691 = pneg %p313
        $region122: #{tpu_custom_call.1} parent=95 // pred_check_branch
          %693 = sbr.rel (%p691) target = $region124
        $region123: #{tpu_custom_call.1} parent=95 // pred_region
          %694 = dma.done [#allocation13], 32
        $region124: #{tpu_custom_call.1} parent=95 // pred_fallthru
          _
        // Predicated region
        $region125: #{tpu_custom_call.1} parent=95 // pred_check
          %p695 = pneg %p334
        $region126: #{tpu_custom_call.1} parent=95 // pred_check_branch
          %697 = sbr.rel (%p695) target = $region128
        $region127: #{tpu_custom_call.1} parent=95 // pred_region
          %698 = dma.done [#allocation16], 1024
        $region128: #{tpu_custom_call.1} parent=95 // pred_fallthru
          _
        // Predicated region
        $region129: #{tpu_custom_call.1} parent=95 // pred_check
          %p699 = pneg %p355
        $region130: #{tpu_custom_call.1} parent=95 // pred_check_branch
          %701 = sbr.rel (%p699) target = $region132
        $region131: #{tpu_custom_call.1} parent=95 // pred_region
          %702 = dma.done [#allocation16], 32
        $region132: #{tpu_custom_call.1} parent=95 // pred_fallthru
          _
        %p703 = scmp.lt.s32.totalorder %s40, 1
        %s704 = scalar_select %p703, %s40, 1
        %s705 = smul.addr %s704, 3
        %s706 = smul.addr %s705, 4
        %s707 = scalar_lea.vmem %s0, %s706
        %p708 = pneg %p61
        %p709 = pneg %p58
        %p710 = pneg %p82
        %p711 = pneg %p79
        %p712 = pneg %p103
        %p713 = pneg %p100
        %p714 = pneg %p124
        %p715 = pneg %p121
        %p716 = pneg %p145
        %p717 = pneg %p142
        %p718 = pneg %p166
        %p719 = pneg %p163
        %p720 = pneg %p187
        %p721 = pneg %p184
        %p722 = pneg %p208
        %p723 = pneg %p205
        %p724 = pneg %p229
        %p725 = pneg %p226
        %p726 = pneg %p250
        %p727 = pneg %p247
        %p728 = pneg %p271
        %p729 = pneg %p268
        %p730 = pneg %p292
        %p731 = pneg %p289
        %p732 = pneg %p313
        %p733 = pneg %p310
        %p734 = pneg %p334
        %p735 = pneg %p331
        %p736 = pneg %p355
        %p737 = pneg %p352
        %p738 = pneg %p376
        %p739 = pneg %p373
        %p740 = pneg %p397
        %p741 = pneg %p394
        %p742 = pneg %p418
        %p743 = pneg %p415
        %p744 = pneg %p439
        %p745 = pneg %p436
        %p746 = pneg %p465
        %p747 = pneg %p462
        %p748 = scmp.lt.s32.totalorder %s40, 1
        %s749 = scalar_select %p748, %s40, 1
        %s750 = smul.addr %s749, 3
        %s751 = smul.addr %s750, 8
        %s752 = scalar_lea.vmem %s19, %s751
        %p753 = pneg %p491
        %p754 = pneg %p488
        %s755 = sand.u32 %s478, 1
        %s756 = scalar_lea.sflag [#allocation5], %s755
        %s757 = sand.u32 %s478, 1
        %s758 = scalar_lea.vmem [#allocation18], %s757
        %p759 = scmp.lt.s32.totalorder %s40, 1
        %s760 = scalar_select %p759, %s40, 1
        %s761 = smul.addr %s760, 3
        %s762 = smul.addr %s761, 4
        %s763 = scalar_lea.vmem %s0, %s762
        %p764 = scmp.lt.s32.totalorder %s40, 1
        %s765 = scalar_select %p764, %s40, 1
        %s766 = smul.addr %s765, 3
        %s767 = smul.addr %s766, 8
        %s768 = scalar_lea.vmem %s19, %s767
        %v770 = vld [vmem:[%s763] sm:$0xf]
        %v771 = vld [vmem:[%s763 + $0x4] sm:$0xf]
        %v772 = vld [vmem:[%s763 + $0x8] sm:$0x1]
        %v773 = vld [vmem:[%s1] sm:$0xf]
        %v774 = vld [vmem:[%s1 + $0x4] sm:$0xf]
        %v775 = vld [vmem:[%s1 + $0x8] sm:$0xf]
        %v776 = vld [vmem:[%s1 + $0xc] sm:$0xf]
        %v777 = vld [vmem:[%s1 + $0x10] sm:$0xf]
        %v778 = vld [vmem:[%s1 + $0x14] sm:$0xf]
        %v779 = vld [vmem:[#allocation3] sm:$0xff]
        %v780 = vld [vmem:[#allocation3 + $0x8] sm:$0xff]
        %v781 = vld [vmem:[#allocation3 + $0x10] sm:$0x1]
        %v785 = vunpack.c.l.b16 %v770
        %v786 = vunpack.c.l.b16 %v771
        %v787 = vunpack.c.l.b16 %v772
        %v788 = vpack.c.b16 %v786, %v785
        %v789 = vpack.c.b16 %v787, %v787
        %v796 = vunpack.c.l.b16 %v773
        %v797 = vunpack.c.l.b16 %v774
        %v798 = vunpack.c.l.b16 %v775
        %v799 = vunpack.c.l.b16 %v776
        %v800 = vunpack.c.l.b16 %v777
        %v801 = vunpack.c.l.b16 %v778
        %v802 = vpack.c.b16 %v797, %v796
        %v803 = vpack.c.b16 %v799, %v798
        %v804 = vpack.c.b16 %v801, %v800
        %vm808 = vcmask 392192
        %v810 = vsel %vm808, %v788, 0
        %v813 = vsel %vm808, %v789, 0
        %815 = vmatprep.subr.bf16.mxu0 0
        %816 = vmatpush1.bf16.msra.mxu0 %v802
        %817 = vmatprep.subr.bf16.mxu0 0
        %818 = vmatpush1.bf16.msra.mxu0 %v803
        %819 = vmatprep.subr.bf16.mxu0 0
        %820 = vmatpush1.bf16.msra.mxu0 %v804
        %821 = vmatprep.subr.bf16.mxu0 0
        %822 = vmatpush1.bf16.msra.mxu0 0
        %823 = vmatprep.subr.bf16.mxu0 0
        %824 = vmatpush1.bf16.msra.mxu0 0
        %825 = vmatprep.subr.bf16.mxu0 0
        %826 = vmatpush1.bf16.msra.mxu0 0
        %827 = vmatprep.subr.bf16.mxu0 0
        %828 = vmatpush1.bf16.msra.mxu0 0
        %829 = vmatprep.subr.bf16.mxu0 0
        %830 = vmatpush1.bf16.msra.mxu0 0
        %831 = vmatprep.subr.bf16.mxu0 0
        %832 = vmatpush1.bf16.msra.mxu0 0
        %833 = vmatprep.subr.bf16.mxu0 0
        %834 = vmatpush1.bf16.msra.mxu0 0
        %835 = vmatprep.subr.bf16.mxu0 0
        %836 = vmatpush1.bf16.msra.mxu0 0
        %837 = vmatprep.subr.bf16.mxu0 0
        %838 = vmatpush1.bf16.msra.mxu0 0
        %839 = vmatprep.subr.bf16.mxu0 0
        %840 = vmatpush1.bf16.msra.mxu0 0
        %841 = vmatprep.subr.bf16.mxu0 0
        %842 = vmatpush1.bf16.msra.mxu0 0
        %843 = vmatprep.subr.bf16.mxu0 0
        %844 = vmatpush1.bf16.msra.mxu0 0
        %845 = vmatprep.subr.bf16.mxu0 0
        %846 = vmatpush1.bf16.msra.mxu0 0
        %847 = vmatprep.mubr.bf16.mxu0 0
        %848 = vmatmul.mubr.bf16.gmra.mrb[0].mxu0 %v810
        %v849 = vpop.f32.mrb[0].mxu0
        %v850 = vadd.f32 %v779, %v849
        %v851 = vpop.f32.mrb[0].mxu0
        %v852 = vpop.f32.mrb[0].mxu0
        %v853 = vadd.f32 %v780, %v852
        %v854 = vpop.f32.mrb[0].mxu0
        %855 = vmatprep.mubr.bf16.mxu0 0
        %856 = vmatmul.mubr.bf16.gmra.mrb[0].mxu0 %v813
        %v857 = vpop.f32.mrb[0].mxu0
        %v858 = vadd.f32 %v781, %v857
        %v859 = vpop.f32.mrb[0].mxu0
        %v860 = vpop.f32.mrb[0].mxu0
        %v861 = vpop.f32.mrb[0].mxu0
        %862 = vdwg.mxu0
        %v863 = vld [vmem:[%s3] sm:$0x1]
        %v864 = vld [vmem:[#allocation6] sm:$0x1]
        %vm865 = vcmask 523264
        %v866 = vsel %vm865, %v850, 0.0
        %867 = vadd.xlane.f32.xlu0 %v866
        %v868 = vpop.xlane.xlu0 %867
        %v869 = vsel %vm865, %v853, 0.0
        %870 = vadd.xlane.f32.xlu0 %v869
        %v871 = vpop.xlane.xlu0 %870
        %vm872 = vcmask 516096
        %v873 = vsel %vm872, %v858, 0.0
        %874 = vadd.xlane.f32.xlu0 %v873
        %v875 = vpop.xlane.xlu0 %874
        %v876 = vrcp.pop 64.0
        %v877 = vmul.f32 %v868, %v876
        %v878 = vmul.f32 %v871, %v876
        %v879 = vmul.f32 %v875, %v876
        %v880 = vsub.f32 %v850, %v877
        %v881 = vsub.f32 %v853, %v878
        %v882 = vsub.f32 %v858, %v879
        %v883 = vmul.f32 %v880, %v880
        %v884 = vmul.f32 %v881, %v881
        %v885 = vmul.f32 %v882, %v882
        %v886 = vsel %vm865, %v883, 0.0
        %887 = vadd.xlane.f32.xlu0 %v886
        %v888 = vpop.xlane.xlu0 %887
        %v889 = vsel %vm865, %v884, 0.0
        %890 = vadd.xlane.f32.xlu0 %v889
        %v891 = vpop.xlane.xlu0 %890
        %v892 = vsel %vm872, %v885, 0.0
        %893 = vadd.xlane.f32.xlu0 %v892
        %v894 = vpop.xlane.xlu0 %893
        %v895 = vmul.f32 %v888, %v876
        %v896 = vmul.f32 %v891, %v876
        %v897 = vmul.f32 %v894, %v876
        %v898 = vadd.f32 %v895, 1e-05
        %v899 = vadd.f32 %v896, 1e-05
        %v900 = vadd.f32 %v897, 1e-05
        %v901 = vrsqrt.pop %v898
        %v902 = vrsqrt.pop %v899
        %v903 = vrsqrt.pop %v900
        %v904 = vmul.f32 %v880, %v901
        %v905 = vmul.f32 %v881, %v902
        %v906 = vmul.f32 %v882, %v903
        %v908 = vlaneseq
        %v909 = vshrl.u32 %v908, 7
        %v910 = vsub.s32 0, %v909
        %v911 = vrot.slane %v863, %v910
        %v913 = vmul.f32 %v904, %v911
        %v914 = vmul.f32 %v905, %v911
        %v915 = vmul.f32 %v906, %v911
        %v917 = vlaneseq
        %v918 = vshrl.u32 %v917, 7
        %v919 = vsub.s32 0, %v918
        %v920 = vrot.slane %v864, %v919
        %v922 = vadd.f32 %v913, %v920
        %v923 = vadd.f32 %v914, %v920
        %v924 = vadd.f32 %v915, %v920
        %v925 = vld [vmem:[%s5] sm:$0x1]
        %v926 = vld [vmem:[#allocation8] sm:$0x1]
        %v927 = vsel %vm865, %v922, 0.0
        %928 = vadd.xlane.f32.xlu0 %v927
        %v929 = vpop.xlane.xlu0 %928
        %v930 = vsel %vm865, %v923, 0.0
        %931 = vadd.xlane.f32.xlu0 %v930
        %v932 = vpop.xlane.xlu0 %931
        %v933 = vsel %vm872, %v924, 0.0
        %934 = vadd.xlane.f32.xlu0 %v933
        %v935 = vpop.xlane.xlu0 %934
        %v936 = vmul.f32 %v929, %v876
        %v937 = vmul.f32 %v932, %v876
        %v938 = vmul.f32 %v935, %v876
        %v939 = vsub.f32 %v922, %v936
        %v940 = vsub.f32 %v923, %v937
        %v941 = vsub.f32 %v924, %v938
        %v942 = vmul.f32 %v939, %v939
        %v943 = vmul.f32 %v940, %v940
        %v944 = vmul.f32 %v941, %v941
        %v945 = vsel %vm865, %v942, 0.0
        %946 = vadd.xlane.f32.xlu0 %v945
        %v947 = vpop.xlane.xlu0 %946
        %v948 = vsel %vm865, %v943, 0.0
        %949 = vadd.xlane.f32.xlu0 %v948
        %v950 = vpop.xlane.xlu0 %949
        %v951 = vsel %vm872, %v944, 0.0
        %952 = vadd.xlane.f32.xlu0 %v951
        %v953 = vpop.xlane.xlu0 %952
        %v954 = vmul.f32 %v947, %v876
        %v955 = vmul.f32 %v950, %v876
        %v956 = vmul.f32 %v953, %v876
        %v957 = vadd.f32 %v954, 1e-05
        %v958 = vadd.f32 %v955, 1e-05
        %v959 = vadd.f32 %v956, 1e-05
        %v960 = vrsqrt.pop %v957
        %v961 = vrsqrt.pop %v958
        %v962 = vrsqrt.pop %v959
        %v963 = vmul.f32 %v939, %v960
        %v964 = vmul.f32 %v940, %v961
        %v965 = vmul.f32 %v941, %v962
        %v967 = vlaneseq
        %v968 = vshrl.u32 %v967, 7
        %v969 = vsub.s32 0, %v968
        %v970 = vrot.slane %v925, %v969
        %v972 = vmul.f32 %v963, %v970
        %v973 = vmul.f32 %v964, %v970
        %v974 = vmul.f32 %v965, %v970
        %v976 = vlaneseq
        %v977 = vshrl.u32 %v976, 7
        %v978 = vsub.s32 0, %v977
        %v979 = vrot.slane %v926, %v978
        %v981 = vadd.f32 %v972, %v979
        %v982 = vadd.f32 %v973, %v979
        %v983 = vadd.f32 %v974, %v979
        %v984 = vpack.c.bf16 %v982, %v981
        %v985 = vpack.c.bf16 %v983, %v983
        %v986 = vld [vmem:[%s7] sm:$0xff]
        %v987 = vld [vmem:[%s7 + $0x8] sm:$0xf]
        %v988 = vld [vmem:[%s7 + $0xc] sm:$0xff]
        %v989 = vld [vmem:[%s7 + $0x14] sm:$0xf]
        %v990 = vld [vmem:[%s7 + $0x18] sm:$0xff]
        %v991 = vld [vmem:[%s7 + $0x20] sm:$0xf]
        %v992 = vld [vmem:[%s7 + $0x24] sm:$0xff]
        %v993 = vld [vmem:[%s7 + $0x2c] sm:$0xf]
        %v994 = vld [vmem:[%s7 + $0x30] sm:$0xff]
        %v995 = vld [vmem:[%s7 + $0x38] sm:$0xf]
        %v996 = vld [vmem:[%s7 + $0x3c] sm:$0xff]
        %v997 = vld [vmem:[%s7 + $0x44] sm:$0xf]
        %v998 = vld [vmem:[%s7 + $0x48] sm:$0xff]
        %v999 = vld [vmem:[%s7 + $0x50] sm:$0xf]
        %v1000 = vld [vmem:[%s7 + $0x54] sm:$0xff]
        %v1001 = vld [vmem:[%s7 + $0x5c] sm:$0xf]
        %v1002 = vld [vmem:[%s8] sm:$0x7]
        %v1004 = vlaneseq
        %v1005 = vshrl.u32 %v1004, 7
        %v1006 = vsub.s32 0, %v1005
        %v1007 = vrot.slane %v1002, %v1006
        %v1008 = vlaneseq
        %v1009 = vshrl.u32 %v1008, 7
        %v1010 = vsub.s32 1, %v1009
        %v1011 = vrot.slane %v1002, %v1010
        %v1012 = vlaneseq
        %v1013 = vshrl.u32 %v1012, 7
        %v1014 = vsub.s32 2, %v1013
        %v1015 = vrot.slane %v1002, %v1014
        %v1035 = vunpack.c.l.b16 %v986
        %v1036 = vunpack.c.h.b16 %v986
        %v1037 = vunpack.c.l.b16 %v987
        %v1038 = vunpack.c.l.b16 %v988
        %v1039 = vunpack.c.h.b16 %v988
        %v1040 = vunpack.c.l.b16 %v989
        %v1041 = vunpack.c.l.b16 %v990
        %v1042 = vunpack.c.h.b16 %v990
        %v1043 = vunpack.c.l.b16 %v991
        %v1044 = vunpack.c.l.b16 %v992
        %v1045 = vunpack.c.h.b16 %v992
        %v1046 = vunpack.c.l.b16 %v993
        %v1047 = vunpack.c.l.b16 %v994
        %v1048 = vunpack.c.h.b16 %v994
        %v1049 = vunpack.c.l.b16 %v995
        %v1050 = vunpack.c.l.b16 %v996
        %v1051 = vunpack.c.h.b16 %v996
        %v1052 = vunpack.c.l.b16 %v997
        %v1053 = vunpack.c.l.b16 %v998
        %v1054 = vunpack.c.h.b16 %v998
        %v1055 = vunpack.c.l.b16 %v999
        %v1056 = vunpack.c.l.b16 %v1000
        %v1057 = vunpack.c.h.b16 %v1000
        %v1058 = vunpack.c.l.b16 %v1001
        %v1059 = vpack.c.b16 %v1038, %v1035
        %v1060 = vpack.c.b16 %v1039, %v1036
        %v1061 = vpack.c.b16 %v1040, %v1037
        %v1062 = vpack.c.b16 %v1044, %v1041
        %v1063 = vpack.c.b16 %v1045, %v1042
        %v1064 = vpack.c.b16 %v1046, %v1043
        %v1065 = vpack.c.b16 %v1050, %v1047
        %v1066 = vpack.c.b16 %v1051, %v1048
        %v1067 = vpack.c.b16 %v1052, %v1049
        %v1068 = vpack.c.b16 %v1056, %v1053
        %v1069 = vpack.c.b16 %v1057, %v1054
        %v1070 = vpack.c.b16 %v1058, %v1055
        %v1084 = vsel %vm865, %v984, 0
        %v1087 = vsel %vm865, %v985, 0
        %1089 = vmatprep.subr.bf16.mxu0 %v1060
        %1090 = vmatpush1.bf16.msra.mxu0 %v1059
        %1091 = vmatprep.subr.bf16.mxu0 %v1063
        %1092 = vmatpush1.bf16.msra.mxu0 %v1062
        %1093 = vmatprep.subr.bf16.mxu0 %v1066
        %1094 = vmatpush1.bf16.msra.mxu0 %v1065
        %1095 = vmatprep.subr.bf16.mxu0 %v1069
        %1096 = vmatpush1.bf16.msra.mxu0 %v1068
        %1097 = vmatprep.subr.bf16.mxu0 0
        %1098 = vmatpush1.bf16.msra.mxu0 0
        %1099 = vmatprep.subr.bf16.mxu0 0
        %1100 = vmatpush1.bf16.msra.mxu0 0
        %1101 = vmatprep.subr.bf16.mxu0 0
        %1102 = vmatpush1.bf16.msra.mxu0 0
        %1103 = vmatprep.subr.bf16.mxu0 0
        %1104 = vmatpush1.bf16.msra.mxu0 0
        %1105 = vmatprep.subr.bf16.mxu0 0
        %1106 = vmatpush1.bf16.msra.mxu0 0
        %1107 = vmatprep.subr.bf16.mxu0 0
        %1108 = vmatpush1.bf16.msra.mxu0 0
        %1109 = vmatprep.subr.bf16.mxu0 0
        %1110 = vmatpush1.bf16.msra.mxu0 0
        %1111 = vmatprep.subr.bf16.mxu0 0
        %1112 = vmatpush1.bf16.msra.mxu0 0
        %1113 = vmatprep.subr.bf16.mxu0 0
        %1114 = vmatpush1.bf16.msra.mxu0 0
        %1115 = vmatprep.subr.bf16.mxu0 0
        %1116 = vmatpush1.bf16.msra.mxu0 0
        %1117 = vmatprep.subr.bf16.mxu0 0
        %1118 = vmatpush1.bf16.msra.mxu0 0
        %1119 = vmatprep.subr.bf16.mxu0 0
        %1120 = vmatpush1.bf16.msra.mxu0 0
        %1121 = vmatprep.mubr.bf16.mxu0 0
        %1122 = vmatmul.mubr.bf16.gmra.mrb[0].mxu0 %v1084
        %v1123 = vpop.f32.mrb[0].mxu0
        %v1124 = vadd.f32 %v1007, %v1123
        %v1125 = vpop.f32.mrb[0].mxu0
        %v1126 = vadd.f32 %v1011, %v1125
        %v1127 = vpop.f32.mrb[0].mxu0
        %v1128 = vadd.f32 %v1007, %v1127
        %v1129 = vpop.f32.mrb[0].mxu0
        %v1130 = vadd.f32 %v1011, %v1129
        %1131 = vmatprep.mubr.bf16.mxu0 0
        %1132 = vmatmul.mubr.bf16.gmra.mrb[0].mxu0 %v1087
        %v1133 = vpop.f32.mrb[0].mxu0
        %v1134 = vadd.f32 %v1007, %v1133
        %v1135 = vpop.f32.mrb[0].mxu0
        %v1136 = vadd.f32 %v1011, %v1135
        %v1137 = vpop.f32.mrb[0].mxu0
        %v1138 = vpop.f32.mrb[0].mxu0
        %1139 = vdwg.mxu0
        %1140 = vmatprep.subr.bf16.mxu0 0
        %1141 = vmatpush1.bf16.msra.mxu0 %v1061
        %1142 = vmatprep.subr.bf16.mxu0 0
        %1143 = vmatpush1.bf16.msra.mxu0 %v1064
        %1144 = vmatprep.subr.bf16.mxu0 0
        %1145 = vmatpush1.bf16.msra.mxu0 %v1067
        %1146 = vmatprep.subr.bf16.mxu0 0
        %1147 = vmatpush1.bf16.msra.mxu0 %v1070
        %1148 = vmatprep.subr.bf16.mxu0 0
        %1149 = vmatpush1.bf16.msra.mxu0 0
        %1150 = vmatprep.subr.bf16.mxu0 0
        %1151 = vmatpush1.bf16.msra.mxu0 0
        %1152 = vmatprep.subr.bf16.mxu0 0
        %1153 = vmatpush1.bf16.msra.mxu0 0
        %1154 = vmatprep.subr.bf16.mxu0 0
        %1155 = vmatpush1.bf16.msra.mxu0 0
        %1156 = vmatprep.subr.bf16.mxu0 0
        %1157 = vmatpush1.bf16.msra.mxu0 0
        %1158 = vmatprep.subr.bf16.mxu0 0
        %1159 = vmatpush1.bf16.msra.mxu0 0
        %1160 = vmatprep.subr.bf16.mxu0 0
        %1161 = vmatpush1.bf16.msra.mxu0 0
        %1162 = vmatprep.subr.bf16.mxu0 0
        %1163 = vmatpush1.bf16.msra.mxu0 0
        %1164 = vmatprep.subr.bf16.mxu0 0
        %1165 = vmatpush1.bf16.msra.mxu0 0
        %1166 = vmatprep.subr.bf16.mxu0 0
        %1167 = vmatpush1.bf16.msra.mxu0 0
        %1168 = vmatprep.subr.bf16.mxu0 0
        %1169 = vmatpush1.bf16.msra.mxu0 0
        %1170 = vmatprep.subr.bf16.mxu0 0
        %1171 = vmatpush1.bf16.msra.mxu0 0
        %1172 = vmatprep.mubr.bf16.mxu0 0
        %1173 = vmatmul.mubr.bf16.gmra.mrb[0].mxu0 %v1084
        %v1174 = vpop.f32.mrb[0].mxu0
        %v1175 = vadd.f32 %v1015, %v1174
        %v1176 = vpop.f32.mrb[0].mxu0
        %v1177 = vpop.f32.mrb[0].mxu0
        %v1178 = vadd.f32 %v1015, %v1177
        %v1179 = vpop.f32.mrb[0].mxu0
        %1180 = vmatprep.mubr.bf16.mxu0 0
        %1181 = vmatmul.mubr.bf16.gmra.mrb[0].mxu0 %v1087
        %v1182 = vpop.f32.mrb[0].mxu0
        %v1183 = vadd.f32 %v1015, %v1182
        %v1184 = vpop.f32.mrb[0].mxu0
        %v1185 = vpop.f32.mrb[0].mxu0
        %v1186 = vpop.f32.mrb[0].mxu0
        %1187 = vdwg.mxu0
        %v1188 = vmul.f32 %v1124, 0.25
        %v1189 = vmul.f32 %v1128, 0.25
        %v1190 = vmul.f32 %v1134, 0.25
        %vm1191 = vcmask 130048
        %v1193 = vsel %vm1191, %v1188, 0
        %v1196 = vsel %vm1191, %v1189, 0
        %v1199 = vsel %vm1191, %v1190, 0
        %v1202 = vsel %vm1191, %v1126, 0
        %v1205 = vsel %vm1191, %v1130, 0
        %v1208 = vsel %vm1191, %v1136, 0
        %1210 = vmatprep.subr.mxu0 0.0
        %1211 = vmatpush1.xpose.msra.mxu0 %v1202
        %1212 = vmatprep.subr.mxu0 0.0
        %1213 = vmatpush1.xpose.msra.mxu0 %v1205
        %1214 = vmatprep.subr.mxu0 0.0
        %1215 = vmatpush1.xpose.msra.mxu0 %v1208
        %1216 = vmatprep.subr.mxu0 0.0
        %1217 = vmatpush1.xpose.msra.mxu0 0.0
        %1218 = vmatprep.subr.mxu0 0.0
        %1219 = vmatpush1.xpose.msra.mxu0 0.0
        %1220 = vmatprep.subr.mxu0 0.0
        %1221 = vmatpush1.xpose.msra.mxu0 0.0
        %1222 = vmatprep.subr.mxu0 0.0
        %1223 = vmatpush1.xpose.msra.mxu0 0.0
        %1224 = vmatprep.subr.mxu0 0.0
        %1225 = vmatpush1.xpose.msra.mxu0 0.0
        %1226 = vmatprep.subr.mxu0 0.0
        %1227 = vmatpush1.xpose.msra.mxu0 0.0
        %1228 = vmatprep.subr.mxu0 0.0
        %1229 = vmatpush1.xpose.msra.mxu0 0.0
        %1230 = vmatprep.subr.mxu0 0.0
        %1231 = vmatpush1.xpose.msra.mxu0 0.0
        %1232 = vmatprep.subr.mxu0 0.0
        %1233 = vmatpush1.xpose.msra.mxu0 0.0
        %1234 = vmatprep.subr.mxu0 0.0
        %1235 = vmatpush1.xpose.msra.mxu0 0.0
        %1236 = vmatprep.subr.mxu0 0.0
        %1237 = vmatpush1.xpose.msra.mxu0 0.0
        %1238 = vmatprep.subr.mxu0 0.0
        %1239 = vmatpush1.xpose.msra.mxu0 0.0
        %1240 = vmatprep.subr.mxu0 0.0
        %1241 = vmatpush1.xpose.msra.mxu0 0.0
        %1242 = vmatprep.subr.mxu0 0.0
        %1243 = vmatpush1.xpose.msra.mxu0 0.0
        %1244 = vmatprep.subr.mxu0 0.0
        %1245 = vmatpush1.xpose.msra.mxu0 0.0
        %1246 = vmatprep.subr.mxu0 0.0
        %1247 = vmatpush1.xpose.msra.mxu0 0.0
        %1248 = vmatprep.subr.mxu0 0.0
        %1249 = vmatpush1.xpose.msra.mxu0 0.0
        %1250 = vmatprep.subr.mxu0 0.0
        %1251 = vmatpush1.xpose.msra.mxu0 0.0
        %1252 = vmatprep.subr.mxu0 0.0
        %1253 = vmatpush1.xpose.msra.mxu0 0.0
        %1254 = vmatprep.subr.mxu0 0.0
        %1255 = vmatpush1.xpose.msra.mxu0 0.0
        %1256 = vmatprep.subr.mxu0 0.0
        %1257 = vmatpush1.xpose.msra.mxu0 0.0
        %1258 = vmatprep.subr.mxu0 0.0
        %1259 = vmatpush1.xpose.msra.mxu0 0.0
        %1260 = vmatprep.subr.mxu0 0.0
        %1261 = vmatpush1.xpose.msra.mxu0 0.0
        %1262 = vmatprep.subr.mxu0 0.0
        %1263 = vmatpush1.xpose.msra.mxu0 0.0
        %1264 = vmatprep.subr.mxu0 0.0
        %1265 = vmatpush1.xpose.msra.mxu0 0.0
        %1266 = vmatprep.subr.mxu0 0.0
        %1267 = vmatpush1.xpose.msra.mxu0 0.0
        %1268 = vmatprep.subr.mxu0 0.0
        %1269 = vmatpush1.xpose.msra.mxu0 0.0
        %1270 = vmatprep.subr.mxu0 0.0
        %1271 = vmatpush1.xpose.msra.mxu0 0.0
        %1272 = vmatprep.subr.mxu0 0.0
        %1273 = vmatpush1.xpose.msra.mxu0 0.0
        %1274 = vmatprep.mubr.f32.mxu0 0.0
        %1275 = vmatmul.mubr.f32.gmra.mrb[0].mxu0 %v1193
        %v1276 = vpop.f32.mrb[0].mxu0
        %v1277 = vadd.f32 0.0, %v1276
        %v1278 = vpop.f32.mrb[0].mxu0
        %1279 = vmatprep.mubr.f32.mxu0 0.0
        %1280 = vmatmul.mubr.f32.gmra.mrb[0].mxu0 %v1196
        %v1281 = vpop.f32.mrb[0].mxu0
        %v1282 = vadd.f32 0.0, %v1281
        %v1283 = vpop.f32.mrb[0].mxu0
        %1284 = vmatprep.mubr.f32.mxu0 0.0
        %1285 = vmatmul.mubr.f32.gmra.mrb[0].mxu0 %v1199
        %v1286 = vpop.f32.mrb[0].mxu0
        %v1287 = vadd.f32 0.0, %v1286
        %v1288 = vpop.f32.mrb[0].mxu0
        %1289 = vdwg.mxu0
        %vm1290 = vcmask 138240
        %v1291 = vsel %vm1290, %v1277, -inf
        %1292 = vmax.xlane.f32.xlu0 %v1291
        %v1293 = vpop.xlane.xlu0 %1292
        %v1294 = vsel %vm1290, %v1282, -inf
        %1295 = vmax.xlane.f32.xlu0 %v1294
        %v1296 = vpop.xlane.xlu0 %1295
        %vm1297 = vcmask 131072
        %v1298 = vsel %vm1297, %v1287, -inf
        %1299 = vmax.xlane.f32.xlu0 %v1298
        %v1300 = vpop.xlane.xlu0 %1299
        %v1301 = vsub.f32 %v1277, %v1293
        %v1302 = vsub.f32 %v1282, %v1296
        %v1303 = vsub.f32 %v1287, %v1300
        %v1304 = vmul.f32 %v1301, 1.442695
        %v1305 = vpow.pop %v1304
        %v1306 = vmul.f32 %v1302, 1.442695
        %v1307 = vpow.pop %v1306
        %v1308 = vmul.f32 %v1303, 1.442695
        %v1309 = vpow.pop %v1308
        %v1310 = vsel %vm1290, %v1305, 0.0
        %1311 = vadd.xlane.f32.xlu0 %v1310
        %v1312 = vpop.xlane.xlu0 %1311
        %v1313 = vsel %vm1290, %v1307, 0.0
        %1314 = vadd.xlane.f32.xlu0 %v1313
        %v1315 = vpop.xlane.xlu0 %1314
        %v1316 = vsel %vm1297, %v1309, 0.0
        %1317 = vadd.xlane.f32.xlu0 %v1316
        %v1318 = vpop.xlane.xlu0 %1317
        %v1319 = vrcp.pop %v1312
        %v1320 = vrcp.pop %v1315
        %v1321 = vrcp.pop %v1318
        %v1322 = vmul.f32 %v1305, %v1319
        %v1323 = vmul.f32 %v1307, %v1320
        %v1324 = vmul.f32 %v1309, %v1321
        %v1326 = vsel %vm1290, %v1322, 0
        %v1329 = vsel %vm1290, %v1323, 0
        %v1332 = vsel %vm1290, %v1324, 0
        %vm1334 = vcmask 1040384
        %v1336 = vsel %vm1334, %v1183, 0
        %1338 = vmatprep.subr.mxu0 0.0
        %1339 = vmatpush1.msra.mxu0 %v1175
        %1340 = vmatprep.subr.mxu0 0.0
        %1341 = vmatpush1.msra.mxu0 %v1178
        %1342 = vmatprep.subr.mxu0 0.0
        %1343 = vmatpush1.msra.mxu0 %v1336
        %1344 = vmatprep.subr.mxu0 0.0
        %1345 = vmatpush1.msra.mxu0 0.0
        %1346 = vmatprep.subr.mxu0 0.0
        %1347 = vmatpush1.msra.mxu0 0.0
        %1348 = vmatprep.subr.mxu0 0.0
        %1349 = vmatpush1.msra.mxu0 0.0
        %1350 = vmatprep.subr.mxu0 0.0
        %1351 = vmatpush1.msra.mxu0 0.0
        %1352 = vmatprep.subr.mxu0 0.0
        %1353 = vmatpush1.msra.mxu0 0.0
        %1354 = vmatprep.subr.mxu0 0.0
        %1355 = vmatpush1.msra.mxu0 0.0
        %1356 = vmatprep.subr.mxu0 0.0
        %1357 = vmatpush1.msra.mxu0 0.0
        %1358 = vmatprep.subr.mxu0 0.0
        %1359 = vmatpush1.msra.mxu0 0.0
        %1360 = vmatprep.subr.mxu0 0.0
        %1361 = vmatpush1.msra.mxu0 0.0
        %1362 = vmatprep.subr.mxu0 0.0
        %1363 = vmatpush1.msra.mxu0 0.0
        %1364 = vmatprep.subr.mxu0 0.0
        %1365 = vmatpush1.msra.mxu0 0.0
        %1366 = vmatprep.subr.mxu0 0.0
        %1367 = vmatpush1.msra.mxu0 0.0
        %1368 = vmatprep.subr.mxu0 0.0
        %1369 = vmatpush1.msra.mxu0 0.0
        %1370 = vmatprep.subr.mxu0 0.0
        %1371 = vmatpush1.msra.mxu0 0.0
        %1372 = vmatprep.subr.mxu0 0.0
        %1373 = vmatpush1.msra.mxu0 0.0
        %1374 = vmatprep.subr.mxu0 0.0
        %1375 = vmatpush1.msra.mxu0 0.0
        %1376 = vmatprep.subr.mxu0 0.0
        %1377 = vmatpush1.msra.mxu0 0.0
        %1378 = vmatprep.subr.mxu0 0.0
        %1379 = vmatpush1.msra.mxu0 0.0
        %1380 = vmatprep.subr.mxu0 0.0
        %1381 = vmatpush1.msra.mxu0 0.0
        %1382 = vmatprep.subr.mxu0 0.0
        %1383 = vmatpush1.msra.mxu0 0.0
        %1384 = vmatprep.subr.mxu0 0.0
        %1385 = vmatpush1.msra.mxu0 0.0
        %1386 = vmatprep.subr.mxu0 0.0
        %1387 = vmatpush1.msra.mxu0 0.0
        %1388 = vmatprep.subr.mxu0 0.0
        %1389 = vmatpush1.msra.mxu0 0.0
        %1390 = vmatprep.subr.mxu0 0.0
        %1391 = vmatpush1.msra.mxu0 0.0
        %1392 = vmatprep.subr.mxu0 0.0
        %1393 = vmatpush1.msra.mxu0 0.0
        %1394 = vmatprep.subr.mxu0 0.0
        %1395 = vmatpush1.msra.mxu0 0.0
        %1396 = vmatprep.subr.mxu0 0.0
        %1397 = vmatpush1.msra.mxu0 0.0
        %1398 = vmatprep.subr.mxu0 0.0
        %1399 = vmatpush1.msra.mxu0 0.0
        %1400 = vmatprep.subr.mxu0 0.0
        %1401 = vmatpush1.msra.mxu0 0.0
        %1402 = vmatprep.mubr.f32.mxu0 0.0
        %1403 = vmatmul.mubr.f32.gmra.mrb[0].mxu0 %v1326
        %v1404 = vpop.f32.mrb[0].mxu0
        %v1405 = vadd.f32 0.0, %v1404
        %v1406 = vpop.f32.mrb[0].mxu0
        %1407 = vmatprep.mubr.f32.mxu0 0.0
        %1408 = vmatmul.mubr.f32.gmra.mrb[0].mxu0 %v1329
        %v1409 = vpop.f32.mrb[0].mxu0
        %v1410 = vadd.f32 0.0, %v1409
        %v1411 = vpop.f32.mrb[0].mxu0
        %1412 = vmatprep.mubr.f32.mxu0 0.0
        %1413 = vmatmul.mubr.f32.gmra.mrb[0].mxu0 %v1332
        %v1414 = vpop.f32.mrb[0].mxu0
        %v1415 = vadd.f32 0.0, %v1414
        %v1416 = vpop.f32.mrb[0].mxu0
        %1417 = vdwg.mxu0
        %v1418 = vpack.c.bf16 %v1410, %v1405
        %v1419 = vpack.c.bf16 %v1415, %v1415
        %v1422 = vunpack.c.l.b16 %v1418
        %v1423 = vunpack.c.h.b16 %v1418
        %v1424 = vunpack.c.l.b16 %v1419
        %v1425 = vpack.c.b16 %v1422, %v1422
        %v1426 = vpack.c.b16 %v1423, %v1423
        %v1427 = vpack.c.b16 %v1424, %v1424
        %vm1431 = vcmask 125952
        %1432 = vst.msk [vmem:[#allocation2] sm:$0xf] %vm1431, %v1425
        %1433 = vst.msk [vmem:[#allocation2 + $0x4] sm:$0xf] %vm1431, %v1426
        %vm1434 = vcmask 122880
        %vm1435 = vsmask.f32 256
        %vm1436 = vmand %vm1434, %vm1435
        %v1437 = vld [vmem:[#allocation2 + $0x8] sm:$0x1]
        %v1438 = vsel %vm1436, %v1427, %v1437
        %1439 = vst [vmem:[#allocation2 + $0x8] sm:$0x1] %v1438
        %1440 = vrot.lane.b32.xlu0 %v1188, 112
        %v1441 = vpop.permute.xlu0 %1440
        %1442 = vrot.lane.b32.xlu0 %v1189, 112
        %v1443 = vpop.permute.xlu0 %1442
        %1444 = vrot.lane.b32.xlu0 %v1190, 112
        %v1445 = vpop.permute.xlu0 %1444
        %1446 = vrot.lane.b32.xlu0 %v1126, 112
        %v1447 = vpop.permute.xlu0 %1446
        %1448 = vrot.lane.b32.xlu0 %v1130, 112
        %v1449 = vpop.permute.xlu0 %1448
        %1450 = vrot.lane.b32.xlu0 %v1136, 112
        %v1451 = vpop.permute.xlu0 %1450
        %v1452 = vsel %vm1191, %v1441, 0
        %v1454 = vsel %vm1191, %v1443, 0
        %v1456 = vsel %vm1191, %v1445, 0
        %v1458 = vsel %vm1191, %v1447, 0
        %v1460 = vsel %vm1191, %v1449, 0
        %v1462 = vsel %vm1191, %v1451, 0
        %1464 = vmatprep.subr.mxu0 0.0
        %1465 = vmatpush1.xpose.msra.mxu0 %v1458
        %1466 = vmatprep.subr.mxu0 0.0
        %1467 = vmatpush1.xpose.msra.mxu0 %v1460
        %1468 = vmatprep.subr.mxu0 0.0
        %1469 = vmatpush1.xpose.msra.mxu0 %v1462
        %1470 = vmatprep.subr.mxu0 0.0
        %1471 = vmatpush1.xpose.msra.mxu0 0.0
        %1472 = vmatprep.subr.mxu0 0.0
        %1473 = vmatpush1.xpose.msra.mxu0 0.0
        %1474 = vmatprep.subr.mxu0 0.0
        %1475 = vmatpush1.xpose.msra.mxu0 0.0
        %1476 = vmatprep.subr.mxu0 0.0
        %1477 = vmatpush1.xpose.msra.mxu0 0.0
        %1478 = vmatprep.subr.mxu0 0.0
        %1479 = vmatpush1.xpose.msra.mxu0 0.0
        %1480 = vmatprep.subr.mxu0 0.0
        %1481 = vmatpush1.xpose.msra.mxu0 0.0
        %1482 = vmatprep.subr.mxu0 0.0
        %1483 = vmatpush1.xpose.msra.mxu0 0.0
        %1484 = vmatprep.subr.mxu0 0.0
        %1485 = vmatpush1.xpose.msra.mxu0 0.0
        %1486 = vmatprep.subr.mxu0 0.0
        %1487 = vmatpush1.xpose.msra.mxu0 0.0
        %1488 = vmatprep.subr.mxu0 0.0
        %1489 = vmatpush1.xpose.msra.mxu0 0.0
        %1490 = vmatprep.subr.mxu0 0.0
        %1491 = vmatpush1.xpose.msra.mxu0 0.0
        %1492 = vmatprep.subr.mxu0 0.0
        %1493 = vmatpush1.xpose.msra.mxu0 0.0
        %1494 = vmatprep.subr.mxu0 0.0
        %1495 = vmatpush1.xpose.msra.mxu0 0.0
        %1496 = vmatprep.subr.mxu0 0.0
        %1497 = vmatpush1.xpose.msra.mxu0 0.0
        %1498 = vmatprep.subr.mxu0 0.0
        %1499 = vmatpush1.xpose.msra.mxu0 0.0
        %1500 = vmatprep.subr.mxu0 0.0
        %1501 = vmatpush1.xpose.msra.mxu0 0.0
        %1502 = vmatprep.subr.mxu0 0.0
        %1503 = vmatpush1.xpose.msra.mxu0 0.0
        %1504 = vmatprep.subr.mxu0 0.0
        %1505 = vmatpush1.xpose.msra.mxu0 0.0
        %1506 = vmatprep.subr.mxu0 0.0
        %1507 = vmatpush1.xpose.msra.mxu0 0.0
        %1508 = vmatprep.subr.mxu0 0.0
        %1509 = vmatpush1.xpose.msra.mxu0 0.0
        %1510 = vmatprep.subr.mxu0 0.0
        %1511 = vmatpush1.xpose.msra.mxu0 0.0
        %1512 = vmatprep.subr.mxu0 0.0
        %1513 = vmatpush1.xpose.msra.mxu0 0.0
        %1514 = vmatprep.subr.mxu0 0.0
        %1515 = vmatpush1.xpose.msra.mxu0 0.0
        %1516 = vmatprep.subr.mxu0 0.0
        %1517 = vmatpush1.xpose.msra.mxu0 0.0
        %1518 = vmatprep.subr.mxu0 0.0
        %1519 = vmatpush1.xpose.msra.mxu0 0.0
        %1520 = vmatprep.subr.mxu0 0.0
        %1521 = vmatpush1.xpose.msra.mxu0 0.0
        %1522 = vmatprep.subr.mxu0 0.0
        %1523 = vmatpush1.xpose.msra.mxu0 0.0
        %1524 = vmatprep.subr.mxu0 0.0
        %1525 = vmatpush1.xpose.msra.mxu0 0.0
        %1526 = vmatprep.subr.mxu0 0.0
        %1527 = vmatpush1.xpose.msra.mxu0 0.0
        %1528 = vmatprep.mubr.f32.mxu0 0.0
        %1529 = vmatmul.mubr.f32.gmra.mrb[0].mxu0 %v1452
        %v1530 = vpop.f32.mrb[0].mxu0
        %v1531 = vadd.f32 0.0, %v1530
        %v1532 = vpop.f32.mrb[0].mxu0
        %1533 = vmatprep.mubr.f32.mxu0 0.0
        %1534 = vmatmul.mubr.f32.gmra.mrb[0].mxu0 %v1454
        %v1535 = vpop.f32.mrb[0].mxu0
        %v1536 = vadd.f32 0.0, %v1535
        %v1537 = vpop.f32.mrb[0].mxu0
        %1538 = vmatprep.mubr.f32.mxu0 0.0
        %1539 = vmatmul.mubr.f32.gmra.mrb[0].mxu0 %v1456
        %v1540 = vpop.f32.mrb[0].mxu0
        %v1541 = vadd.f32 0.0, %v1540
        %v1542 = vpop.f32.mrb[0].mxu0
        %1543 = vdwg.mxu0
        %v1544 = vsel %vm1290, %v1531, -inf
        %1545 = vmax.xlane.f32.xlu0 %v1544
        %v1546 = vpop.xlane.xlu0 %1545
        %v1547 = vsel %vm1290, %v1536, -inf
        %1548 = vmax.xlane.f32.xlu0 %v1547
        %v1549 = vpop.xlane.xlu0 %1548
        %v1550 = vsel %vm1297, %v1541, -inf
        %1551 = vmax.xlane.f32.xlu0 %v1550
        %v1552 = vpop.xlane.xlu0 %1551
        %v1553 = vsub.f32 %v1531, %v1546
        %v1554 = vsub.f32 %v1536, %v1549
        %v1555 = vsub.f32 %v1541, %v1552
        %v1556 = vmul.f32 %v1553, 1.442695
        %v1557 = vpow.pop %v1556
        %v1558 = vmul.f32 %v1554, 1.442695
        %v1559 = vpow.pop %v1558
        %v1560 = vmul.f32 %v1555, 1.442695
        %v1561 = vpow.pop %v1560
        %v1562 = vsel %vm1290, %v1557, 0.0
        %1563 = vadd.xlane.f32.xlu0 %v1562
        %v1564 = vpop.xlane.xlu0 %1563
        %v1565 = vsel %vm1290, %v1559, 0.0
        %1566 = vadd.xlane.f32.xlu0 %v1565
        %v1567 = vpop.xlane.xlu0 %1566
        %v1568 = vsel %vm1297, %v1561, 0.0
        %1569 = vadd.xlane.f32.xlu0 %v1568
        %v1570 = vpop.xlane.xlu0 %1569
        %v1571 = vrcp.pop %v1564
        %v1572 = vrcp.pop %v1567
        %v1573 = vrcp.pop %v1570
        %v1574 = vmul.f32 %v1557, %v1571
        %v1575 = vmul.f32 %v1559, %v1572
        %v1576 = vmul.f32 %v1561, %v1573
        %1579 = vrot.lane.b32.xlu0 %v1175, 112
        %v1580 = vpop.permute.xlu0 %1579
        %1581 = vrot.lane.b32.xlu0 %v1178, 112
        %v1582 = vpop.permute.xlu0 %1581
        %1583 = vrot.lane.b32.xlu0 %v1183, 112
        %v1584 = vpop.permute.xlu0 %1583
        %v1588 = vsel %vm1290, %v1574, 0
        %v1591 = vsel %vm1290, %v1575, 0
        %v1594 = vsel %vm1290, %v1576, 0
        %v1596 = vsel %vm1334, %v1584, 0
        %1598 = vmatprep.subr.mxu0 0.0
        %1599 = vmatpush1.msra.mxu0 %v1580
        %1600 = vmatprep.subr.mxu0 0.0
        %1601 = vmatpush1.msra.mxu0 %v1582
        %1602 = vmatprep.subr.mxu0 0.0
        %1603 = vmatpush1.msra.mxu0 %v1596
        %1604 = vmatprep.subr.mxu0 0.0
        %1605 = vmatpush1.msra.mxu0 0.0
        %1606 = vmatprep.subr.mxu0 0.0
        %1607 = vmatpush1.msra.mxu0 0.0
        %1608 = vmatprep.subr.mxu0 0.0
        %1609 = vmatpush1.msra.mxu0 0.0
        %1610 = vmatprep.subr.mxu0 0.0
        %1611 = vmatpush1.msra.mxu0 0.0
        %1612 = vmatprep.subr.mxu0 0.0
        %1613 = vmatpush1.msra.mxu0 0.0
        %1614 = vmatprep.subr.mxu0 0.0
        %1615 = vmatpush1.msra.mxu0 0.0
        %1616 = vmatprep.subr.mxu0 0.0
        %1617 = vmatpush1.msra.mxu0 0.0
        %1618 = vmatprep.subr.mxu0 0.0
        %1619 = vmatpush1.msra.mxu0 0.0
        %1620 = vmatprep.subr.mxu0 0.0
        %1621 = vmatpush1.msra.mxu0 0.0
        %1622 = vmatprep.subr.mxu0 0.0
        %1623 = vmatpush1.msra.mxu0 0.0
        %1624 = vmatprep.subr.mxu0 0.0
        %1625 = vmatpush1.msra.mxu0 0.0
        %1626 = vmatprep.subr.mxu0 0.0
        %1627 = vmatpush1.msra.mxu0 0.0
        %1628 = vmatprep.subr.mxu0 0.0
        %1629 = vmatpush1.msra.mxu0 0.0
        %1630 = vmatprep.subr.mxu0 0.0
        %1631 = vmatpush1.msra.mxu0 0.0
        %1632 = vmatprep.subr.mxu0 0.0
        %1633 = vmatpush1.msra.mxu0 0.0
        %1634 = vmatprep.subr.mxu0 0.0
        %1635 = vmatpush1.msra.mxu0 0.0
        %1636 = vmatprep.subr.mxu0 0.0
        %1637 = vmatpush1.msra.mxu0 0.0
        %1638 = vmatprep.subr.mxu0 0.0
        %1639 = vmatpush1.msra.mxu0 0.0
        %1640 = vmatprep.subr.mxu0 0.0
        %1641 = vmatpush1.msra.mxu0 0.0
        %1642 = vmatprep.subr.mxu0 0.0
        %1643 = vmatpush1.msra.mxu0 0.0
        %1644 = vmatprep.subr.mxu0 0.0
        %1645 = vmatpush1.msra.mxu0 0.0
        %1646 = vmatprep.subr.mxu0 0.0
        %1647 = vmatpush1.msra.mxu0 0.0
        %1648 = vmatprep.subr.mxu0 0.0
        %1649 = vmatpush1.msra.mxu0 0.0
        %1650 = vmatprep.subr.mxu0 0.0
        %1651 = vmatpush1.msra.mxu0 0.0
        %1652 = vmatprep.subr.mxu0 0.0
        %1653 = vmatpush1.msra.mxu0 0.0
        %1654 = vmatprep.subr.mxu0 0.0
        %1655 = vmatpush1.msra.mxu0 0.0
        %1656 = vmatprep.subr.mxu0 0.0
        %1657 = vmatpush1.msra.mxu0 0.0
        %1658 = vmatprep.subr.mxu0 0.0
        %1659 = vmatpush1.msra.mxu0 0.0
        %1660 = vmatprep.subr.mxu0 0.0
        %1661 = vmatpush1.msra.mxu0 0.0
        %1662 = vmatprep.mubr.f32.mxu0 0.0
        %1663 = vmatmul.mubr.f32.gmra.mrb[0].mxu0 %v1588
        %v1664 = vpop.f32.mrb[0].mxu0
        %v1665 = vadd.f32 0.0, %v1664
        %v1666 = vpop.f32.mrb[0].mxu0
        %1667 = vmatprep.mubr.f32.mxu0 0.0
        %1668 = vmatmul.mubr.f32.gmra.mrb[0].mxu0 %v1591
        %v1669 = vpop.f32.mrb[0].mxu0
        %v1670 = vadd.f32 0.0, %v1669
        %v1671 = vpop.f32.mrb[0].mxu0
        %1672 = vmatprep.mubr.f32.mxu0 0.0
        %1673 = vmatmul.mubr.f32.gmra.mrb[0].mxu0 %v1594
        %v1674 = vpop.f32.mrb[0].mxu0
        %v1675 = vadd.f32 0.0, %v1674
        %v1676 = vpop.f32.mrb[0].mxu0
        %1677 = vdwg.mxu0
        %v1678 = vpack.c.bf16 %v1670, %v1665
        %v1679 = vpack.c.bf16 %v1675, %v1675
        %v1682 = vunpack.c.l.b16 %v1678
        %v1683 = vunpack.c.h.b16 %v1678
        %v1684 = vunpack.c.l.b16 %v1679
        %v1685 = vpack.c.b16 %v1682, %v1682
        %v1686 = vpack.c.b16 %v1683, %v1683
        %v1687 = vpack.c.b16 %v1684, %v1684
        %1688 = vrot.lane.b32.xlu0 %v1685, 16
        %v1689 = vpop.permute.xlu0 %1688
        %1690 = vrot.lane.b32.xlu0 %v1686, 16
        %v1691 = vpop.permute.xlu0 %1690
        %1692 = vrot.lane.b32.xlu0 %v1687, 16
        %v1693 = vpop.permute.xlu0 %1692
        %vm1697 = vcmask 257152
        %1698 = vst.msk [vmem:[#allocation2] sm:$0xf] %vm1697, %v1689
        %1699 = vst.msk [vmem:[#allocation2 + $0x4] sm:$0xf] %vm1697, %v1691
        %vm1700 = vcmask 254080
        %vm1701 = vmand %vm1700, %vm1435
        %v1702 = vld [vmem:[#allocation2 + $0x8] sm:$0x1]
        %v1703 = vsel %vm1701, %v1693, %v1702
        %1704 = vst [vmem:[#allocation2 + $0x8] sm:$0x1] %v1703
        %1705 = vrot.lane.b32.xlu0 %v1188, 96
        %v1706 = vpop.permute.xlu0 %1705
        %1707 = vrot.lane.b32.xlu0 %v1189, 96
        %v1708 = vpop.permute.xlu0 %1707
        %1709 = vrot.lane.b32.xlu0 %v1190, 96
        %v1710 = vpop.permute.xlu0 %1709
        %1711 = vrot.lane.b32.xlu0 %v1126, 96
        %v1712 = vpop.permute.xlu0 %1711
        %1713 = vrot.lane.b32.xlu0 %v1130, 96
        %v1714 = vpop.permute.xlu0 %1713
        %1715 = vrot.lane.b32.xlu0 %v1136, 96
        %v1716 = vpop.permute.xlu0 %1715
        %v1717 = vsel %vm1191, %v1706, 0
        %v1719 = vsel %vm1191, %v1708, 0
        %v1721 = vsel %vm1191, %v1710, 0
        %v1723 = vsel %vm1191, %v1712, 0
        %v1725 = vsel %vm1191, %v1714, 0
        %v1727 = vsel %vm1191, %v1716, 0
        %1729 = vmatprep.subr.mxu0 0.0
        %1730 = vmatpush1.xpose.msra.mxu0 %v1723
        %1731 = vmatprep.subr.mxu0 0.0
        %1732 = vmatpush1.xpose.msra.mxu0 %v1725
        %1733 = vmatprep.subr.mxu0 0.0
        %1734 = vmatpush1.xpose.msra.mxu0 %v1727
        %1735 = vmatprep.subr.mxu0 0.0
        %1736 = vmatpush1.xpose.msra.mxu0 0.0
        %1737 = vmatprep.subr.mxu0 0.0
        %1738 = vmatpush1.xpose.msra.mxu0 0.0
        %1739 = vmatprep.subr.mxu0 0.0
        %1740 = vmatpush1.xpose.msra.mxu0 0.0
        %1741 = vmatprep.subr.mxu0 0.0
        %1742 = vmatpush1.xpose.msra.mxu0 0.0
        %1743 = vmatprep.subr.mxu0 0.0
        %1744 = vmatpush1.xpose.msra.mxu0 0.0
        %1745 = vmatprep.subr.mxu0 0.0
        %1746 = vmatpush1.xpose.msra.mxu0 0.0
        %1747 = vmatprep.subr.mxu0 0.0
        %1748 = vmatpush1.xpose.msra.mxu0 0.0
        %1749 = vmatprep.subr.mxu0 0.0
        %1750 = vmatpush1.xpose.msra.mxu0 0.0
        %1751 = vmatprep.subr.mxu0 0.0
        %1752 = vmatpush1.xpose.msra.mxu0 0.0
        %1753 = vmatprep.subr.mxu0 0.0
        %1754 = vmatpush1.xpose.msra.mxu0 0.0
        %1755 = vmatprep.subr.mxu0 0.0
        %1756 = vmatpush1.xpose.msra.mxu0 0.0
        %1757 = vmatprep.subr.mxu0 0.0
        %1758 = vmatpush1.xpose.msra.mxu0 0.0
        %1759 = vmatprep.subr.mxu0 0.0
        %1760 = vmatpush1.xpose.msra.mxu0 0.0
        %1761 = vmatprep.subr.mxu0 0.0
        %1762 = vmatpush1.xpose.msra.mxu0 0.0
        %1763 = vmatprep.subr.mxu0 0.0
        %1764 = vmatpush1.xpose.msra.mxu0 0.0
        %1765 = vmatprep.subr.mxu0 0.0
        %1766 = vmatpush1.xpose.msra.mxu0 0.0
        %1767 = vmatprep.subr.mxu0 0.0
        %1768 = vmatpush1.xpose.msra.mxu0 0.0
        %1769 = vmatprep.subr.mxu0 0.0
        %1770 = vmatpush1.xpose.msra.mxu0 0.0
        %1771 = vmatprep.subr.mxu0 0.0
        %1772 = vmatpush1.xpose.msra.mxu0 0.0
        %1773 = vmatprep.subr.mxu0 0.0
        %1774 = vmatpush1.xpose.msra.mxu0 0.0
        %1775 = vmatprep.subr.mxu0 0.0
        %1776 = vmatpush1.xpose.msra.mxu0 0.0
        %1777 = vmatprep.subr.mxu0 0.0
        %1778 = vmatpush1.xpose.msra.mxu0 0.0
        %1779 = vmatprep.subr.mxu0 0.0
        %1780 = vmatpush1.xpose.msra.mxu0 0.0
        %1781 = vmatprep.subr.mxu0 0.0
        %1782 = vmatpush1.xpose.msra.mxu0 0.0
        %1783 = vmatprep.subr.mxu0 0.0
        %1784 = vmatpush1.xpose.msra.mxu0 0.0
        %1785 = vmatprep.subr.mxu0 0.0
        %1786 = vmatpush1.xpose.msra.mxu0 0.0
        %1787 = vmatprep.subr.mxu0 0.0
        %1788 = vmatpush1.xpose.msra.mxu0 0.0
        %1789 = vmatprep.subr.mxu0 0.0
        %1790 = vmatpush1.xpose.msra.mxu0 0.0
        %1791 = vmatprep.subr.mxu0 0.0
        %1792 = vmatpush1.xpose.msra.mxu0 0.0
        %1793 = vmatprep.mubr.f32.mxu0 0.0
        %1794 = vmatmul.mubr.f32.gmra.mrb[0].mxu0 %v1717
        %v1795 = vpop.f32.mrb[0].mxu0
        %v1796 = vadd.f32 0.0, %v1795
        %v1797 = vpop.f32.mrb[0].mxu0
        %1798 = vmatprep.mubr.f32.mxu0 0.0
        %1799 = vmatmul.mubr.f32.gmra.mrb[0].mxu0 %v1719
        %v1800 = vpop.f32.mrb[0].mxu0
        %v1801 = vadd.f32 0.0, %v1800
        %v1802 = vpop.f32.mrb[0].mxu0
        %1803 = vmatprep.mubr.f32.mxu0 0.0
        %1804 = vmatmul.mubr.f32.gmra.mrb[0].mxu0 %v1721
        %v1805 = vpop.f32.mrb[0].mxu0
        %v1806 = vadd.f32 0.0, %v1805
        %v1807 = vpop.f32.mrb[0].mxu0
        %1808 = vdwg.mxu0
        %v1809 = vsel %vm1290, %v1796, -inf
        %1810 = vmax.xlane.f32.xlu0 %v1809
        %v1811 = vpop.xlane.xlu0 %1810
        %v1812 = vsel %vm1290, %v1801, -inf
        %1813 = vmax.xlane.f32.xlu0 %v1812
        %v1814 = vpop.xlane.xlu0 %1813
        %v1815 = vsel %vm1297, %v1806, -inf
        %1816 = vmax.xlane.f32.xlu0 %v1815
        %v1817 = vpop.xlane.xlu0 %1816
        %v1818 = vsub.f32 %v1796, %v1811
        %v1819 = vsub.f32 %v1801, %v1814
        %v1820 = vsub.f32 %v1806, %v1817
        %v1821 = vmul.f32 %v1818, 1.442695
        %v1822 = vpow.pop %v1821
        %v1823 = vmul.f32 %v1819, 1.442695
        %v1824 = vpow.pop %v1823
        %v1825 = vmul.f32 %v1820, 1.442695
        %v1826 = vpow.pop %v1825
        %v1827 = vsel %vm1290, %v1822, 0.0
        %1828 = vadd.xlane.f32.xlu0 %v1827
        %v1829 = vpop.xlane.xlu0 %1828
        %v1830 = vsel %vm1290, %v1824, 0.0
        %1831 = vadd.xlane.f32.xlu0 %v1830
        %v1832 = vpop.xlane.xlu0 %1831
        %v1833 = vsel %vm1297, %v1826, 0.0
        %1834 = vadd.xlane.f32.xlu0 %v1833
        %v1835 = vpop.xlane.xlu0 %1834
        %v1836 = vrcp.pop %v1829
        %v1837 = vrcp.pop %v1832
        %v1838 = vrcp.pop %v1835
        %v1839 = vmul.f32 %v1822, %v1836
        %v1840 = vmul.f32 %v1824, %v1837
        %v1841 = vmul.f32 %v1826, %v1838
        %1842 = vrot.lane.b32.xlu0 %v1175, 96
        %v1843 = vpop.permute.xlu0 %1842
        %1844 = vrot.lane.b32.xlu0 %v1178, 96
        %v1845 = vpop.permute.xlu0 %1844
        %1846 = vrot.lane.b32.xlu0 %v1183, 96
        %v1847 = vpop.permute.xlu0 %1846
        %v1851 = vsel %vm1290, %v1839, 0
        %v1854 = vsel %vm1290, %v1840, 0
        %v1857 = vsel %vm1290, %v1841, 0
        %v1859 = vsel %vm1334, %v1847, 0
        %1861 = vmatprep.subr.mxu0 0.0
        %1862 = vmatpush1.msra.mxu0 %v1843
        %1863 = vmatprep.subr.mxu0 0.0
        %1864 = vmatpush1.msra.mxu0 %v1845
        %1865 = vmatprep.subr.mxu0 0.0
        %1866 = vmatpush1.msra.mxu0 %v1859
        %1867 = vmatprep.subr.mxu0 0.0
        %1868 = vmatpush1.msra.mxu0 0.0
        %1869 = vmatprep.subr.mxu0 0.0
        %1870 = vmatpush1.msra.mxu0 0.0
        %1871 = vmatprep.subr.mxu0 0.0
        %1872 = vmatpush1.msra.mxu0 0.0
        %1873 = vmatprep.subr.mxu0 0.0
        %1874 = vmatpush1.msra.mxu0 0.0
        %1875 = vmatprep.subr.mxu0 0.0
        %1876 = vmatpush1.msra.mxu0 0.0
        %1877 = vmatprep.subr.mxu0 0.0
        %1878 = vmatpush1.msra.mxu0 0.0
        %1879 = vmatprep.subr.mxu0 0.0
        %1880 = vmatpush1.msra.mxu0 0.0
        %1881 = vmatprep.subr.mxu0 0.0
        %1882 = vmatpush1.msra.mxu0 0.0
        %1883 = vmatprep.subr.mxu0 0.0
        %1884 = vmatpush1.msra.mxu0 0.0
        %1885 = vmatprep.subr.mxu0 0.0
        %1886 = vmatpush1.msra.mxu0 0.0
        %1887 = vmatprep.subr.mxu0 0.0
        %1888 = vmatpush1.msra.mxu0 0.0
        %1889 = vmatprep.subr.mxu0 0.0
        %1890 = vmatpush1.msra.mxu0 0.0
        %1891 = vmatprep.subr.mxu0 0.0
        %1892 = vmatpush1.msra.mxu0 0.0
        %1893 = vmatprep.subr.mxu0 0.0
        %1894 = vmatpush1.msra.mxu0 0.0
        %1895 = vmatprep.subr.mxu0 0.0
        %1896 = vmatpush1.msra.mxu0 0.0
        %1897 = vmatprep.subr.mxu0 0.0
        %1898 = vmatpush1.msra.mxu0 0.0
        %1899 = vmatprep.subr.mxu0 0.0
        %1900 = vmatpush1.msra.mxu0 0.0
        %1901 = vmatprep.subr.mxu0 0.0
        %1902 = vmatpush1.msra.mxu0 0.0
        %1903 = vmatprep.subr.mxu0 0.0
        %1904 = vmatpush1.msra.mxu0 0.0
        %1905 = vmatprep.subr.mxu0 0.0
        %1906 = vmatpush1.msra.mxu0 0.0
        %1907 = vmatprep.subr.mxu0 0.0
        %1908 = vmatpush1.msra.mxu0 0.0
        %1909 = vmatprep.subr.mxu0 0.0
        %1910 = vmatpush1.msra.mxu0 0.0
        %1911 = vmatprep.subr.mxu0 0.0
        %1912 = vmatpush1.msra.mxu0 0.0
        %1913 = vmatprep.subr.mxu0 0.0
        %1914 = vmatpush1.msra.mxu0 0.0
        %1915 = vmatprep.subr.mxu0 0.0
        %1916 = vmatpush1.msra.mxu0 0.0
        %1917 = vmatprep.subr.mxu0 0.0
        %1918 = vmatpush1.msra.mxu0 0.0
        %1919 = vmatprep.subr.mxu0 0.0
        %1920 = vmatpush1.msra.mxu0 0.0
        %1921 = vmatprep.subr.mxu0 0.0
        %1922 = vmatpush1.msra.mxu0 0.0
        %1923 = vmatprep.subr.mxu0 0.0
        %1924 = vmatpush1.msra.mxu0 0.0
        %1925 = vmatprep.mubr.f32.mxu0 0.0
        %1926 = vmatmul.mubr.f32.gmra.mrb[0].mxu0 %v1851
        %v1927 = vpop.f32.mrb[0].mxu0
        %v1928 = vadd.f32 0.0, %v1927
        %v1929 = vpop.f32.mrb[0].mxu0
        %1930 = vmatprep.mubr.f32.mxu0 0.0
        %1931 = vmatmul.mubr.f32.gmra.mrb[0].mxu0 %v1854
        %v1932 = vpop.f32.mrb[0].mxu0
        %v1933 = vadd.f32 0.0, %v1932
        %v1934 = vpop.f32.mrb[0].mxu0
        %1935 = vmatprep.mubr.f32.mxu0 0.0
        %1936 = vmatmul.mubr.f32.gmra.mrb[0].mxu0 %v1857
        %v1937 = vpop.f32.mrb[0].mxu0
        %v1938 = vadd.f32 0.0, %v1937
        %v1939 = vpop.f32.mrb[0].mxu0
        %1940 = vdwg.mxu0
        %v1941 = vpack.c.bf16 %v1933, %v1928
        %v1942 = vpack.c.bf16 %v1938, %v1938
        %v1945 = vunpack.c.l.b16 %v1941
        %v1946 = vunpack.c.h.b16 %v1941
        %v1947 = vunpack.c.l.b16 %v1942
        %v1948 = vpack.c.b16 %v1945, %v1945
        %v1949 = vpack.c.b16 %v1946, %v1946
        %v1950 = vpack.c.b16 %v1947, %v1947
        %1951 = vrot.lane.b32.xlu0 %v1948, 32
        %v1952 = vpop.permute.xlu0 %1951
        %1953 = vrot.lane.b32.xlu0 %v1949, 32
        %v1954 = vpop.permute.xlu0 %1953
        %1955 = vrot.lane.b32.xlu0 %v1950, 32
        %v1956 = vpop.permute.xlu0 %1955
        %vm1960 = vcmask 388352
        %1961 = vst.msk [vmem:[#allocation2] sm:$0xf] %vm1960, %v1952
        %1962 = vst.msk [vmem:[#allocation2 + $0x4] sm:$0xf] %vm1960, %v1954
        %vm1963 = vcmask 385280
        %vm1964 = vmand %vm1963, %vm1435
        %v1965 = vld [vmem:[#allocation2 + $0x8] sm:$0x1]
        %v1966 = vsel %vm1964, %v1956, %v1965
        %1967 = vst [vmem:[#allocation2 + $0x8] sm:$0x1] %v1966
        %1968 = vrot.lane.b32.xlu0 %v1188, 80
        %v1969 = vpop.permute.xlu0 %1968
        %1970 = vrot.lane.b32.xlu0 %v1189, 80
        %v1971 = vpop.permute.xlu0 %1970
        %1972 = vrot.lane.b32.xlu0 %v1190, 80
        %v1973 = vpop.permute.xlu0 %1972
        %1974 = vrot.lane.b32.xlu0 %v1126, 80
        %v1975 = vpop.permute.xlu0 %1974
        %1976 = vrot.lane.b32.xlu0 %v1130, 80
        %v1977 = vpop.permute.xlu0 %1976
        %1978 = vrot.lane.b32.xlu0 %v1136, 80
        %v1979 = vpop.permute.xlu0 %1978
        %v1980 = vsel %vm1191, %v1969, 0
        %v1982 = vsel %vm1191, %v1971, 0
        %v1984 = vsel %vm1191, %v1973, 0
        %v1986 = vsel %vm1191, %v1975, 0
        %v1988 = vsel %vm1191, %v1977, 0
        %v1990 = vsel %vm1191, %v1979, 0
        %1992 = vmatprep.subr.mxu0 0.0
        %1993 = vmatpush1.xpose.msra.mxu0 %v1986
        %1994 = vmatprep.subr.mxu0 0.0
        %1995 = vmatpush1.xpose.msra.mxu0 %v1988
        %1996 = vmatprep.subr.mxu0 0.0
        %1997 = vmatpush1.xpose.msra.mxu0 %v1990
        %1998 = vmatprep.subr.mxu0 0.0
        %1999 = vmatpush1.xpose.msra.mxu0 0.0
        %2000 = vmatprep.subr.mxu0 0.0
        %2001 = vmatpush1.xpose.msra.mxu0 0.0
        %2002 = vmatprep.subr.mxu0 0.0
        %2003 = vmatpush1.xpose.msra.mxu0 0.0
        %2004 = vmatprep.subr.mxu0 0.0
        %2005 = vmatpush1.xpose.msra.mxu0 0.0
        %2006 = vmatprep.subr.mxu0 0.0
        %2007 = vmatpush1.xpose.msra.mxu0 0.0
        %2008 = vmatprep.subr.mxu0 0.0
        %2009 = vmatpush1.xpose.msra.mxu0 0.0
        %2010 = vmatprep.subr.mxu0 0.0
        %2011 = vmatpush1.xpose.msra.mxu0 0.0
        %2012 = vmatprep.subr.mxu0 0.0
        %2013 = vmatpush1.xpose.msra.mxu0 0.0
        %2014 = vmatprep.subr.mxu0 0.0
        %2015 = vmatpush1.xpose.msra.mxu0 0.0
        %2016 = vmatprep.subr.mxu0 0.0
        %2017 = vmatpush1.xpose.msra.mxu0 0.0
        %2018 = vmatprep.subr.mxu0 0.0
        %2019 = vmatpush1.xpose.msra.mxu0 0.0
        %2020 = vmatprep.subr.mxu0 0.0
        %2021 = vmatpush1.xpose.msra.mxu0 0.0
        %2022 = vmatprep.subr.mxu0 0.0
        %2023 = vmatpush1.xpose.msra.mxu0 0.0
        %2024 = vmatprep.subr.mxu0 0.0
        %2025 = vmatpush1.xpose.msra.mxu0 0.0
        %2026 = vmatprep.subr.mxu0 0.0
        %2027 = vmatpush1.xpose.msra.mxu0 0.0
        %2028 = vmatprep.subr.mxu0 0.0
        %2029 = vmatpush1.xpose.msra.mxu0 0.0
        %2030 = vmatprep.subr.mxu0 0.0
        %2031 = vmatpush1.xpose.msra.mxu0 0.0
        %2032 = vmatprep.subr.mxu0 0.0
        %2033 = vmatpush1.xpose.msra.mxu0 0.0
        %2034 = vmatprep.subr.mxu0 0.0
        %2035 = vmatpush1.xpose.msra.mxu0 0.0
        %2036 = vmatprep.subr.mxu0 0.0
        %2037 = vmatpush1.xpose.msra.mxu0 0.0
        %2038 = vmatprep.subr.mxu0 0.0
        %2039 = vmatpush1.xpose.msra.mxu0 0.0
        %2040 = vmatprep.subr.mxu0 0.0
        %2041 = vmatpush1.xpose.msra.mxu0 0.0
        %2042 = vmatprep.subr.mxu0 0.0
        %2043 = vmatpush1.xpose.msra.mxu0 0.0
        %2044 = vmatprep.subr.mxu0 0.0
        %2045 = vmatpush1.xpose.msra.mxu0 0.0
        %2046 = vmatprep.subr.mxu0 0.0
        %2047 = vmatpush1.xpose.msra.mxu0 0.0
        %2048 = vmatprep.subr.mxu0 0.0
        %2049 = vmatpush1.xpose.msra.mxu0 0.0
        %2050 = vmatprep.subr.mxu0 0.0
        %2051 = vmatpush1.xpose.msra.mxu0 0.0
        %2052 = vmatprep.subr.mxu0 0.0
        %2053 = vmatpush1.xpose.msra.mxu0 0.0
        %2054 = vmatprep.subr.mxu0 0.0
        %2055 = vmatpush1.xpose.msra.mxu0 0.0
        %2056 = vmatprep.mubr.f32.mxu0 0.0
        %2057 = vmatmul.mubr.f32.gmra.mrb[0].mxu0 %v1980
        %v2058 = vpop.f32.mrb[0].mxu0
        %v2059 = vadd.f32 0.0, %v2058
        %v2060 = vpop.f32.mrb[0].mxu0
        %2061 = vmatprep.mubr.f32.mxu0 0.0
        %2062 = vmatmul.mubr.f32.gmra.mrb[0].mxu0 %v1982
        %v2063 = vpop.f32.mrb[0].mxu0
        %v2064 = vadd.f32 0.0, %v2063
        %v2065 = vpop.f32.mrb[0].mxu0
        %2066 = vmatprep.mubr.f32.mxu0 0.0
        %2067 = vmatmul.mubr.f32.gmra.mrb[0].mxu0 %v1984
        %v2068 = vpop.f32.mrb[0].mxu0
        %v2069 = vadd.f32 0.0, %v2068
        %v2070 = vpop.f32.mrb[0].mxu0
        %2071 = vdwg.mxu0
        %v2072 = vsel %vm1290, %v2059, -inf
        %2073 = vmax.xlane.f32.xlu0 %v2072
        %v2074 = vpop.xlane.xlu0 %2073
        %v2075 = vsel %vm1290, %v2064, -inf
        %2076 = vmax.xlane.f32.xlu0 %v2075
        %v2077 = vpop.xlane.xlu0 %2076
        %v2078 = vsel %vm1297, %v2069, -inf
        %2079 = vmax.xlane.f32.xlu0 %v2078
        %v2080 = vpop.xlane.xlu0 %2079
        %v2081 = vsub.f32 %v2059, %v2074
        %v2082 = vsub.f32 %v2064, %v2077
        %v2083 = vsub.f32 %v2069, %v2080
        %v2084 = vmul.f32 %v2081, 1.442695
        %v2085 = vpow.pop %v2084
        %v2086 = vmul.f32 %v2082, 1.442695
        %v2087 = vpow.pop %v2086
        %v2088 = vmul.f32 %v2083, 1.442695
        %v2089 = vpow.pop %v2088
        %v2090 = vsel %vm1290, %v2085, 0.0
        %2091 = vadd.xlane.f32.xlu0 %v2090
        %v2092 = vpop.xlane.xlu0 %2091
        %v2093 = vsel %vm1290, %v2087, 0.0
        %2094 = vadd.xlane.f32.xlu0 %v2093
        %v2095 = vpop.xlane.xlu0 %2094
        %v2096 = vsel %vm1297, %v2089, 0.0
        %2097 = vadd.xlane.f32.xlu0 %v2096
        %v2098 = vpop.xlane.xlu0 %2097
        %v2099 = vrcp.pop %v2092
        %v2100 = vrcp.pop %v2095
        %v2101 = vrcp.pop %v2098
        %v2102 = vmul.f32 %v2085, %v2099
        %v2103 = vmul.f32 %v2087, %v2100
        %v2104 = vmul.f32 %v2089, %v2101
        %2105 = vrot.lane.b32.xlu0 %v1175, 80
        %v2106 = vpop.permute.xlu0 %2105
        %2107 = vrot.lane.b32.xlu0 %v1178, 80
        %v2108 = vpop.permute.xlu0 %2107
        %2109 = vrot.lane.b32.xlu0 %v1183, 80
        %v2110 = vpop.permute.xlu0 %2109
        %v2114 = vsel %vm1290, %v2102, 0
        %v2117 = vsel %vm1290, %v2103, 0
        %v2120 = vsel %vm1290, %v2104, 0
        %v2122 = vsel %vm1334, %v2110, 0
        %2124 = vmatprep.subr.mxu0 0.0
        %2125 = vmatpush1.msra.mxu0 %v2106
        %2126 = vmatprep.subr.mxu0 0.0
        %2127 = vmatpush1.msra.mxu0 %v2108
        %2128 = vmatprep.subr.mxu0 0.0
        %2129 = vmatpush1.msra.mxu0 %v2122
        %2130 = vmatprep.subr.mxu0 0.0
        %2131 = vmatpush1.msra.mxu0 0.0
        %2132 = vmatprep.subr.mxu0 0.0
        %2133 = vmatpush1.msra.mxu0 0.0
        %2134 = vmatprep.subr.mxu0 0.0
        %2135 = vmatpush1.msra.mxu0 0.0
        %2136 = vmatprep.subr.mxu0 0.0
        %2137 = vmatpush1.msra.mxu0 0.0
        %2138 = vmatprep.subr.mxu0 0.0
        %2139 = vmatpush1.msra.mxu0 0.0
        %2140 = vmatprep.subr.mxu0 0.0
        %2141 = vmatpush1.msra.mxu0 0.0
        %2142 = vmatprep.subr.mxu0 0.0
        %2143 = vmatpush1.msra.mxu0 0.0
        %2144 = vmatprep.subr.mxu0 0.0
        %2145 = vmatpush1.msra.mxu0 0.0
        %2146 = vmatprep.subr.mxu0 0.0
        %2147 = vmatpush1.msra.mxu0 0.0
        %2148 = vmatprep.subr.mxu0 0.0
        %2149 = vmatpush1.msra.mxu0 0.0
        %2150 = vmatprep.subr.mxu0 0.0
        %2151 = vmatpush1.msra.mxu0 0.0
        %2152 = vmatprep.subr.mxu0 0.0
        %2153 = vmatpush1.msra.mxu0 0.0
        %2154 = vmatprep.subr.mxu0 0.0
        %2155 = vmatpush1.msra.mxu0 0.0
        %2156 = vmatprep.subr.mxu0 0.0
        %2157 = vmatpush1.msra.mxu0 0.0
        %2158 = vmatprep.subr.mxu0 0.0
        %2159 = vmatpush1.msra.mxu0 0.0
        %2160 = vmatprep.subr.mxu0 0.0
        %2161 = vmatpush1.msra.mxu0 0.0
        %2162 = vmatprep.subr.mxu0 0.0
        %2163 = vmatpush1.msra.mxu0 0.0
        %2164 = vmatprep.subr.mxu0 0.0
        %2165 = vmatpush1.msra.mxu0 0.0
        %2166 = vmatprep.subr.mxu0 0.0
        %2167 = vmatpush1.msra.mxu0 0.0
        %2168 = vmatprep.subr.mxu0 0.0
        %2169 = vmatpush1.msra.mxu0 0.0
        %2170 = vmatprep.subr.mxu0 0.0
        %2171 = vmatpush1.msra.mxu0 0.0
        %2172 = vmatprep.subr.mxu0 0.0
        %2173 = vmatpush1.msra.mxu0 0.0
        %2174 = vmatprep.subr.mxu0 0.0
        %2175 = vmatpush1.msra.mxu0 0.0
        %2176 = vmatprep.subr.mxu0 0.0
        %2177 = vmatpush1.msra.mxu0 0.0
        %2178 = vmatprep.subr.mxu0 0.0
        %2179 = vmatpush1.msra.mxu0 0.0
        %2180 = vmatprep.subr.mxu0 0.0
        %2181 = vmatpush1.msra.mxu0 0.0
        %2182 = vmatprep.subr.mxu0 0.0
        %2183 = vmatpush1.msra.mxu0 0.0
        %2184 = vmatprep.subr.mxu0 0.0
        %2185 = vmatpush1.msra.mxu0 0.0
        %2186 = vmatprep.subr.mxu0 0.0
        %2187 = vmatpush1.msra.mxu0 0.0
        %2188 = vmatprep.mubr.f32.mxu0 0.0
        %2189 = vmatmul.mubr.f32.gmra.mrb[0].mxu0 %v2114
        %v2190 = vpop.f32.mrb[0].mxu0
        %v2191 = vadd.f32 0.0, %v2190
        %v2192 = vpop.f32.mrb[0].mxu0
        %2193 = vmatprep.mubr.f32.mxu0 0.0
        %2194 = vmatmul.mubr.f32.gmra.mrb[0].mxu0 %v2117
        %v2195 = vpop.f32.mrb[0].mxu0
        %v2196 = vadd.f32 0.0, %v2195
        %v2197 = vpop.f32.mrb[0].mxu0
        %2198 = vmatprep.mubr.f32.mxu0 0.0
        %2199 = vmatmul.mubr.f32.gmra.mrb[0].mxu0 %v2120
        %v2200 = vpop.f32.mrb[0].mxu0
        %v2201 = vadd.f32 0.0, %v2200
        %v2202 = vpop.f32.mrb[0].mxu0
        %2203 = vdwg.mxu0
        %v2204 = vpack.c.bf16 %v2196, %v2191
        %v2205 = vpack.c.bf16 %v2201, %v2201
        %v2208 = vunpack.c.l.b16 %v2204
        %v2209 = vunpack.c.h.b16 %v2204
        %v2210 = vunpack.c.l.b16 %v2205
        %v2211 = vpack.c.b16 %v2208, %v2208
        %v2212 = vpack.c.b16 %v2209, %v2209
        %v2213 = vpack.c.b16 %v2210, %v2210
        %2214 = vrot.lane.b32.xlu0 %v2211, 48
        %v2215 = vpop.permute.xlu0 %2214
        %2216 = vrot.lane.b32.xlu0 %v2212, 48
        %v2217 = vpop.permute.xlu0 %2216
        %2218 = vrot.lane.b32.xlu0 %v2213, 48
        %v2219 = vpop.permute.xlu0 %2218
        %vm2223 = vcmask 519552
        %2224 = vst.msk [vmem:[#allocation2] sm:$0xf] %vm2223, %v2215
        %2225 = vst.msk [vmem:[#allocation2 + $0x4] sm:$0xf] %vm2223, %v2217
        %vm2226 = vcmask 516480
        %vm2227 = vmand %vm2226, %vm1435
        %v2228 = vld [vmem:[#allocation2 + $0x8] sm:$0x1]
        %v2229 = vsel %vm2227, %v2219, %v2228
        %2230 = vst [vmem:[#allocation2 + $0x8] sm:$0x1] %v2229
        %v2231 = vld [vmem:[#allocation2] sm:$0xf]
        %v2232 = vld [vmem:[#allocation2 + $0x4] sm:$0xf]
        %v2233 = vld [vmem:[#allocation2 + $0x8] sm:$0x1]
        %v2234 = vld [vmem:[#allocation9] sm:$0xf]
        %v2235 = vld [vmem:[#allocation9 + $0x4] sm:$0xf]
        %v2236 = vld [vmem:[#allocation9 + $0x8] sm:$0xf]
        %v2237 = vld [vmem:[#allocation9 + $0xc] sm:$0xf]
        %v2238 = vld [vmem:[#allocation9 + $0x10] sm:$0xf]
        %v2239 = vld [vmem:[#allocation9 + $0x14] sm:$0xf]
        %v2240 = vld [vmem:[#allocation9 + $0x18] sm:$0xf]
        %v2241 = vld [vmem:[#allocation9 + $0x1c] sm:$0xf]
        %v2245 = vunpack.c.l.b16 %v2231
        %v2246 = vunpack.c.l.b16 %v2232
        %v2247 = vunpack.c.l.b16 %v2233
        %v2248 = vpack.c.b16 %v2246, %v2245
        %v2249 = vpack.c.b16 %v2247, %v2247
        %v2258 = vunpack.c.l.b16 %v2234
        %v2259 = vunpack.c.l.b16 %v2235
        %v2260 = vunpack.c.l.b16 %v2236
        %v2261 = vunpack.c.l.b16 %v2237
        %v2262 = vunpack.c.l.b16 %v2238
        %v2263 = vunpack.c.l.b16 %v2239
        %v2264 = vunpack.c.l.b16 %v2240
        %v2265 = vunpack.c.l.b16 %v2241
        %v2266 = vpack.c.b16 %v2259, %v2258
        %v2267 = vpack.c.b16 %v2261, %v2260
        %v2268 = vpack.c.b16 %v2263, %v2262
        %v2269 = vpack.c.b16 %v2265, %v2264
        %v2275 = vsel %vm865, %v2248, 0
        %v2278 = vsel %vm865, %v2249, 0
        %2280 = vmatprep.subr.bf16.mxu0 0
        %2281 = vmatpush1.bf16.msra.mxu0 %v2266
        %2282 = vmatprep.subr.bf16.mxu0 0
        %2283 = vmatpush1.bf16.msra.mxu0 %v2267
        %2284 = vmatprep.subr.bf16.mxu0 0
        %2285 = vmatpush1.bf16.msra.mxu0 %v2268
        %2286 = vmatprep.subr.bf16.mxu0 0
        %2287 = vmatpush1.bf16.msra.mxu0 %v2269
        %2288 = vmatprep.subr.bf16.mxu0 0
        %2289 = vmatpush1.bf16.msra.mxu0 0
        %2290 = vmatprep.subr.bf16.mxu0 0
        %2291 = vmatpush1.bf16.msra.mxu0 0
        %2292 = vmatprep.subr.bf16.mxu0 0
        %2293 = vmatpush1.bf16.msra.mxu0 0
        %2294 = vmatprep.subr.bf16.mxu0 0
        %2295 = vmatpush1.bf16.msra.mxu0 0
        %2296 = vmatprep.subr.bf16.mxu0 0
        %2297 = vmatpush1.bf16.msra.mxu0 0
        %2298 = vmatprep.subr.bf16.mxu0 0
        %2299 = vmatpush1.bf16.msra.mxu0 0
        %2300 = vmatprep.subr.bf16.mxu0 0
        %2301 = vmatpush1.bf16.msra.mxu0 0
        %2302 = vmatprep.subr.bf16.mxu0 0
        %2303 = vmatpush1.bf16.msra.mxu0 0
        %2304 = vmatprep.subr.bf16.mxu0 0
        %2305 = vmatpush1.bf16.msra.mxu0 0
        %2306 = vmatprep.subr.bf16.mxu0 0
        %2307 = vmatpush1.bf16.msra.mxu0 0
        %2308 = vmatprep.subr.bf16.mxu0 0
        %2309 = vmatpush1.bf16.msra.mxu0 0
        %2310 = vmatprep.subr.bf16.mxu0 0
        %2311 = vmatpush1.bf16.msra.mxu0 0
        %2312 = vmatprep.mubr.bf16.mxu0 0
        %2313 = vmatmul.mubr.bf16.gmra.mrb[0].mxu0 %v2275
        %v2314 = vpop.f32.mrb[0].mxu0
        %v2315 = vadd.f32 0.0, %v2314
        %v2316 = vpop.f32.mrb[0].mxu0
        %v2317 = vpop.f32.mrb[0].mxu0
        %v2318 = vadd.f32 0.0, %v2317
        %v2319 = vpop.f32.mrb[0].mxu0
        %2320 = vmatprep.mubr.bf16.mxu0 0
        %2321 = vmatmul.mubr.bf16.gmra.mrb[0].mxu0 %v2278
        %v2322 = vpop.f32.mrb[0].mxu0
        %v2323 = vadd.f32 0.0, %v2322
        %v2324 = vpop.f32.mrb[0].mxu0
        %v2325 = vpop.f32.mrb[0].mxu0
        %v2326 = vpop.f32.mrb[0].mxu0
        %2327 = vdwg.mxu0
        %v2328 = vadd.f32 %v922, %v2315
        %v2329 = vadd.f32 %v923, %v2318
        %v2330 = vadd.f32 %v924, %v2323
        %v2331 = vld [vmem:[#allocation11] sm:$0x1]
        %v2333 = vlaneseq
        %v2334 = vshrl.u32 %v2333, 7
        %v2335 = vsub.s32 0, %v2334
        %v2336 = vrot.slane %v2331, %v2335
        %v2338 = vadd.f32 %v2328, %v2336
        %v2339 = vadd.f32 %v2329, %v2336
        %v2340 = vadd.f32 %v2330, %v2336
        %v2341 = vld [vmem:[#allocation12] sm:$0x1]
        %v2342 = vld [vmem:[#allocation14] sm:$0x1]
        %v2343 = vsel %vm865, %v2338, 0.0
        %2344 = vadd.xlane.f32.xlu0 %v2343
        %v2345 = vpop.xlane.xlu0 %2344
        %v2346 = vsel %vm865, %v2339, 0.0
        %2347 = vadd.xlane.f32.xlu0 %v2346
        %v2348 = vpop.xlane.xlu0 %2347
        %v2349 = vsel %vm872, %v2340, 0.0
        %2350 = vadd.xlane.f32.xlu0 %v2349
        %v2351 = vpop.xlane.xlu0 %2350
        %v2352 = vmul.f32 %v2345, %v876
        %v2353 = vmul.f32 %v2348, %v876
        %v2354 = vmul.f32 %v2351, %v876
        %v2355 = vsub.f32 %v2338, %v2352
        %v2356 = vsub.f32 %v2339, %v2353
        %v2357 = vsub.f32 %v2340, %v2354
        %v2358 = vmul.f32 %v2355, %v2355
        %v2359 = vmul.f32 %v2356, %v2356
        %v2360 = vmul.f32 %v2357, %v2357
        %v2361 = vsel %vm865, %v2358, 0.0
        %2362 = vadd.xlane.f32.xlu0 %v2361
        %v2363 = vpop.xlane.xlu0 %2362
        %v2364 = vsel %vm865, %v2359, 0.0
        %2365 = vadd.xlane.f32.xlu0 %v2364
        %v2366 = vpop.xlane.xlu0 %2365
        %v2367 = vsel %vm872, %v2360, 0.0
        %2368 = vadd.xlane.f32.xlu0 %v2367
        %v2369 = vpop.xlane.xlu0 %2368
        %v2370 = vmul.f32 %v2363, %v876
        %v2371 = vmul.f32 %v2366, %v876
        %v2372 = vmul.f32 %v2369, %v876
        %v2373 = vadd.f32 %v2370, 1e-05
        %v2374 = vadd.f32 %v2371, 1e-05
        %v2375 = vadd.f32 %v2372, 1e-05
        %v2376 = vrsqrt.pop %v2373
        %v2377 = vrsqrt.pop %v2374
        %v2378 = vrsqrt.pop %v2375
        %v2379 = vmul.f32 %v2355, %v2376
        %v2380 = vmul.f32 %v2356, %v2377
        %v2381 = vmul.f32 %v2357, %v2378
        %v2383 = vlaneseq
        %v2384 = vshrl.u32 %v2383, 7
        %v2385 = vsub.s32 0, %v2384
        %v2386 = vrot.slane %v2341, %v2385
        %v2388 = vmul.f32 %v2379, %v2386
        %v2389 = vmul.f32 %v2380, %v2386
        %v2390 = vmul.f32 %v2381, %v2386
        %v2392 = vlaneseq
        %v2393 = vshrl.u32 %v2392, 7
        %v2394 = vsub.s32 0, %v2393
        %v2395 = vrot.slane %v2342, %v2394
        %v2397 = vadd.f32 %v2388, %v2395
        %v2398 = vadd.f32 %v2389, %v2395
        %v2399 = vadd.f32 %v2390, %v2395
        %v2400 = vpack.c.bf16 %v2398, %v2397
        %v2401 = vpack.c.bf16 %v2399, %v2399
        %v2402 = vld [vmem:[#allocation15] sm:$0xf]
        %v2403 = vld [vmem:[#allocation15 + $0x4] sm:$0xf]
        %v2404 = vld [vmem:[#allocation15 + $0x8] sm:$0xf]
        %v2405 = vld [vmem:[#allocation15 + $0xc] sm:$0xf]
        %v2406 = vld [vmem:[#allocation15 + $0x10] sm:$0xf]
        %v2407 = vld [vmem:[#allocation15 + $0x14] sm:$0xf]
        %v2408 = vld [vmem:[#allocation15 + $0x18] sm:$0xf]
        %v2409 = vld [vmem:[#allocation15 + $0x1c] sm:$0xf]
        %v2410 = vld [vmem:[#allocation17] sm:$0x1]
        %v2412 = vlaneseq
        %v2413 = vshrl.u32 %v2412, 7
        %v2414 = vsub.s32 0, %v2413
        %v2415 = vrot.slane %v2410, %v2414
        %v2425 = vunpack.c.l.b16 %v2402
        %v2426 = vunpack.c.l.b16 %v2403
        %v2427 = vunpack.c.l.b16 %v2404
        %v2428 = vunpack.c.l.b16 %v2405
        %v2429 = vunpack.c.l.b16 %v2406
        %v2430 = vunpack.c.l.b16 %v2407
        %v2431 = vunpack.c.l.b16 %v2408
        %v2432 = vunpack.c.l.b16 %v2409
        %v2433 = vpack.c.b16 %v2426, %v2425
        %v2434 = vpack.c.b16 %v2428, %v2427
        %v2435 = vpack.c.b16 %v2430, %v2429
        %v2436 = vpack.c.b16 %v2432, %v2431
        %v2442 = vsel %vm865, %v2400, 0
        %v2445 = vsel %vm865, %v2401, 0
        %2447 = vmatprep.subr.bf16.mxu0 0
        %2448 = vmatpush1.bf16.msra.mxu0 %v2433
        %2449 = vmatprep.subr.bf16.mxu0 0
        %2450 = vmatpush1.bf16.msra.mxu0 %v2434
        %2451 = vmatprep.subr.bf16.mxu0 0
        %2452 = vmatpush1.bf16.msra.mxu0 %v2435
        %2453 = vmatprep.subr.bf16.mxu0 0
        %2454 = vmatpush1.bf16.msra.mxu0 %v2436
        %2455 = vmatprep.subr.bf16.mxu0 0
        %2456 = vmatpush1.bf16.msra.mxu0 0
        %2457 = vmatprep.subr.bf16.mxu0 0
        %2458 = vmatpush1.bf16.msra.mxu0 0
        %2459 = vmatprep.subr.bf16.mxu0 0
        %2460 = vmatpush1.bf16.msra.mxu0 0
        %2461 = vmatprep.subr.bf16.mxu0 0
        %2462 = vmatpush1.bf16.msra.mxu0 0
        %2463 = vmatprep.subr.bf16.mxu0 0
        %2464 = vmatpush1.bf16.msra.mxu0 0
        %2465 = vmatprep.subr.bf16.mxu0 0
        %2466 = vmatpush1.bf16.msra.mxu0 0
        %2467 = vmatprep.subr.bf16.mxu0 0
        %2468 = vmatpush1.bf16.msra.mxu0 0
        %2469 = vmatprep.subr.bf16.mxu0 0
        %2470 = vmatpush1.bf16.msra.mxu0 0
        %2471 = vmatprep.subr.bf16.mxu0 0
        %2472 = vmatpush1.bf16.msra.mxu0 0
        %2473 = vmatprep.subr.bf16.mxu0 0
        %2474 = vmatpush1.bf16.msra.mxu0 0
        %2475 = vmatprep.subr.bf16.mxu0 0
        %2476 = vmatpush1.bf16.msra.mxu0 0
        %2477 = vmatprep.subr.bf16.mxu0 0
        %2478 = vmatpush1.bf16.msra.mxu0 0
        %2479 = vmatprep.mubr.bf16.mxu0 0
        %2480 = vmatmul.mubr.bf16.gmra.mrb[0].mxu0 %v2442
        %v2481 = vpop.f32.mrb[0].mxu0
        %v2482 = vadd.f32 %v2415, %v2481
        %v2483 = vpop.f32.mrb[0].mxu0
        %v2484 = vpop.f32.mrb[0].mxu0
        %v2485 = vadd.f32 %v2415, %v2484
        %v2486 = vpop.f32.mrb[0].mxu0
        %2487 = vmatprep.mubr.bf16.mxu0 0
        %2488 = vmatmul.mubr.bf16.gmra.mrb[0].mxu0 %v2445
        %v2489 = vpop.f32.mrb[0].mxu0
        %v2490 = vadd.f32 %v2415, %v2489
        %v2491 = vpop.f32.mrb[0].mxu0
        %v2492 = vpop.f32.mrb[0].mxu0
        %v2493 = vpop.f32.mrb[0].mxu0
        %2494 = vdwg.mxu0
        %v2495 = vmul.f32 %v2482, 1.702
        %v2496 = vmul.f32 %v2485, 1.702
        %v2497 = vmul.f32 %v2490, 1.702
        %v2498 = vxor.u32 %v2495, 2147483648
        %v2499 = vxor.u32 %v2496, 2147483648
        %v2500 = vxor.u32 %v2497, 2147483648
        %v2501 = vmul.f32 %v2498, 1.442695
        %v2502 = vpow.pop %v2501
        %v2503 = vmul.f32 %v2499, 1.442695
        %v2504 = vpow.pop %v2503
        %v2505 = vmul.f32 %v2500, 1.442695
        %v2506 = vpow.pop %v2505
        %v2507 = vadd.f32 %v2502, 1.0
        %v2508 = vadd.f32 %v2504, 1.0
        %v2509 = vadd.f32 %v2506, 1.0
        %v2510 = vrcp.pop %v2507
        %v2511 = vmul.f32 1.0, %v2510
        %v2512 = vrcp.pop %v2508
        %v2513 = vmul.f32 1.0, %v2512
        %v2514 = vrcp.pop %v2509
        %v2515 = vmul.f32 1.0, %v2514
        %v2516 = vmul.f32 %v2482, %v2511
        %v2517 = vmul.f32 %v2485, %v2513
        %v2518 = vmul.f32 %v2490, %v2515
        %v2519 = vpack.c.bf16 %v2517, %v2516
        %v2520 = vpack.c.bf16 %v2518, %v2518
        %v2521 = vld [vmem:[%s15] sm:$0xf]
        %v2522 = vld [vmem:[%s15 + $0x4] sm:$0xf]
        %v2523 = vld [vmem:[%s15 + $0x8] sm:$0xf]
        %v2524 = vld [vmem:[%s15 + $0xc] sm:$0xf]
        %v2525 = vld [vmem:[%s15 + $0x10] sm:$0xf]
        %v2526 = vld [vmem:[%s15 + $0x14] sm:$0xf]
        %v2527 = vld [vmem:[%s15 + $0x18] sm:$0xf]
        %v2528 = vld [vmem:[%s15 + $0x1c] sm:$0xf]
        %v2529 = vld [vmem:[%s15 + $0x20] sm:$0xf]
        %v2530 = vld [vmem:[%s15 + $0x24] sm:$0xf]
        %v2531 = vld [vmem:[%s15 + $0x28] sm:$0xf]
        %v2532 = vld [vmem:[%s15 + $0x2c] sm:$0xf]
        %v2533 = vld [vmem:[%s15 + $0x30] sm:$0xf]
        %v2534 = vld [vmem:[%s15 + $0x34] sm:$0xf]
        %v2535 = vld [vmem:[%s15 + $0x38] sm:$0xf]
        %v2536 = vld [vmem:[%s15 + $0x3c] sm:$0xf]
        %v2537 = vld [vmem:[%s16] sm:$0x1]
        %v2539 = vlaneseq
        %v2540 = vshrl.u32 %v2539, 7
        %v2541 = vsub.s32 0, %v2540
        %v2542 = vrot.slane %v2537, %v2541
        %v2560 = vunpack.c.l.b16 %v2521
        %v2561 = vunpack.c.l.b16 %v2522
        %v2562 = vunpack.c.l.b16 %v2523
        %v2563 = vunpack.c.l.b16 %v2524
        %v2564 = vunpack.c.l.b16 %v2525
        %v2565 = vunpack.c.l.b16 %v2526
        %v2566 = vunpack.c.l.b16 %v2527
        %v2567 = vunpack.c.l.b16 %v2528
        %v2568 = vunpack.c.l.b16 %v2529
        %v2569 = vunpack.c.l.b16 %v2530
        %v2570 = vunpack.c.l.b16 %v2531
        %v2571 = vunpack.c.l.b16 %v2532
        %v2572 = vunpack.c.l.b16 %v2533
        %v2573 = vunpack.c.l.b16 %v2534
        %v2574 = vunpack.c.l.b16 %v2535
        %v2575 = vunpack.c.l.b16 %v2536
        %v2576 = vpack.c.b16 %v2561, %v2560
        %v2577 = vpack.c.b16 %v2563, %v2562
        %v2578 = vpack.c.b16 %v2565, %v2564
        %v2579 = vpack.c.b16 %v2567, %v2566
        %v2580 = vpack.c.b16 %v2569, %v2568
        %v2581 = vpack.c.b16 %v2571, %v2570
        %v2582 = vpack.c.b16 %v2573, %v2572
        %v2583 = vpack.c.b16 %v2575, %v2574
        %2592 = vmatprep.subr.bf16.mxu0 0
        %2593 = vmatpush1.bf16.msra.mxu0 %v2576
        %2594 = vmatprep.subr.bf16.mxu0 0
        %2595 = vmatpush1.bf16.msra.mxu0 %v2577
        %2596 = vmatprep.subr.bf16.mxu0 0
        %2597 = vmatpush1.bf16.msra.mxu0 %v2578
        %2598 = vmatprep.subr.bf16.mxu0 0
        %2599 = vmatpush1.bf16.msra.mxu0 %v2579
        %2600 = vmatprep.subr.bf16.mxu0 0
        %2601 = vmatpush1.bf16.msra.mxu0 %v2580
        %2602 = vmatprep.subr.bf16.mxu0 0
        %2603 = vmatpush1.bf16.msra.mxu0 %v2581
        %2604 = vmatprep.subr.bf16.mxu0 0
        %2605 = vmatpush1.bf16.msra.mxu0 %v2582
        %2606 = vmatprep.subr.bf16.mxu0 0
        %2607 = vmatpush1.bf16.msra.mxu0 %v2583
        %2608 = vmatprep.subr.bf16.mxu0 0
        %2609 = vmatpush1.bf16.msra.mxu0 0
        %2610 = vmatprep.subr.bf16.mxu0 0
        %2611 = vmatpush1.bf16.msra.mxu0 0
        %2612 = vmatprep.subr.bf16.mxu0 0
        %2613 = vmatpush1.bf16.msra.mxu0 0
        %2614 = vmatprep.subr.bf16.mxu0 0
        %2615 = vmatpush1.bf16.msra.mxu0 0
        %2616 = vmatprep.subr.bf16.mxu0 0
        %2617 = vmatpush1.bf16.msra.mxu0 0
        %2618 = vmatprep.subr.bf16.mxu0 0
        %2619 = vmatpush1.bf16.msra.mxu0 0
        %2620 = vmatprep.subr.bf16.mxu0 0
        %2621 = vmatpush1.bf16.msra.mxu0 0
        %2622 = vmatprep.subr.bf16.mxu0 0
        %2623 = vmatpush1.bf16.msra.mxu0 0
        %2624 = vmatprep.mubr.bf16.mxu0 0
        %2625 = vmatmul.mubr.bf16.gmra.mrb[0].mxu0 %v2519
        %v2626 = vpop.f32.mrb[0].mxu0
        %v2627 = vadd.f32 %v2542, %v2626
        %v2628 = vpop.f32.mrb[0].mxu0
        %v2629 = vpop.f32.mrb[0].mxu0
        %v2630 = vadd.f32 %v2542, %v2629
        %v2631 = vpop.f32.mrb[0].mxu0
        %2632 = vmatprep.mubr.bf16.mxu0 0
        %2633 = vmatmul.mubr.bf16.gmra.mrb[0].mxu0 %v2520
        %v2634 = vpop.f32.mrb[0].mxu0
        %v2635 = vadd.f32 %v2542, %v2634
        %v2636 = vpop.f32.mrb[0].mxu0
        %v2637 = vpop.f32.mrb[0].mxu0
        %v2638 = vpop.f32.mrb[0].mxu0
        %2639 = vdwg.mxu0
        %v2640 = vadd.f32 %v2338, %v2627
        %v2641 = vadd.f32 %v2339, %v2630
        %v2642 = vadd.f32 %v2340, %v2635
        %s2643 = scalar_lea.vmem %s5, 1
        %v2644 = vld [vmem:[%s2643] sm:$0x1]
        %s2645 = scalar_lea.vmem [#allocation8], 1
        %v2646 = vld [vmem:[%s2645] sm:$0x1]
        %v2647 = vsel %vm865, %v2640, 0.0
        %2648 = vadd.xlane.f32.xlu0 %v2647
        %v2649 = vpop.xlane.xlu0 %2648
        %v2650 = vsel %vm865, %v2641, 0.0
        %2651 = vadd.xlane.f32.xlu0 %v2650
        %v2652 = vpop.xlane.xlu0 %2651
        %v2653 = vsel %vm872, %v2642, 0.0
        %2654 = vadd.xlane.f32.xlu0 %v2653
        %v2655 = vpop.xlane.xlu0 %2654
        %v2656 = vmul.f32 %v2649, %v876
        %v2657 = vmul.f32 %v2652, %v876
        %v2658 = vmul.f32 %v2655, %v876
        %v2659 = vsub.f32 %v2640, %v2656
        %v2660 = vsub.f32 %v2641, %v2657
        %v2661 = vsub.f32 %v2642, %v2658
        %v2662 = vmul.f32 %v2659, %v2659
        %v2663 = vmul.f32 %v2660, %v2660
        %v2664 = vmul.f32 %v2661, %v2661
        %v2665 = vsel %vm865, %v2662, 0.0
        %2666 = vadd.xlane.f32.xlu0 %v2665
        %v2667 = vpop.xlane.xlu0 %2666
        %v2668 = vsel %vm865, %v2663, 0.0
        %2669 = vadd.xlane.f32.xlu0 %v2668
        %v2670 = vpop.xlane.xlu0 %2669
        %v2671 = vsel %vm872, %v2664, 0.0
        %2672 = vadd.xlane.f32.xlu0 %v2671
        %v2673 = vpop.xlane.xlu0 %2672
        %v2674 = vmul.f32 %v2667, %v876
        %v2675 = vmul.f32 %v2670, %v876
        %v2676 = vmul.f32 %v2673, %v876
        %v2677 = vadd.f32 %v2674, 1e-05
        %v2678 = vadd.f32 %v2675, 1e-05
        %v2679 = vadd.f32 %v2676, 1e-05
        %v2680 = vrsqrt.pop %v2677
        %v2681 = vrsqrt.pop %v2678
        %v2682 = vrsqrt.pop %v2679
        %v2683 = vmul.f32 %v2659, %v2680
        %v2684 = vmul.f32 %v2660, %v2681
        %v2685 = vmul.f32 %v2661, %v2682
        %v2687 = vlaneseq
        %v2688 = vshrl.u32 %v2687, 7
        %v2689 = vsub.s32 0, %v2688
        %v2690 = vrot.slane %v2644, %v2689
        %v2692 = vmul.f32 %v2683, %v2690
        %v2693 = vmul.f32 %v2684, %v2690
        %v2694 = vmul.f32 %v2685, %v2690
        %v2696 = vlaneseq
        %v2697 = vshrl.u32 %v2696, 7
        %v2698 = vsub.s32 0, %v2697
        %v2699 = vrot.slane %v2646, %v2698
        %v2701 = vadd.f32 %v2692, %v2699
        %v2702 = vadd.f32 %v2693, %v2699
        %v2703 = vadd.f32 %v2694, %v2699
        %v2704 = vpack.c.bf16 %v2702, %v2701
        %v2705 = vpack.c.bf16 %v2703, %v2703
        %s2706 = scalar_lea.vmem %s7, 96
        %v2707 = vld [vmem:[%s2706] sm:$0xff]
        %v2708 = vld [vmem:[%s2706 + $0x8] sm:$0xf]
        %v2709 = vld [vmem:[%s2706 + $0xc] sm:$0xff]
        %v2710 = vld [vmem:[%s2706 + $0x14] sm:$0xf]
        %v2711 = vld [vmem:[%s2706 + $0x18] sm:$0xff]
        %v2712 = vld [vmem:[%s2706 + $0x20] sm:$0xf]
        %v2713 = vld [vmem:[%s2706 + $0x24] sm:$0xff]
        %v2714 = vld [vmem:[%s2706 + $0x2c] sm:$0xf]
        %v2715 = vld [vmem:[%s2706 + $0x30] sm:$0xff]
        %v2716 = vld [vmem:[%s2706 + $0x38] sm:$0xf]
        %v2717 = vld [vmem:[%s2706 + $0x3c] sm:$0xff]
        %v2718 = vld [vmem:[%s2706 + $0x44] sm:$0xf]
        %v2719 = vld [vmem:[%s2706 + $0x48] sm:$0xff]
        %v2720 = vld [vmem:[%s2706 + $0x50] sm:$0xf]
        %v2721 = vld [vmem:[%s2706 + $0x54] sm:$0xff]
        %v2722 = vld [vmem:[%s2706 + $0x5c] sm:$0xf]
        %s2723 = scalar_lea.vmem %s8, 3
        %v2724 = vld [vmem:[%s2723] sm:$0x7]
        %v2726 = vlaneseq
        %v2727 = vshrl.u32 %v2726, 7
        %v2728 = vsub.s32 0, %v2727
        %v2729 = vrot.slane %v2724, %v2728
        %v2730 = vlaneseq
        %v2731 = vshrl.u32 %v2730, 7
        %v2732 = vsub.s32 1, %v2731
        %v2733 = vrot.slane %v2724, %v2732
        %v2734 = vlaneseq
        %v2735 = vshrl.u32 %v2734, 7
        %v2736 = vsub.s32 2, %v2735
        %v2737 = vrot.slane %v2724, %v2736
        %v2757 = vunpack.c.l.b16 %v2707
        %v2758 = vunpack.c.h.b16 %v2707
        %v2759 = vunpack.c.l.b16 %v2708
        %v2760 = vunpack.c.l.b16 %v2709
        %v2761 = vunpack.c.h.b16 %v2709
        %v2762 = vunpack.c.l.b16 %v2710
        %v2763 = vunpack.c.l.b16 %v2711
        %v2764 = vunpack.c.h.b16 %v2711
        %v2765 = vunpack.c.l.b16 %v2712
        %v2766 = vunpack.c.l.b16 %v2713
        %v2767 = vunpack.c.h.b16 %v2713
        %v2768 = vunpack.c.l.b16 %v2714
        %v2769 = vunpack.c.l.b16 %v2715
        %v2770 = vunpack.c.h.b16 %v2715
        %v2771 = vunpack.c.l.b16 %v2716
        %v2772 = vunpack.c.l.b16 %v2717
        %v2773 = vunpack.c.h.b16 %v2717
        %v2774 = vunpack.c.l.b16 %v2718
        %v2775 = vunpack.c.l.b16 %v2719
        %v2776 = vunpack.c.h.b16 %v2719
        %v2777 = vunpack.c.l.b16 %v2720
        %v2778 = vunpack.c.l.b16 %v2721
        %v2779 = vunpack.c.h.b16 %v2721
        %v2780 = vunpack.c.l.b16 %v2722
        %v2781 = vpack.c.b16 %v2760, %v2757
        %v2782 = vpack.c.b16 %v2761, %v2758
        %v2783 = vpack.c.b16 %v2762, %v2759
        %v2784 = vpack.c.b16 %v2766, %v2763
        %v2785 = vpack.c.b16 %v2767, %v2764
        %v2786 = vpack.c.b16 %v2768, %v2765
        %v2787 = vpack.c.b16 %v2772, %v2769
        %v2788 = vpack.c.b16 %v2773, %v2770
        %v2789 = vpack.c.b16 %v2774, %v2771
        %v2790 = vpack.c.b16 %v2778, %v2775
        %v2791 = vpack.c.b16 %v2779, %v2776
        %v2792 = vpack.c.b16 %v2780, %v2777
        %v2806 = vsel %vm865, %v2704, 0
        %v2809 = vsel %vm865, %v2705, 0
        %2811 = vmatprep.subr.bf16.mxu0 %v2782
        %2812 = vmatpush1.bf16.msra.mxu0 %v2781
        %2813 = vmatprep.subr.bf16.mxu0 %v2785
        %2814 = vmatpush1.bf16.msra.mxu0 %v2784
        %2815 = vmatprep.subr.bf16.mxu0 %v2788
        %2816 = vmatpush1.bf16.msra.mxu0 %v2787
        %2817 = vmatprep.subr.bf16.mxu0 %v2791
        %2818 = vmatpush1.bf16.msra.mxu0 %v2790
        %2819 = vmatprep.subr.bf16.mxu0 0
        %2820 = vmatpush1.bf16.msra.mxu0 0
        %2821 = vmatprep.subr.bf16.mxu0 0
        %2822 = vmatpush1.bf16.msra.mxu0 0
        %2823 = vmatprep.subr.bf16.mxu0 0
        %2824 = vmatpush1.bf16.msra.mxu0 0
        %2825 = vmatprep.subr.bf16.mxu0 0
        %2826 = vmatpush1.bf16.msra.mxu0 0
        %2827 = vmatprep.subr.bf16.mxu0 0
        %2828 = vmatpush1.bf16.msra.mxu0 0
        %2829 = vmatprep.subr.bf16.mxu0 0
        %2830 = vmatpush1.bf16.msra.mxu0 0
        %2831 = vmatprep.subr.bf16.mxu0 0
        %2832 = vmatpush1.bf16.msra.mxu0 0
        %2833 = vmatprep.subr.bf16.mxu0 0
        %2834 = vmatpush1.bf16.msra.mxu0 0
        %2835 = vmatprep.subr.bf16.mxu0 0
        %2836 = vmatpush1.bf16.msra.mxu0 0
        %2837 = vmatprep.subr.bf16.mxu0 0
        %2838 = vmatpush1.bf16.msra.mxu0 0
        %2839 = vmatprep.subr.bf16.mxu0 0
        %2840 = vmatpush1.bf16.msra.mxu0 0
        %2841 = vmatprep.subr.bf16.mxu0 0
        %2842 = vmatpush1.bf16.msra.mxu0 0
        %2843 = vmatprep.mubr.bf16.mxu0 0
        %2844 = vmatmul.mubr.bf16.gmra.mrb[0].mxu0 %v2806
        %v2845 = vpop.f32.mrb[0].mxu0
        %v2846 = vadd.f32 %v2729, %v2845
        %v2847 = vpop.f32.mrb[0].mxu0
        %v2848 = vadd.f32 %v2733, %v2847
        %v2849 = vpop.f32.mrb[0].mxu0
        %v2850 = vadd.f32 %v2729, %v2849
        %v2851 = vpop.f32.mrb[0].mxu0
        %v2852 = vadd.f32 %v2733, %v2851
        %2853 = vmatprep.mubr.bf16.mxu0 0
        %2854 = vmatmul.mubr.bf16.gmra.mrb[0].mxu0 %v2809
        %v2855 = vpop.f32.mrb[0].mxu0
        %v2856 = vadd.f32 %v2729, %v2855
        %v2857 = vpop.f32.mrb[0].mxu0
        %v2858 = vadd.f32 %v2733, %v2857
        %v2859 = vpop.f32.mrb[0].mxu0
        %v2860 = vpop.f32.mrb[0].mxu0
        %2861 = vdwg.mxu0
        %2862 = vmatprep.subr.bf16.mxu0 0
        %2863 = vmatpush1.bf16.msra.mxu0 %v2783
        %2864 = vmatprep.subr.bf16.mxu0 0
        %2865 = vmatpush1.bf16.msra.mxu0 %v2786
        %2866 = vmatprep.subr.bf16.mxu0 0
        %2867 = vmatpush1.bf16.msra.mxu0 %v2789
        %2868 = vmatprep.subr.bf16.mxu0 0
        %2869 = vmatpush1.bf16.msra.mxu0 %v2792
        %2870 = vmatprep.subr.bf16.mxu0 0
        %2871 = vmatpush1.bf16.msra.mxu0 0
        %2872 = vmatprep.subr.bf16.mxu0 0
        %2873 = vmatpush1.bf16.msra.mxu0 0
        %2874 = vmatprep.subr.bf16.mxu0 0
        %2875 = vmatpush1.bf16.msra.mxu0 0
        %2876 = vmatprep.subr.bf16.mxu0 0
        %2877 = vmatpush1.bf16.msra.mxu0 0
        %2878 = vmatprep.subr.bf16.mxu0 0
        %2879 = vmatpush1.bf16.msra.mxu0 0
        %2880 = vmatprep.subr.bf16.mxu0 0
        %2881 = vmatpush1.bf16.msra.mxu0 0
        %2882 = vmatprep.subr.bf16.mxu0 0
        %2883 = vmatpush1.bf16.msra.mxu0 0
        %2884 = vmatprep.subr.bf16.mxu0 0
        %2885 = vmatpush1.bf16.msra.mxu0 0
        %2886 = vmatprep.subr.bf16.mxu0 0
        %2887 = vmatpush1.bf16.msra.mxu0 0
        %2888 = vmatprep.subr.bf16.mxu0 0
        %2889 = vmatpush1.bf16.msra.mxu0 0
        %2890 = vmatprep.subr.bf16.mxu0 0
        %2891 = vmatpush1.bf16.msra.mxu0 0
        %2892 = vmatprep.subr.bf16.mxu0 0
        %2893 = vmatpush1.bf16.msra.mxu0 0
        %2894 = vmatprep.mubr.bf16.mxu0 0
        %2895 = vmatmul.mubr.bf16.gmra.mrb[0].mxu0 %v2806
        %v2896 = vpop.f32.mrb[0].mxu0
        %v2897 = vadd.f32 %v2737, %v2896
        %v2898 = vpop.f32.mrb[0].mxu0
        %v2899 = vpop.f32.mrb[0].mxu0
        %v2900 = vadd.f32 %v2737, %v2899
        %v2901 = vpop.f32.mrb[0].mxu0
        %2902 = vmatprep.mubr.bf16.mxu0 0
        %2903 = vmatmul.mubr.bf16.gmra.mrb[0].mxu0 %v2809
        %v2904 = vpop.f32.mrb[0].mxu0
        %v2905 = vadd.f32 %v2737, %v2904
        %v2906 = vpop.f32.mrb[0].mxu0
        %v2907 = vpop.f32.mrb[0].mxu0
        %v2908 = vpop.f32.mrb[0].mxu0
        %2909 = vdwg.mxu0
        %v2910 = vmul.f32 %v2846, 0.25
        %v2911 = vmul.f32 %v2850, 0.25
        %v2912 = vmul.f32 %v2856, 0.25
        %v2914 = vsel %vm1191, %v2910, 0
        %v2917 = vsel %vm1191, %v2911, 0
        %v2920 = vsel %vm1191, %v2912, 0
        %v2923 = vsel %vm1191, %v2848, 0
        %v2926 = vsel %vm1191, %v2852, 0
        %v2929 = vsel %vm1191, %v2858, 0
        %2931 = vmatprep.subr.mxu0 0.0
        %2932 = vmatpush1.xpose.msra.mxu0 %v2923
        %2933 = vmatprep.subr.mxu0 0.0
        %2934 = vmatpush1.xpose.msra.mxu0 %v2926
        %2935 = vmatprep.subr.mxu0 0.0
        %2936 = vmatpush1.xpose.msra.mxu0 %v2929
        %2937 = vmatprep.subr.mxu0 0.0
        %2938 = vmatpush1.xpose.msra.mxu0 0.0
        %2939 = vmatprep.subr.mxu0 0.0
        %2940 = vmatpush1.xpose.msra.mxu0 0.0
        %2941 = vmatprep.subr.mxu0 0.0
        %2942 = vmatpush1.xpose.msra.mxu0 0.0
        %2943 = vmatprep.subr.mxu0 0.0
        %2944 = vmatpush1.xpose.msra.mxu0 0.0
        %2945 = vmatprep.subr.mxu0 0.0
        %2946 = vmatpush1.xpose.msra.mxu0 0.0
        %2947 = vmatprep.subr.mxu0 0.0
        %2948 = vmatpush1.xpose.msra.mxu0 0.0
        %2949 = vmatprep.subr.mxu0 0.0
        %2950 = vmatpush1.xpose.msra.mxu0 0.0
        %2951 = vmatprep.subr.mxu0 0.0
        %2952 = vmatpush1.xpose.msra.mxu0 0.0
        %2953 = vmatprep.subr.mxu0 0.0
        %2954 = vmatpush1.xpose.msra.mxu0 0.0
        %2955 = vmatprep.subr.mxu0 0.0
        %2956 = vmatpush1.xpose.msra.mxu0 0.0
        %2957 = vmatprep.subr.mxu0 0.0
        %2958 = vmatpush1.xpose.msra.mxu0 0.0
        %2959 = vmatprep.subr.mxu0 0.0
        %2960 = vmatpush1.xpose.msra.mxu0 0.0
        %2961 = vmatprep.subr.mxu0 0.0
        %2962 = vmatpush1.xpose.msra.mxu0 0.0
        %2963 = vmatprep.subr.mxu0 0.0
        %2964 = vmatpush1.xpose.msra.mxu0 0.0
        %2965 = vmatprep.subr.mxu0 0.0
        %2966 = vmatpush1.xpose.msra.mxu0 0.0
        %2967 = vmatprep.subr.mxu0 0.0
        %2968 = vmatpush1.xpose.msra.mxu0 0.0
        %2969 = vmatprep.subr.mxu0 0.0
        %2970 = vmatpush1.xpose.msra.mxu0 0.0
        %2971 = vmatprep.subr.mxu0 0.0
        %2972 = vmatpush1.xpose.msra.mxu0 0.0
        %2973 = vmatprep.subr.mxu0 0.0
        %2974 = vmatpush1.xpose.msra.mxu0 0.0
        %2975 = vmatprep.subr.mxu0 0.0
        %2976 = vmatpush1.xpose.msra.mxu0 0.0
        %2977 = vmatprep.subr.mxu0 0.0
        %2978 = vmatpush1.xpose.msra.mxu0 0.0
        %2979 = vmatprep.subr.mxu0 0.0
        %2980 = vmatpush1.xpose.msra.mxu0 0.0
        %2981 = vmatprep.subr.mxu0 0.0
        %2982 = vmatpush1.xpose.msra.mxu0 0.0
        %2983 = vmatprep.subr.mxu0 0.0
        %2984 = vmatpush1.xpose.msra.mxu0 0.0
        %2985 = vmatprep.subr.mxu0 0.0
        %2986 = vmatpush1.xpose.msra.mxu0 0.0
        %2987 = vmatprep.subr.mxu0 0.0
        %2988 = vmatpush1.xpose.msra.mxu0 0.0
        %2989 = vmatprep.subr.mxu0 0.0
        %2990 = vmatpush1.xpose.msra.mxu0 0.0
        %2991 = vmatprep.subr.mxu0 0.0
        %2992 = vmatpush1.xpose.msra.mxu0 0.0
        %2993 = vmatprep.subr.mxu0 0.0
        %2994 = vmatpush1.xpose.msra.mxu0 0.0
        %2995 = vmatprep.mubr.f32.mxu0 0.0
        %2996 = vmatmul.mubr.f32.gmra.mrb[0].mxu0 %v2914
        %v2997 = vpop.f32.mrb[0].mxu0
        %v2998 = vadd.f32 0.0, %v2997
        %v2999 = vpop.f32.mrb[0].mxu0
        %3000 = vmatprep.mubr.f32.mxu0 0.0
        %3001 = vmatmul.mubr.f32.gmra.mrb[0].mxu0 %v2917
        %v3002 = vpop.f32.mrb[0].mxu0
        %v3003 = vadd.f32 0.0, %v3002
        %v3004 = vpop.f32.mrb[0].mxu0
        %3005 = vmatprep.mubr.f32.mxu0 0.0
        %3006 = vmatmul.mubr.f32.gmra.mrb[0].mxu0 %v2920
        %v3007 = vpop.f32.mrb[0].mxu0
        %v3008 = vadd.f32 0.0, %v3007
        %v3009 = vpop.f32.mrb[0].mxu0
        %3010 = vdwg.mxu0
        %v3011 = vsel %vm1290, %v2998, -inf
        %3012 = vmax.xlane.f32.xlu0 %v3011
        %v3013 = vpop.xlane.xlu0 %3012
        %v3014 = vsel %vm1290, %v3003, -inf
        %3015 = vmax.xlane.f32.xlu0 %v3014
        %v3016 = vpop.xlane.xlu0 %3015
        %v3017 = vsel %vm1297, %v3008, -inf
        %3018 = vmax.xlane.f32.xlu0 %v3017
        %v3019 = vpop.xlane.xlu0 %3018
        %v3020 = vsub.f32 %v2998, %v3013
        %v3021 = vsub.f32 %v3003, %v3016
        %v3022 = vsub.f32 %v3008, %v3019
        %v3023 = vmul.f32 %v3020, 1.442695
        %v3024 = vpow.pop %v3023
        %v3025 = vmul.f32 %v3021, 1.442695
        %v3026 = vpow.pop %v3025
        %v3027 = vmul.f32 %v3022, 1.442695
        %v3028 = vpow.pop %v3027
        %v3029 = vsel %vm1290, %v3024, 0.0
        %3030 = vadd.xlane.f32.xlu0 %v3029
        %v3031 = vpop.xlane.xlu0 %3030
        %v3032 = vsel %vm1290, %v3026, 0.0
        %3033 = vadd.xlane.f32.xlu0 %v3032
        %v3034 = vpop.xlane.xlu0 %3033
        %v3035 = vsel %vm1297, %v3028, 0.0
        %3036 = vadd.xlane.f32.xlu0 %v3035
        %v3037 = vpop.xlane.xlu0 %3036
        %v3038 = vrcp.pop %v3031
        %v3039 = vrcp.pop %v3034
        %v3040 = vrcp.pop %v3037
        %v3041 = vmul.f32 %v3024, %v3038
        %v3042 = vmul.f32 %v3026, %v3039
        %v3043 = vmul.f32 %v3028, %v3040
        %v3045 = vsel %vm1290, %v3041, 0
        %v3048 = vsel %vm1290, %v3042, 0
        %v3051 = vsel %vm1290, %v3043, 0
        %v3054 = vsel %vm1334, %v2905, 0
        %3056 = vmatprep.subr.mxu0 0.0
        %3057 = vmatpush1.msra.mxu0 %v2897
        %3058 = vmatprep.subr.mxu0 0.0
        %3059 = vmatpush1.msra.mxu0 %v2900
        %3060 = vmatprep.subr.mxu0 0.0
        %3061 = vmatpush1.msra.mxu0 %v3054
        %3062 = vmatprep.subr.mxu0 0.0
        %3063 = vmatpush1.msra.mxu0 0.0
        %3064 = vmatprep.subr.mxu0 0.0
        %3065 = vmatpush1.msra.mxu0 0.0
        %3066 = vmatprep.subr.mxu0 0.0
        %3067 = vmatpush1.msra.mxu0 0.0
        %3068 = vmatprep.subr.mxu0 0.0
        %3069 = vmatpush1.msra.mxu0 0.0
        %3070 = vmatprep.subr.mxu0 0.0
        %3071 = vmatpush1.msra.mxu0 0.0
        %3072 = vmatprep.subr.mxu0 0.0
        %3073 = vmatpush1.msra.mxu0 0.0
        %3074 = vmatprep.subr.mxu0 0.0
        %3075 = vmatpush1.msra.mxu0 0.0
        %3076 = vmatprep.subr.mxu0 0.0
        %3077 = vmatpush1.msra.mxu0 0.0
        %3078 = vmatprep.subr.mxu0 0.0
        %3079 = vmatpush1.msra.mxu0 0.0
        %3080 = vmatprep.subr.mxu0 0.0
        %3081 = vmatpush1.msra.mxu0 0.0
        %3082 = vmatprep.subr.mxu0 0.0
        %3083 = vmatpush1.msra.mxu0 0.0
        %3084 = vmatprep.subr.mxu0 0.0
        %3085 = vmatpush1.msra.mxu0 0.0
        %3086 = vmatprep.subr.mxu0 0.0
        %3087 = vmatpush1.msra.mxu0 0.0
        %3088 = vmatprep.subr.mxu0 0.0
        %3089 = vmatpush1.msra.mxu0 0.0
        %3090 = vmatprep.subr.mxu0 0.0
        %3091 = vmatpush1.msra.mxu0 0.0
        %3092 = vmatprep.subr.mxu0 0.0
        %3093 = vmatpush1.msra.mxu0 0.0
        %3094 = vmatprep.subr.mxu0 0.0
        %3095 = vmatpush1.msra.mxu0 0.0
        %3096 = vmatprep.subr.mxu0 0.0
        %3097 = vmatpush1.msra.mxu0 0.0
        %3098 = vmatprep.subr.mxu0 0.0
        %3099 = vmatpush1.msra.mxu0 0.0
        %3100 = vmatprep.subr.mxu0 0.0
        %3101 = vmatpush1.msra.mxu0 0.0
        %3102 = vmatprep.subr.mxu0 0.0
        %3103 = vmatpush1.msra.mxu0 0.0
        %3104 = vmatprep.subr.mxu0 0.0
        %3105 = vmatpush1.msra.mxu0 0.0
        %3106 = vmatprep.subr.mxu0 0.0
        %3107 = vmatpush1.msra.mxu0 0.0
        %3108 = vmatprep.subr.mxu0 0.0
        %3109 = vmatpush1.msra.mxu0 0.0
        %3110 = vmatprep.subr.mxu0 0.0
        %3111 = vmatpush1.msra.mxu0 0.0
        %3112 = vmatprep.subr.mxu0 0.0
        %3113 = vmatpush1.msra.mxu0 0.0
        %3114 = vmatprep.subr.mxu0 0.0
        %3115 = vmatpush1.msra.mxu0 0.0
        %3116 = vmatprep.subr.mxu0 0.0
        %3117 = vmatpush1.msra.mxu0 0.0
        %3118 = vmatprep.subr.mxu0 0.0
        %3119 = vmatpush1.msra.mxu0 0.0
        %3120 = vmatprep.mubr.f32.mxu0 0.0
        %3121 = vmatmul.mubr.f32.gmra.mrb[0].mxu0 %v3045
        %v3122 = vpop.f32.mrb[0].mxu0
        %v3123 = vadd.f32 0.0, %v3122
        %v3124 = vpop.f32.mrb[0].mxu0
        %3125 = vmatprep.mubr.f32.mxu0 0.0
        %3126 = vmatmul.mubr.f32.gmra.mrb[0].mxu0 %v3048
        %v3127 = vpop.f32.mrb[0].mxu0
        %v3128 = vadd.f32 0.0, %v3127
        %v3129 = vpop.f32.mrb[0].mxu0
        %3130 = vmatprep.mubr.f32.mxu0 0.0
        %3131 = vmatmul.mubr.f32.gmra.mrb[0].mxu0 %v3051
        %v3132 = vpop.f32.mrb[0].mxu0
        %v3133 = vadd.f32 0.0, %v3132
        %v3134 = vpop.f32.mrb[0].mxu0
        %3135 = vdwg.mxu0
        %v3136 = vpack.c.bf16 %v3128, %v3123
        %v3137 = vpack.c.bf16 %v3133, %v3133
        %v3140 = vunpack.c.l.b16 %v3136
        %v3141 = vunpack.c.h.b16 %v3136
        %v3142 = vunpack.c.l.b16 %v3137
        %v3143 = vpack.c.b16 %v3140, %v3140
        %v3144 = vpack.c.b16 %v3141, %v3141
        %v3145 = vpack.c.b16 %v3142, %v3142
        %3149 = vst.msk [vmem:[#allocation2] sm:$0xf] %vm1431, %v3143
        %3150 = vst.msk [vmem:[#allocation2 + $0x4] sm:$0xf] %vm1431, %v3144
        %v3151 = vld [vmem:[#allocation2 + $0x8] sm:$0x1]
        %v3152 = vsel %vm1436, %v3145, %v3151
        %3153 = vst [vmem:[#allocation2 + $0x8] sm:$0x1] %v3152
        %3154 = vrot.lane.b32.xlu0 %v2910, 112
        %v3155 = vpop.permute.xlu0 %3154
        %3156 = vrot.lane.b32.xlu0 %v2911, 112
        %v3157 = vpop.permute.xlu0 %3156
        %3158 = vrot.lane.b32.xlu0 %v2912, 112
        %v3159 = vpop.permute.xlu0 %3158
        %3160 = vrot.lane.b32.xlu0 %v2848, 112
        %v3161 = vpop.permute.xlu0 %3160
        %3162 = vrot.lane.b32.xlu0 %v2852, 112
        %v3163 = vpop.permute.xlu0 %3162
        %3164 = vrot.lane.b32.xlu0 %v2858, 112
        %v3165 = vpop.permute.xlu0 %3164
        %v3166 = vsel %vm1191, %v3155, 0
        %v3168 = vsel %vm1191, %v3157, 0
        %v3170 = vsel %vm1191, %v3159, 0
        %v3172 = vsel %vm1191, %v3161, 0
        %v3174 = vsel %vm1191, %v3163, 0
        %v3176 = vsel %vm1191, %v3165, 0
        %3178 = vmatprep.subr.mxu0 0.0
        %3179 = vmatpush1.xpose.msra.mxu0 %v3172
        %3180 = vmatprep.subr.mxu0 0.0
        %3181 = vmatpush1.xpose.msra.mxu0 %v3174
        %3182 = vmatprep.subr.mxu0 0.0
        %3183 = vmatpush1.xpose.msra.mxu0 %v3176
        %3184 = vmatprep.subr.mxu0 0.0
        %3185 = vmatpush1.xpose.msra.mxu0 0.0
        %3186 = vmatprep.subr.mxu0 0.0
        %3187 = vmatpush1.xpose.msra.mxu0 0.0
        %3188 = vmatprep.subr.mxu0 0.0
        %3189 = vmatpush1.xpose.msra.mxu0 0.0
        %3190 = vmatprep.subr.mxu0 0.0
        %3191 = vmatpush1.xpose.msra.mxu0 0.0
        %3192 = vmatprep.subr.mxu0 0.0
        %3193 = vmatpush1.xpose.msra.mxu0 0.0
        %3194 = vmatprep.subr.mxu0 0.0
        %3195 = vmatpush1.xpose.msra.mxu0 0.0
        %3196 = vmatprep.subr.mxu0 0.0
        %3197 = vmatpush1.xpose.msra.mxu0 0.0
        %3198 = vmatprep.subr.mxu0 0.0
        %3199 = vmatpush1.xpose.msra.mxu0 0.0
        %3200 = vmatprep.subr.mxu0 0.0
        %3201 = vmatpush1.xpose.msra.mxu0 0.0
        %3202 = vmatprep.subr.mxu0 0.0
        %3203 = vmatpush1.xpose.msra.mxu0 0.0
        %3204 = vmatprep.subr.mxu0 0.0
        %3205 = vmatpush1.xpose.msra.mxu0 0.0
        %3206 = vmatprep.subr.mxu0 0.0
        %3207 = vmatpush1.xpose.msra.mxu0 0.0
        %3208 = vmatprep.subr.mxu0 0.0
        %3209 = vmatpush1.xpose.msra.mxu0 0.0
        %3210 = vmatprep.subr.mxu0 0.0
        %3211 = vmatpush1.xpose.msra.mxu0 0.0
        %3212 = vmatprep.subr.mxu0 0.0
        %3213 = vmatpush1.xpose.msra.mxu0 0.0
        %3214 = vmatprep.subr.mxu0 0.0
        %3215 = vmatpush1.xpose.msra.mxu0 0.0
        %3216 = vmatprep.subr.mxu0 0.0
        %3217 = vmatpush1.xpose.msra.mxu0 0.0
        %3218 = vmatprep.subr.mxu0 0.0
        %3219 = vmatpush1.xpose.msra.mxu0 0.0
        %3220 = vmatprep.subr.mxu0 0.0
        %3221 = vmatpush1.xpose.msra.mxu0 0.0
        %3222 = vmatprep.subr.mxu0 0.0
        %3223 = vmatpush1.xpose.msra.mxu0 0.0
        %3224 = vmatprep.subr.mxu0 0.0
        %3225 = vmatpush1.xpose.msra.mxu0 0.0
        %3226 = vmatprep.subr.mxu0 0.0
        %3227 = vmatpush1.xpose.msra.mxu0 0.0
        %3228 = vmatprep.subr.mxu0 0.0
        %3229 = vmatpush1.xpose.msra.mxu0 0.0
        %3230 = vmatprep.subr.mxu0 0.0
        %3231 = vmatpush1.xpose.msra.mxu0 0.0
        %3232 = vmatprep.subr.mxu0 0.0
        %3233 = vmatpush1.xpose.msra.mxu0 0.0
        %3234 = vmatprep.subr.mxu0 0.0
        %3235 = vmatpush1.xpose.msra.mxu0 0.0
        %3236 = vmatprep.subr.mxu0 0.0
        %3237 = vmatpush1.xpose.msra.mxu0 0.0
        %3238 = vmatprep.subr.mxu0 0.0
        %3239 = vmatpush1.xpose.msra.mxu0 0.0
        %3240 = vmatprep.subr.mxu0 0.0
        %3241 = vmatpush1.xpose.msra.mxu0 0.0
        %3242 = vmatprep.mubr.f32.mxu0 0.0
        %3243 = vmatmul.mubr.f32.gmra.mrb[0].mxu0 %v3166
        %v3244 = vpop.f32.mrb[0].mxu0
        %v3245 = vadd.f32 0.0, %v3244
        %v3246 = vpop.f32.mrb[0].mxu0
        %3247 = vmatprep.mubr.f32.mxu0 0.0
        %3248 = vmatmul.mubr.f32.gmra.mrb[0].mxu0 %v3168
        %v3249 = vpop.f32.mrb[0].mxu0
        %v3250 = vadd.f32 0.0, %v3249
        %v3251 = vpop.f32.mrb[0].mxu0
        %3252 = vmatprep.mubr.f32.mxu0 0.0
        %3253 = vmatmul.mubr.f32.gmra.mrb[0].mxu0 %v3170
        %v3254 = vpop.f32.mrb[0].mxu0
        %v3255 = vadd.f32 0.0, %v3254
        %v3256 = vpop.f32.mrb[0].mxu0
        %3257 = vdwg.mxu0
        %v3258 = vsel %vm1290, %v3245, -inf
        %3259 = vmax.xlane.f32.xlu0 %v3258
        %v3260 = vpop.xlane.xlu0 %3259
        %v3261 = vsel %vm1290, %v3250, -inf
        %3262 = vmax.xlane.f32.xlu0 %v3261
        %v3263 = vpop.xlane.xlu0 %3262
        %v3264 = vsel %vm1297, %v3255, -inf
        %3265 = vmax.xlane.f32.xlu0 %v3264
        %v3266 = vpop.xlane.xlu0 %3265
        %v3267 = vsub.f32 %v3245, %v3260
        %v3268 = vsub.f32 %v3250, %v3263
        %v3269 = vsub.f32 %v3255, %v3266
        %v3270 = vmul.f32 %v3267, 1.442695
        %v3271 = vpow.pop %v3270
        %v3272 = vmul.f32 %v3268, 1.442695
        %v3273 = vpow.pop %v3272
        %v3274 = vmul.f32 %v3269, 1.442695
        %v3275 = vpow.pop %v3274
        %v3276 = vsel %vm1290, %v3271, 0.0
        %3277 = vadd.xlane.f32.xlu0 %v3276
        %v3278 = vpop.xlane.xlu0 %3277
        %v3279 = vsel %vm1290, %v3273, 0.0
        %3280 = vadd.xlane.f32.xlu0 %v3279
        %v3281 = vpop.xlane.xlu0 %3280
        %v3282 = vsel %vm1297, %v3275, 0.0
        %3283 = vadd.xlane.f32.xlu0 %v3282
        %v3284 = vpop.xlane.xlu0 %3283
        %v3285 = vrcp.pop %v3278
        %v3286 = vrcp.pop %v3281
        %v3287 = vrcp.pop %v3284
        %v3288 = vmul.f32 %v3271, %v3285
        %v3289 = vmul.f32 %v3273, %v3286
        %v3290 = vmul.f32 %v3275, %v3287
        %3293 = vrot.lane.b32.xlu0 %v2897, 112
        %v3294 = vpop.permute.xlu0 %3293
        %3295 = vrot.lane.b32.xlu0 %v2900, 112
        %v3296 = vpop.permute.xlu0 %3295
        %3297 = vrot.lane.b32.xlu0 %v2905, 112
        %v3298 = vpop.permute.xlu0 %3297
        %v3302 = vsel %vm1290, %v3288, 0
        %v3305 = vsel %vm1290, %v3289, 0
        %v3308 = vsel %vm1290, %v3290, 0
        %v3310 = vsel %vm1334, %v3298, 0
        %3312 = vmatprep.subr.mxu0 0.0
        %3313 = vmatpush1.msra.mxu0 %v3294
        %3314 = vmatprep.subr.mxu0 0.0
        %3315 = vmatpush1.msra.mxu0 %v3296
        %3316 = vmatprep.subr.mxu0 0.0
        %3317 = vmatpush1.msra.mxu0 %v3310
        %3318 = vmatprep.subr.mxu0 0.0
        %3319 = vmatpush1.msra.mxu0 0.0
        %3320 = vmatprep.subr.mxu0 0.0
        %3321 = vmatpush1.msra.mxu0 0.0
        %3322 = vmatprep.subr.mxu0 0.0
        %3323 = vmatpush1.msra.mxu0 0.0
        %3324 = vmatprep.subr.mxu0 0.0
        %3325 = vmatpush1.msra.mxu0 0.0
        %3326 = vmatprep.subr.mxu0 0.0
        %3327 = vmatpush1.msra.mxu0 0.0
        %3328 = vmatprep.subr.mxu0 0.0
        %3329 = vmatpush1.msra.mxu0 0.0
        %3330 = vmatprep.subr.mxu0 0.0
        %3331 = vmatpush1.msra.mxu0 0.0
        %3332 = vmatprep.subr.mxu0 0.0
        %3333 = vmatpush1.msra.mxu0 0.0
        %3334 = vmatprep.subr.mxu0 0.0
        %3335 = vmatpush1.msra.mxu0 0.0
        %3336 = vmatprep.subr.mxu0 0.0
        %3337 = vmatpush1.msra.mxu0 0.0
        %3338 = vmatprep.subr.mxu0 0.0
        %3339 = vmatpush1.msra.mxu0 0.0
        %3340 = vmatprep.subr.mxu0 0.0
        %3341 = vmatpush1.msra.mxu0 0.0
        %3342 = vmatprep.subr.mxu0 0.0
        %3343 = vmatpush1.msra.mxu0 0.0
        %3344 = vmatprep.subr.mxu0 0.0
        %3345 = vmatpush1.msra.mxu0 0.0
        %3346 = vmatprep.subr.mxu0 0.0
        %3347 = vmatpush1.msra.mxu0 0.0
        %3348 = vmatprep.subr.mxu0 0.0
        %3349 = vmatpush1.msra.mxu0 0.0
        %3350 = vmatprep.subr.mxu0 0.0
        %3351 = vmatpush1.msra.mxu0 0.0
        %3352 = vmatprep.subr.mxu0 0.0
        %3353 = vmatpush1.msra.mxu0 0.0
        %3354 = vmatprep.subr.mxu0 0.0
        %3355 = vmatpush1.msra.mxu0 0.0
        %3356 = vmatprep.subr.mxu0 0.0
        %3357 = vmatpush1.msra.mxu0 0.0
        %3358 = vmatprep.subr.mxu0 0.0
        %3359 = vmatpush1.msra.mxu0 0.0
        %3360 = vmatprep.subr.mxu0 0.0
        %3361 = vmatpush1.msra.mxu0 0.0
        %3362 = vmatprep.subr.mxu0 0.0
        %3363 = vmatpush1.msra.mxu0 0.0
        %3364 = vmatprep.subr.mxu0 0.0
        %3365 = vmatpush1.msra.mxu0 0.0
        %3366 = vmatprep.subr.mxu0 0.0
        %3367 = vmatpush1.msra.mxu0 0.0
        %3368 = vmatprep.subr.mxu0 0.0
        %3369 = vmatpush1.msra.mxu0 0.0
        %3370 = vmatprep.subr.mxu0 0.0
        %3371 = vmatpush1.msra.mxu0 0.0
        %3372 = vmatprep.subr.mxu0 0.0
        %3373 = vmatpush1.msra.mxu0 0.0
        %3374 = vmatprep.subr.mxu0 0.0
        %3375 = vmatpush1.msra.mxu0 0.0
        %3376 = vmatprep.mubr.f32.mxu0 0.0
        %3377 = vmatmul.mubr.f32.gmra.mrb[0].mxu0 %v3302
        %v3378 = vpop.f32.mrb[0].mxu0
        %v3379 = vadd.f32 0.0, %v3378
        %v3380 = vpop.f32.mrb[0].mxu0
        %3381 = vmatprep.mubr.f32.mxu0 0.0
        %3382 = vmatmul.mubr.f32.gmra.mrb[0].mxu0 %v3305
        %v3383 = vpop.f32.mrb[0].mxu0
        %v3384 = vadd.f32 0.0, %v3383
        %v3385 = vpop.f32.mrb[0].mxu0
        %3386 = vmatprep.mubr.f32.mxu0 0.0
        %3387 = vmatmul.mubr.f32.gmra.mrb[0].mxu0 %v3308
        %v3388 = vpop.f32.mrb[0].mxu0
        %v3389 = vadd.f32 0.0, %v3388
        %v3390 = vpop.f32.mrb[0].mxu0
        %3391 = vdwg.mxu0
        %v3392 = vpack.c.bf16 %v3384, %v3379
        %v3393 = vpack.c.bf16 %v3389, %v3389
        %v3396 = vunpack.c.l.b16 %v3392
        %v3397 = vunpack.c.h.b16 %v3392
        %v3398 = vunpack.c.l.b16 %v3393
        %v3399 = vpack.c.b16 %v3396, %v3396
        %v3400 = vpack.c.b16 %v3397, %v3397
        %v3401 = vpack.c.b16 %v3398, %v3398
        %3402 = vrot.lane.b32.xlu0 %v3399, 16
        %v3403 = vpop.permute.xlu0 %3402
        %3404 = vrot.lane.b32.xlu0 %v3400, 16
        %v3405 = vpop.permute.xlu0 %3404
        %3406 = vrot.lane.b32.xlu0 %v3401, 16
        %v3407 = vpop.permute.xlu0 %3406
        %3411 = vst.msk [vmem:[#allocation2] sm:$0xf] %vm1697, %v3403
        %3412 = vst.msk [vmem:[#allocation2 + $0x4] sm:$0xf] %vm1697, %v3405
        %v3413 = vld [vmem:[#allocation2 + $0x8] sm:$0x1]
        %v3414 = vsel %vm1701, %v3407, %v3413
        %3415 = vst [vmem:[#allocation2 + $0x8] sm:$0x1] %v3414
        %3416 = vrot.lane.b32.xlu0 %v2910, 96
        %v3417 = vpop.permute.xlu0 %3416
        %3418 = vrot.lane.b32.xlu0 %v2911, 96
        %v3419 = vpop.permute.xlu0 %3418
        %3420 = vrot.lane.b32.xlu0 %v2912, 96
        %v3421 = vpop.permute.xlu0 %3420
        %3422 = vrot.lane.b32.xlu0 %v2848, 96
        %v3423 = vpop.permute.xlu0 %3422
        %3424 = vrot.lane.b32.xlu0 %v2852, 96
        %v3425 = vpop.permute.xlu0 %3424
        %3426 = vrot.lane.b32.xlu0 %v2858, 96
        %v3427 = vpop.permute.xlu0 %3426
        %v3428 = vsel %vm1191, %v3417, 0
        %v3430 = vsel %vm1191, %v3419, 0
        %v3432 = vsel %vm1191, %v3421, 0
        %v3434 = vsel %vm1191, %v3423, 0
        %v3436 = vsel %vm1191, %v3425, 0
        %v3438 = vsel %vm1191, %v3427, 0
        %3440 = vmatprep.subr.mxu0 0.0
        %3441 = vmatpush1.xpose.msra.mxu0 %v3434
        %3442 = vmatprep.subr.mxu0 0.0
        %3443 = vmatpush1.xpose.msra.mxu0 %v3436
        %3444 = vmatprep.subr.mxu0 0.0
        %3445 = vmatpush1.xpose.msra.mxu0 %v3438
        %3446 = vmatprep.subr.mxu0 0.0
        %3447 = vmatpush1.xpose.msra.mxu0 0.0
        %3448 = vmatprep.subr.mxu0 0.0
        %3449 = vmatpush1.xpose.msra.mxu0 0.0
        %3450 = vmatprep.subr.mxu0 0.0
        %3451 = vmatpush1.xpose.msra.mxu0 0.0
        %3452 = vmatprep.subr.mxu0 0.0
        %3453 = vmatpush1.xpose.msra.mxu0 0.0
        %3454 = vmatprep.subr.mxu0 0.0
        %3455 = vmatpush1.xpose.msra.mxu0 0.0
        %3456 = vmatprep.subr.mxu0 0.0
        %3457 = vmatpush1.xpose.msra.mxu0 0.0
        %3458 = vmatprep.subr.mxu0 0.0
        %3459 = vmatpush1.xpose.msra.mxu0 0.0
        %3460 = vmatprep.subr.mxu0 0.0
        %3461 = vmatpush1.xpose.msra.mxu0 0.0
        %3462 = vmatprep.subr.mxu0 0.0
        %3463 = vmatpush1.xpose.msra.mxu0 0.0
        %3464 = vmatprep.subr.mxu0 0.0
        %3465 = vmatpush1.xpose.msra.mxu0 0.0
        %3466 = vmatprep.subr.mxu0 0.0
        %3467 = vmatpush1.xpose.msra.mxu0 0.0
        %3468 = vmatprep.subr.mxu0 0.0
        %3469 = vmatpush1.xpose.msra.mxu0 0.0
        %3470 = vmatprep.subr.mxu0 0.0
        %3471 = vmatpush1.xpose.msra.mxu0 0.0
        %3472 = vmatprep.subr.mxu0 0.0
        %3473 = vmatpush1.xpose.msra.mxu0 0.0
        %3474 = vmatprep.subr.mxu0 0.0
        %3475 = vmatpush1.xpose.msra.mxu0 0.0
        %3476 = vmatprep.subr.mxu0 0.0
        %3477 = vmatpush1.xpose.msra.mxu0 0.0
        %3478 = vmatprep.subr.mxu0 0.0
        %3479 = vmatpush1.xpose.msra.mxu0 0.0
        %3480 = vmatprep.subr.mxu0 0.0
        %3481 = vmatpush1.xpose.msra.mxu0 0.0
        %3482 = vmatprep.subr.mxu0 0.0
        %3483 = vmatpush1.xpose.msra.mxu0 0.0
        %3484 = vmatprep.subr.mxu0 0.0
        %3485 = vmatpush1.xpose.msra.mxu0 0.0
        %3486 = vmatprep.subr.mxu0 0.0
        %3487 = vmatpush1.xpose.msra.mxu0 0.0
        %3488 = vmatprep.subr.mxu0 0.0
        %3489 = vmatpush1.xpose.msra.mxu0 0.0
        %3490 = vmatprep.subr.mxu0 0.0
        %3491 = vmatpush1.xpose.msra.mxu0 0.0
        %3492 = vmatprep.subr.mxu0 0.0
        %3493 = vmatpush1.xpose.msra.mxu0 0.0
        %3494 = vmatprep.subr.mxu0 0.0
        %3495 = vmatpush1.xpose.msra.mxu0 0.0
        %3496 = vmatprep.subr.mxu0 0.0
        %3497 = vmatpush1.xpose.msra.mxu0 0.0
        %3498 = vmatprep.subr.mxu0 0.0
        %3499 = vmatpush1.xpose.msra.mxu0 0.0
        %3500 = vmatprep.subr.mxu0 0.0
        %3501 = vmatpush1.xpose.msra.mxu0 0.0
        %3502 = vmatprep.subr.mxu0 0.0
        %3503 = vmatpush1.xpose.msra.mxu0 0.0
        %3504 = vmatprep.mubr.f32.mxu0 0.0
        %3505 = vmatmul.mubr.f32.gmra.mrb[0].mxu0 %v3428
        %v3506 = vpop.f32.mrb[0].mxu0
        %v3507 = vadd.f32 0.0, %v3506
        %v3508 = vpop.f32.mrb[0].mxu0
        %3509 = vmatprep.mubr.f32.mxu0 0.0
        %3510 = vmatmul.mubr.f32.gmra.mrb[0].mxu0 %v3430
        %v3511 = vpop.f32.mrb[0].mxu0
        %v3512 = vadd.f32 0.0, %v3511
        %v3513 = vpop.f32.mrb[0].mxu0
        %3514 = vmatprep.mubr.f32.mxu0 0.0
        %3515 = vmatmul.mubr.f32.gmra.mrb[0].mxu0 %v3432
        %v3516 = vpop.f32.mrb[0].mxu0
        %v3517 = vadd.f32 0.0, %v3516
        %v3518 = vpop.f32.mrb[0].mxu0
        %3519 = vdwg.mxu0
        %v3520 = vsel %vm1290, %v3507, -inf
        %3521 = vmax.xlane.f32.xlu0 %v3520
        %v3522 = vpop.xlane.xlu0 %3521
        %v3523 = vsel %vm1290, %v3512, -inf
        %3524 = vmax.xlane.f32.xlu0 %v3523
        %v3525 = vpop.xlane.xlu0 %3524
        %v3526 = vsel %vm1297, %v3517, -inf
        %3527 = vmax.xlane.f32.xlu0 %v3526
        %v3528 = vpop.xlane.xlu0 %3527
        %v3529 = vsub.f32 %v3507, %v3522
        %v3530 = vsub.f32 %v3512, %v3525
        %v3531 = vsub.f32 %v3517, %v3528
        %v3532 = vmul.f32 %v3529, 1.442695
        %v3533 = vpow.pop %v3532
        %v3534 = vmul.f32 %v3530, 1.442695
        %v3535 = vpow.pop %v3534
        %v3536 = vmul.f32 %v3531, 1.442695
        %v3537 = vpow.pop %v3536
        %v3538 = vsel %vm1290, %v3533, 0.0
        %3539 = vadd.xlane.f32.xlu0 %v3538
        %v3540 = vpop.xlane.xlu0 %3539
        %v3541 = vsel %vm1290, %v3535, 0.0
        %3542 = vadd.xlane.f32.xlu0 %v3541
        %v3543 = vpop.xlane.xlu0 %3542
        %v3544 = vsel %vm1297, %v3537, 0.0
        %3545 = vadd.xlane.f32.xlu0 %v3544
        %v3546 = vpop.xlane.xlu0 %3545
        %v3547 = vrcp.pop %v3540
        %v3548 = vrcp.pop %v3543
        %v3549 = vrcp.pop %v3546
        %v3550 = vmul.f32 %v3533, %v3547
        %v3551 = vmul.f32 %v3535, %v3548
        %v3552 = vmul.f32 %v3537, %v3549
        %3553 = vrot.lane.b32.xlu0 %v2897, 96
        %v3554 = vpop.permute.xlu0 %3553
        %3555 = vrot.lane.b32.xlu0 %v2900, 96
        %v3556 = vpop.permute.xlu0 %3555
        %3557 = vrot.lane.b32.xlu0 %v2905, 96
        %v3558 = vpop.permute.xlu0 %3557
        %v3562 = vsel %vm1290, %v3550, 0
        %v3565 = vsel %vm1290, %v3551, 0
        %v3568 = vsel %vm1290, %v3552, 0
        %v3570 = vsel %vm1334, %v3558, 0
        %3572 = vmatprep.subr.mxu0 0.0
        %3573 = vmatpush1.msra.mxu0 %v3554
        %3574 = vmatprep.subr.mxu0 0.0
        %3575 = vmatpush1.msra.mxu0 %v3556
        %3576 = vmatprep.subr.mxu0 0.0
        %3577 = vmatpush1.msra.mxu0 %v3570
        %3578 = vmatprep.subr.mxu0 0.0
        %3579 = vmatpush1.msra.mxu0 0.0
        %3580 = vmatprep.subr.mxu0 0.0
        %3581 = vmatpush1.msra.mxu0 0.0
        %3582 = vmatprep.subr.mxu0 0.0
        %3583 = vmatpush1.msra.mxu0 0.0
        %3584 = vmatprep.subr.mxu0 0.0
        %3585 = vmatpush1.msra.mxu0 0.0
        %3586 = vmatprep.subr.mxu0 0.0
        %3587 = vmatpush1.msra.mxu0 0.0
        %3588 = vmatprep.subr.mxu0 0.0
        %3589 = vmatpush1.msra.mxu0 0.0
        %3590 = vmatprep.subr.mxu0 0.0
        %3591 = vmatpush1.msra.mxu0 0.0
        %3592 = vmatprep.subr.mxu0 0.0
        %3593 = vmatpush1.msra.mxu0 0.0
        %3594 = vmatprep.subr.mxu0 0.0
        %3595 = vmatpush1.msra.mxu0 0.0
        %3596 = vmatprep.subr.mxu0 0.0
        %3597 = vmatpush1.msra.mxu0 0.0
        %3598 = vmatprep.subr.mxu0 0.0
        %3599 = vmatpush1.msra.mxu0 0.0
        %3600 = vmatprep.subr.mxu0 0.0
        %3601 = vmatpush1.msra.mxu0 0.0
        %3602 = vmatprep.subr.mxu0 0.0
        %3603 = vmatpush1.msra.mxu0 0.0
        %3604 = vmatprep.subr.mxu0 0.0
        %3605 = vmatpush1.msra.mxu0 0.0
        %3606 = vmatprep.subr.mxu0 0.0
        %3607 = vmatpush1.msra.mxu0 0.0
        %3608 = vmatprep.subr.mxu0 0.0
        %3609 = vmatpush1.msra.mxu0 0.0
        %3610 = vmatprep.subr.mxu0 0.0
        %3611 = vmatpush1.msra.mxu0 0.0
        %3612 = vmatprep.subr.mxu0 0.0
        %3613 = vmatpush1.msra.mxu0 0.0
        %3614 = vmatprep.subr.mxu0 0.0
        %3615 = vmatpush1.msra.mxu0 0.0
        %3616 = vmatprep.subr.mxu0 0.0
        %3617 = vmatpush1.msra.mxu0 0.0
        %3618 = vmatprep.subr.mxu0 0.0
        %3619 = vmatpush1.msra.mxu0 0.0
        %3620 = vmatprep.subr.mxu0 0.0
        %3621 = vmatpush1.msra.mxu0 0.0
        %3622 = vmatprep.subr.mxu0 0.0
        %3623 = vmatpush1.msra.mxu0 0.0
        %3624 = vmatprep.subr.mxu0 0.0
        %3625 = vmatpush1.msra.mxu0 0.0
        %3626 = vmatprep.subr.mxu0 0.0
        %3627 = vmatpush1.msra.mxu0 0.0
        %3628 = vmatprep.subr.mxu0 0.0
        %3629 = vmatpush1.msra.mxu0 0.0
        %3630 = vmatprep.subr.mxu0 0.0
        %3631 = vmatpush1.msra.mxu0 0.0
        %3632 = vmatprep.subr.mxu0 0.0
        %3633 = vmatpush1.msra.mxu0 0.0
        %3634 = vmatprep.subr.mxu0 0.0
        %3635 = vmatpush1.msra.mxu0 0.0
        %3636 = vmatprep.mubr.f32.mxu0 0.0
        %3637 = vmatmul.mubr.f32.gmra.mrb[0].mxu0 %v3562
        %v3638 = vpop.f32.mrb[0].mxu0
        %v3639 = vadd.f32 0.0, %v3638
        %v3640 = vpop.f32.mrb[0].mxu0
        %3641 = vmatprep.mubr.f32.mxu0 0.0
        %3642 = vmatmul.mubr.f32.gmra.mrb[0].mxu0 %v3565
        %v3643 = vpop.f32.mrb[0].mxu0
        %v3644 = vadd.f32 0.0, %v3643
        %v3645 = vpop.f32.mrb[0].mxu0
        %3646 = vmatprep.mubr.f32.mxu0 0.0
        %3647 = vmatmul.mubr.f32.gmra.mrb[0].mxu0 %v3568
        %v3648 = vpop.f32.mrb[0].mxu0
        %v3649 = vadd.f32 0.0, %v3648
        %v3650 = vpop.f32.mrb[0].mxu0
        %3651 = vdwg.mxu0
        %v3652 = vpack.c.bf16 %v3644, %v3639
        %v3653 = vpack.c.bf16 %v3649, %v3649
        %v3656 = vunpack.c.l.b16 %v3652
        %v3657 = vunpack.c.h.b16 %v3652
        %v3658 = vunpack.c.l.b16 %v3653
        %v3659 = vpack.c.b16 %v3656, %v3656
        %v3660 = vpack.c.b16 %v3657, %v3657
        %v3661 = vpack.c.b16 %v3658, %v3658
        %3662 = vrot.lane.b32.xlu0 %v3659, 32
        %v3663 = vpop.permute.xlu0 %3662
        %3664 = vrot.lane.b32.xlu0 %v3660, 32
        %v3665 = vpop.permute.xlu0 %3664
        %3666 = vrot.lane.b32.xlu0 %v3661, 32
        %v3667 = vpop.permute.xlu0 %3666
        %3671 = vst.msk [vmem:[#allocation2] sm:$0xf] %vm1960, %v3663
        %3672 = vst.msk [vmem:[#allocation2 + $0x4] sm:$0xf] %vm1960, %v3665
        %v3673 = vld [vmem:[#allocation2 + $0x8] sm:$0x1]
        %v3674 = vsel %vm1964, %v3667, %v3673
        %3675 = vst [vmem:[#allocation2 + $0x8] sm:$0x1] %v3674
        %3676 = vrot.lane.b32.xlu0 %v2910, 80
        %v3677 = vpop.permute.xlu0 %3676
        %3678 = vrot.lane.b32.xlu0 %v2911, 80
        %v3679 = vpop.permute.xlu0 %3678
        %3680 = vrot.lane.b32.xlu0 %v2912, 80
        %v3681 = vpop.permute.xlu0 %3680
        %3682 = vrot.lane.b32.xlu0 %v2848, 80
        %v3683 = vpop.permute.xlu0 %3682
        %3684 = vrot.lane.b32.xlu0 %v2852, 80
        %v3685 = vpop.permute.xlu0 %3684
        %3686 = vrot.lane.b32.xlu0 %v2858, 80
        %v3687 = vpop.permute.xlu0 %3686
        %v3688 = vsel %vm1191, %v3677, 0
        %v3690 = vsel %vm1191, %v3679, 0
        %v3692 = vsel %vm1191, %v3681, 0
        %v3694 = vsel %vm1191, %v3683, 0
        %v3696 = vsel %vm1191, %v3685, 0
        %v3698 = vsel %vm1191, %v3687, 0
        %3700 = vmatprep.subr.mxu0 0.0
        %3701 = vmatpush1.xpose.msra.mxu0 %v3694
        %3702 = vmatprep.subr.mxu0 0.0
        %3703 = vmatpush1.xpose.msra.mxu0 %v3696
        %3704 = vmatprep.subr.mxu0 0.0
        %3705 = vmatpush1.xpose.msra.mxu0 %v3698
        %3706 = vmatprep.subr.mxu0 0.0
        %3707 = vmatpush1.xpose.msra.mxu0 0.0
        %3708 = vmatprep.subr.mxu0 0.0
        %3709 = vmatpush1.xpose.msra.mxu0 0.0
        %3710 = vmatprep.subr.mxu0 0.0
        %3711 = vmatpush1.xpose.msra.mxu0 0.0
        %3712 = vmatprep.subr.mxu0 0.0
        %3713 = vmatpush1.xpose.msra.mxu0 0.0
        %3714 = vmatprep.subr.mxu0 0.0
        %3715 = vmatpush1.xpose.msra.mxu0 0.0
        %3716 = vmatprep.subr.mxu0 0.0
        %3717 = vmatpush1.xpose.msra.mxu0 0.0
        %3718 = vmatprep.subr.mxu0 0.0
        %3719 = vmatpush1.xpose.msra.mxu0 0.0
        %3720 = vmatprep.subr.mxu0 0.0
        %3721 = vmatpush1.xpose.msra.mxu0 0.0
        %3722 = vmatprep.subr.mxu0 0.0
        %3723 = vmatpush1.xpose.msra.mxu0 0.0
        %3724 = vmatprep.subr.mxu0 0.0
        %3725 = vmatpush1.xpose.msra.mxu0 0.0
        %3726 = vmatprep.subr.mxu0 0.0
        %3727 = vmatpush1.xpose.msra.mxu0 0.0
        %3728 = vmatprep.subr.mxu0 0.0
        %3729 = vmatpush1.xpose.msra.mxu0 0.0
        %3730 = vmatprep.subr.mxu0 0.0
        %3731 = vmatpush1.xpose.msra.mxu0 0.0
        %3732 = vmatprep.subr.mxu0 0.0
        %3733 = vmatpush1.xpose.msra.mxu0 0.0
        %3734 = vmatprep.subr.mxu0 0.0
        %3735 = vmatpush1.xpose.msra.mxu0 0.0
        %3736 = vmatprep.subr.mxu0 0.0
        %3737 = vmatpush1.xpose.msra.mxu0 0.0
        %3738 = vmatprep.subr.mxu0 0.0
        %3739 = vmatpush1.xpose.msra.mxu0 0.0
        %3740 = vmatprep.subr.mxu0 0.0
        %3741 = vmatpush1.xpose.msra.mxu0 0.0
        %3742 = vmatprep.subr.mxu0 0.0
        %3743 = vmatpush1.xpose.msra.mxu0 0.0
        %3744 = vmatprep.subr.mxu0 0.0
        %3745 = vmatpush1.xpose.msra.mxu0 0.0
        %3746 = vmatprep.subr.mxu0 0.0
        %3747 = vmatpush1.xpose.msra.mxu0 0.0
        %3748 = vmatprep.subr.mxu0 0.0
        %3749 = vmatpush1.xpose.msra.mxu0 0.0
        %3750 = vmatprep.subr.mxu0 0.0
        %3751 = vmatpush1.xpose.msra.mxu0 0.0
        %3752 = vmatprep.subr.mxu0 0.0
        %3753 = vmatpush1.xpose.msra.mxu0 0.0
        %3754 = vmatprep.subr.mxu0 0.0
        %3755 = vmatpush1.xpose.msra.mxu0 0.0
        %3756 = vmatprep.subr.mxu0 0.0
        %3757 = vmatpush1.xpose.msra.mxu0 0.0
        %3758 = vmatprep.subr.mxu0 0.0
        %3759 = vmatpush1.xpose.msra.mxu0 0.0
        %3760 = vmatprep.subr.mxu0 0.0
        %3761 = vmatpush1.xpose.msra.mxu0 0.0
        %3762 = vmatprep.subr.mxu0 0.0
        %3763 = vmatpush1.xpose.msra.mxu0 0.0
        %3764 = vmatprep.mubr.f32.mxu0 0.0
        %3765 = vmatmul.mubr.f32.gmra.mrb[0].mxu0 %v3688
        %v3766 = vpop.f32.mrb[0].mxu0
        %v3767 = vadd.f32 0.0, %v3766
        %v3768 = vpop.f32.mrb[0].mxu0
        %3769 = vmatprep.mubr.f32.mxu0 0.0
        %3770 = vmatmul.mubr.f32.gmra.mrb[0].mxu0 %v3690
        %v3771 = vpop.f32.mrb[0].mxu0
        %v3772 = vadd.f32 0.0, %v3771
        %v3773 = vpop.f32.mrb[0].mxu0
        %3774 = vmatprep.mubr.f32.mxu0 0.0
        %3775 = vmatmul.mubr.f32.gmra.mrb[0].mxu0 %v3692
        %v3776 = vpop.f32.mrb[0].mxu0
        %v3777 = vadd.f32 0.0, %v3776
        %v3778 = vpop.f32.mrb[0].mxu0
        %3779 = vdwg.mxu0
        %v3780 = vsel %vm1290, %v3767, -inf
        %3781 = vmax.xlane.f32.xlu0 %v3780
        %v3782 = vpop.xlane.xlu0 %3781
        %v3783 = vsel %vm1290, %v3772, -inf
        %3784 = vmax.xlane.f32.xlu0 %v3783
        %v3785 = vpop.xlane.xlu0 %3784
        %v3786 = vsel %vm1297, %v3777, -inf
        %3787 = vmax.xlane.f32.xlu0 %v3786
        %v3788 = vpop.xlane.xlu0 %3787
        %v3789 = vsub.f32 %v3767, %v3782
        %v3790 = vsub.f32 %v3772, %v3785
        %v3791 = vsub.f32 %v3777, %v3788
        %v3792 = vmul.f32 %v3789, 1.442695
        %v3793 = vpow.pop %v3792
        %v3794 = vmul.f32 %v3790, 1.442695
        %v3795 = vpow.pop %v3794
        %v3796 = vmul.f32 %v3791, 1.442695
        %v3797 = vpow.pop %v3796
        %v3798 = vsel %vm1290, %v3793, 0.0
        %3799 = vadd.xlane.f32.xlu0 %v3798
        %v3800 = vpop.xlane.xlu0 %3799
        %v3801 = vsel %vm1290, %v3795, 0.0
        %3802 = vadd.xlane.f32.xlu0 %v3801
        %v3803 = vpop.xlane.xlu0 %3802
        %v3804 = vsel %vm1297, %v3797, 0.0
        %3805 = vadd.xlane.f32.xlu0 %v3804
        %v3806 = vpop.xlane.xlu0 %3805
        %v3807 = vrcp.pop %v3800
        %v3808 = vrcp.pop %v3803
        %v3809 = vrcp.pop %v3806
        %v3810 = vmul.f32 %v3793, %v3807
        %v3811 = vmul.f32 %v3795, %v3808
        %v3812 = vmul.f32 %v3797, %v3809
        %3813 = vrot.lane.b32.xlu0 %v2897, 80
        %v3814 = vpop.permute.xlu0 %3813
        %3815 = vrot.lane.b32.xlu0 %v2900, 80
        %v3816 = vpop.permute.xlu0 %3815
        %3817 = vrot.lane.b32.xlu0 %v2905, 80
        %v3818 = vpop.permute.xlu0 %3817
        %v3822 = vsel %vm1290, %v3810, 0
        %v3825 = vsel %vm1290, %v3811, 0
        %v3828 = vsel %vm1290, %v3812, 0
        %v3830 = vsel %vm1334, %v3818, 0
        %3832 = vmatprep.subr.mxu0 0.0
        %3833 = vmatpush1.msra.mxu0 %v3814
        %3834 = vmatprep.subr.mxu0 0.0
        %3835 = vmatpush1.msra.mxu0 %v3816
        %3836 = vmatprep.subr.mxu0 0.0
        %3837 = vmatpush1.msra.mxu0 %v3830
        %3838 = vmatprep.subr.mxu0 0.0
        %3839 = vmatpush1.msra.mxu0 0.0
        %3840 = vmatprep.subr.mxu0 0.0
        %3841 = vmatpush1.msra.mxu0 0.0
        %3842 = vmatprep.subr.mxu0 0.0
        %3843 = vmatpush1.msra.mxu0 0.0
        %3844 = vmatprep.subr.mxu0 0.0
        %3845 = vmatpush1.msra.mxu0 0.0
        %3846 = vmatprep.subr.mxu0 0.0
        %3847 = vmatpush1.msra.mxu0 0.0
        %3848 = vmatprep.subr.mxu0 0.0
        %3849 = vmatpush1.msra.mxu0 0.0
        %3850 = vmatprep.subr.mxu0 0.0
        %3851 = vmatpush1.msra.mxu0 0.0
        %3852 = vmatprep.subr.mxu0 0.0
        %3853 = vmatpush1.msra.mxu0 0.0
        %3854 = vmatprep.subr.mxu0 0.0
        %3855 = vmatpush1.msra.mxu0 0.0
        %3856 = vmatprep.subr.mxu0 0.0
        %3857 = vmatpush1.msra.mxu0 0.0
        %3858 = vmatprep.subr.mxu0 0.0
        %3859 = vmatpush1.msra.mxu0 0.0
        %3860 = vmatprep.subr.mxu0 0.0
        %3861 = vmatpush1.msra.mxu0 0.0
        %3862 = vmatprep.subr.mxu0 0.0
        %3863 = vmatpush1.msra.mxu0 0.0
        %3864 = vmatprep.subr.mxu0 0.0
        %3865 = vmatpush1.msra.mxu0 0.0
        %3866 = vmatprep.subr.mxu0 0.0
        %3867 = vmatpush1.msra.mxu0 0.0
        %3868 = vmatprep.subr.mxu0 0.0
        %3869 = vmatpush1.msra.mxu0 0.0
        %3870 = vmatprep.subr.mxu0 0.0
        %3871 = vmatpush1.msra.mxu0 0.0
        %3872 = vmatprep.subr.mxu0 0.0
        %3873 = vmatpush1.msra.mxu0 0.0
        %3874 = vmatprep.subr.mxu0 0.0
        %3875 = vmatpush1.msra.mxu0 0.0
        %3876 = vmatprep.subr.mxu0 0.0
        %3877 = vmatpush1.msra.mxu0 0.0
        %3878 = vmatprep.subr.mxu0 0.0
        %3879 = vmatpush1.msra.mxu0 0.0
        %3880 = vmatprep.subr.mxu0 0.0
        %3881 = vmatpush1.msra.mxu0 0.0
        %3882 = vmatprep.subr.mxu0 0.0
        %3883 = vmatpush1.msra.mxu0 0.0
        %3884 = vmatprep.subr.mxu0 0.0
        %3885 = vmatpush1.msra.mxu0 0.0
        %3886 = vmatprep.subr.mxu0 0.0
        %3887 = vmatpush1.msra.mxu0 0.0
        %3888 = vmatprep.subr.mxu0 0.0
        %3889 = vmatpush1.msra.mxu0 0.0
        %3890 = vmatprep.subr.mxu0 0.0
        %3891 = vmatpush1.msra.mxu0 0.0
        %3892 = vmatprep.subr.mxu0 0.0
        %3893 = vmatpush1.msra.mxu0 0.0
        %3894 = vmatprep.subr.mxu0 0.0
        %3895 = vmatpush1.msra.mxu0 0.0
        %3896 = vmatprep.mubr.f32.mxu0 0.0
        %3897 = vmatmul.mubr.f32.gmra.mrb[0].mxu0 %v3822
        %v3898 = vpop.f32.mrb[0].mxu0
        %v3899 = vadd.f32 0.0, %v3898
        %v3900 = vpop.f32.mrb[0].mxu0
        %3901 = vmatprep.mubr.f32.mxu0 0.0
        %3902 = vmatmul.mubr.f32.gmra.mrb[0].mxu0 %v3825
        %v3903 = vpop.f32.mrb[0].mxu0
        %v3904 = vadd.f32 0.0, %v3903
        %v3905 = vpop.f32.mrb[0].mxu0
        %3906 = vmatprep.mubr.f32.mxu0 0.0
        %3907 = vmatmul.mubr.f32.gmra.mrb[0].mxu0 %v3828
        %v3908 = vpop.f32.mrb[0].mxu0
        %v3909 = vadd.f32 0.0, %v3908
        %v3910 = vpop.f32.mrb[0].mxu0
        %3911 = vdwg.mxu0
        %v3912 = vpack.c.bf16 %v3904, %v3899
        %v3913 = vpack.c.bf16 %v3909, %v3909
        %v3916 = vunpack.c.l.b16 %v3912
        %v3917 = vunpack.c.h.b16 %v3912
        %v3918 = vunpack.c.l.b16 %v3913
        %v3919 = vpack.c.b16 %v3916, %v3916
        %v3920 = vpack.c.b16 %v3917, %v3917
        %v3921 = vpack.c.b16 %v3918, %v3918
        %3922 = vrot.lane.b32.xlu0 %v3919, 48
        %v3923 = vpop.permute.xlu0 %3922
        %3924 = vrot.lane.b32.xlu0 %v3920, 48
        %v3925 = vpop.permute.xlu0 %3924
        %3926 = vrot.lane.b32.xlu0 %v3921, 48
        %v3927 = vpop.permute.xlu0 %3926
        %3931 = vst.msk [vmem:[#allocation2] sm:$0xf] %vm2223, %v3923
        %3932 = vst.msk [vmem:[#allocation2 + $0x4] sm:$0xf] %vm2223, %v3925
        %v3933 = vld [vmem:[#allocation2 + $0x8] sm:$0x1]
        %v3934 = vsel %vm2227, %v3927, %v3933
        %3935 = vst [vmem:[#allocation2 + $0x8] sm:$0x1] %v3934
        %v3936 = vld [vmem:[#allocation2] sm:$0xf]
        %v3937 = vld [vmem:[#allocation2 + $0x4] sm:$0xf]
        %v3938 = vld [vmem:[#allocation2 + $0x8] sm:$0x1]
        %s3939 = scalar_lea.vmem [#allocation9], 32
        %v3940 = vld [vmem:[%s3939] sm:$0xf]
        %v3941 = vld [vmem:[%s3939 + $0x4] sm:$0xf]
        %v3942 = vld [vmem:[%s3939 + $0x8] sm:$0xf]
        %v3943 = vld [vmem:[%s3939 + $0xc] sm:$0xf]
        %v3944 = vld [vmem:[%s3939 + $0x10] sm:$0xf]
        %v3945 = vld [vmem:[%s3939 + $0x14] sm:$0xf]
        %v3946 = vld [vmem:[%s3939 + $0x18] sm:$0xf]
        %v3947 = vld [vmem:[%s3939 + $0x1c] sm:$0xf]
        %v3951 = vunpack.c.l.b16 %v3936
        %v3952 = vunpack.c.l.b16 %v3937
        %v3953 = vunpack.c.l.b16 %v3938
        %v3954 = vpack.c.b16 %v3952, %v3951
        %v3955 = vpack.c.b16 %v3953, %v3953
        %v3964 = vunpack.c.l.b16 %v3940
        %v3965 = vunpack.c.l.b16 %v3941
        %v3966 = vunpack.c.l.b16 %v3942
        %v3967 = vunpack.c.l.b16 %v3943
        %v3968 = vunpack.c.l.b16 %v3944
        %v3969 = vunpack.c.l.b16 %v3945
        %v3970 = vunpack.c.l.b16 %v3946
        %v3971 = vunpack.c.l.b16 %v3947
        %v3972 = vpack.c.b16 %v3965, %v3964
        %v3973 = vpack.c.b16 %v3967, %v3966
        %v3974 = vpack.c.b16 %v3969, %v3968
        %v3975 = vpack.c.b16 %v3971, %v3970
        %v3981 = vsel %vm865, %v3954, 0
        %v3984 = vsel %vm865, %v3955, 0
        %3986 = vmatprep.subr.bf16.mxu0 0
        %3987 = vmatpush1.bf16.msra.mxu0 %v3972
        %3988 = vmatprep.subr.bf16.mxu0 0
        %3989 = vmatpush1.bf16.msra.mxu0 %v3973
        %3990 = vmatprep.subr.bf16.mxu0 0
        %3991 = vmatpush1.bf16.msra.mxu0 %v3974
        %3992 = vmatprep.subr.bf16.mxu0 0
        %3993 = vmatpush1.bf16.msra.mxu0 %v3975
        %3994 = vmatprep.subr.bf16.mxu0 0
        %3995 = vmatpush1.bf16.msra.mxu0 0
        %3996 = vmatprep.subr.bf16.mxu0 0
        %3997 = vmatpush1.bf16.msra.mxu0 0
        %3998 = vmatprep.subr.bf16.mxu0 0
        %3999 = vmatpush1.bf16.msra.mxu0 0
        %4000 = vmatprep.subr.bf16.mxu0 0
        %4001 = vmatpush1.bf16.msra.mxu0 0
        %4002 = vmatprep.subr.bf16.mxu0 0
        %4003 = vmatpush1.bf16.msra.mxu0 0
        %4004 = vmatprep.subr.bf16.mxu0 0
        %4005 = vmatpush1.bf16.msra.mxu0 0
        %4006 = vmatprep.subr.bf16.mxu0 0
        %4007 = vmatpush1.bf16.msra.mxu0 0
        %4008 = vmatprep.subr.bf16.mxu0 0
        %4009 = vmatpush1.bf16.msra.mxu0 0
        %4010 = vmatprep.subr.bf16.mxu0 0
        %4011 = vmatpush1.bf16.msra.mxu0 0
        %4012 = vmatprep.subr.bf16.mxu0 0
        %4013 = vmatpush1.bf16.msra.mxu0 0
        %4014 = vmatprep.subr.bf16.mxu0 0
        %4015 = vmatpush1.bf16.msra.mxu0 0
        %4016 = vmatprep.subr.bf16.mxu0 0
        %4017 = vmatpush1.bf16.msra.mxu0 0
        %4018 = vmatprep.mubr.bf16.mxu0 0
        %4019 = vmatmul.mubr.bf16.gmra.mrb[0].mxu0 %v3981
        %v4020 = vpop.f32.mrb[0].mxu0
        %v4021 = vadd.f32 0.0, %v4020
        %v4022 = vpop.f32.mrb[0].mxu0
        %v4023 = vpop.f32.mrb[0].mxu0
        %v4024 = vadd.f32 0.0, %v4023
        %v4025 = vpop.f32.mrb[0].mxu0
        %4026 = vmatprep.mubr.bf16.mxu0 0
        %4027 = vmatmul.mubr.bf16.gmra.mrb[0].mxu0 %v3984
        %v4028 = vpop.f32.mrb[0].mxu0
        %v4029 = vadd.f32 0.0, %v4028
        %v4030 = vpop.f32.mrb[0].mxu0
        %v4031 = vpop.f32.mrb[0].mxu0
        %v4032 = vpop.f32.mrb[0].mxu0
        %4033 = vdwg.mxu0
        %v4034 = vadd.f32 %v2640, %v4021
        %v4035 = vadd.f32 %v2641, %v4024
        %v4036 = vadd.f32 %v2642, %v4029
        %s4037 = scalar_lea.vmem [#allocation11], 1
        %v4038 = vld [vmem:[%s4037] sm:$0x1]
        %v4040 = vlaneseq
        %v4041 = vshrl.u32 %v4040, 7
        %v4042 = vsub.s32 0, %v4041
        %v4043 = vrot.slane %v4038, %v4042
        %v4045 = vadd.f32 %v4034, %v4043
        %v4046 = vadd.f32 %v4035, %v4043
        %v4047 = vadd.f32 %v4036, %v4043
        %s4048 = scalar_lea.vmem [#allocation12], 1
        %v4049 = vld [vmem:[%s4048] sm:$0x1]
        %s4050 = scalar_lea.vmem [#allocation14], 1
        %v4051 = vld [vmem:[%s4050] sm:$0x1]
        %v4052 = vsel %vm865, %v4045, 0.0
        %4053 = vadd.xlane.f32.xlu0 %v4052
        %v4054 = vpop.xlane.xlu0 %4053
        %v4055 = vsel %vm865, %v4046, 0.0
        %4056 = vadd.xlane.f32.xlu0 %v4055
        %v4057 = vpop.xlane.xlu0 %4056
        %v4058 = vsel %vm872, %v4047, 0.0
        %4059 = vadd.xlane.f32.xlu0 %v4058
        %v4060 = vpop.xlane.xlu0 %4059
        %v4061 = vmul.f32 %v4054, %v876
        %v4062 = vmul.f32 %v4057, %v876
        %v4063 = vmul.f32 %v4060, %v876
        %v4064 = vsub.f32 %v4045, %v4061
        %v4065 = vsub.f32 %v4046, %v4062
        %v4066 = vsub.f32 %v4047, %v4063
        %v4067 = vmul.f32 %v4064, %v4064
        %v4068 = vmul.f32 %v4065, %v4065
        %v4069 = vmul.f32 %v4066, %v4066
        %v4070 = vsel %vm865, %v4067, 0.0
        %4071 = vadd.xlane.f32.xlu0 %v4070
        %v4072 = vpop.xlane.xlu0 %4071
        %v4073 = vsel %vm865, %v4068, 0.0
        %4074 = vadd.xlane.f32.xlu0 %v4073
        %v4075 = vpop.xlane.xlu0 %4074
        %v4076 = vsel %vm872, %v4069, 0.0
        %4077 = vadd.xlane.f32.xlu0 %v4076
        %v4078 = vpop.xlane.xlu0 %4077
        %v4079 = vmul.f32 %v4072, %v876
        %v4080 = vmul.f32 %v4075, %v876
        %v4081 = vmul.f32 %v4078, %v876
        %v4082 = vadd.f32 %v4079, 1e-05
        %v4083 = vadd.f32 %v4080, 1e-05
        %v4084 = vadd.f32 %v4081, 1e-05
        %v4085 = vrsqrt.pop %v4082
        %v4086 = vrsqrt.pop %v4083
        %v4087 = vrsqrt.pop %v4084
        %v4088 = vmul.f32 %v4064, %v4085
        %v4089 = vmul.f32 %v4065, %v4086
        %v4090 = vmul.f32 %v4066, %v4087
        %v4092 = vlaneseq
        %v4093 = vshrl.u32 %v4092, 7
        %v4094 = vsub.s32 0, %v4093
        %v4095 = vrot.slane %v4049, %v4094
        %v4097 = vmul.f32 %v4088, %v4095
        %v4098 = vmul.f32 %v4089, %v4095
        %v4099 = vmul.f32 %v4090, %v4095
        %v4101 = vlaneseq
        %v4102 = vshrl.u32 %v4101, 7
        %v4103 = vsub.s32 0, %v4102
        %v4104 = vrot.slane %v4051, %v4103
        %v4106 = vadd.f32 %v4097, %v4104
        %v4107 = vadd.f32 %v4098, %v4104
        %v4108 = vadd.f32 %v4099, %v4104
        %v4109 = vpack.c.bf16 %v4107, %v4106
        %v4110 = vpack.c.bf16 %v4108, %v4108
        %s4111 = scalar_lea.vmem [#allocation15], 32
        %v4112 = vld [vmem:[%s4111] sm:$0xf]
        %v4113 = vld [vmem:[%s4111 + $0x4] sm:$0xf]
        %v4114 = vld [vmem:[%s4111 + $0x8] sm:$0xf]
        %v4115 = vld [vmem:[%s4111 + $0xc] sm:$0xf]
        %v4116 = vld [vmem:[%s4111 + $0x10] sm:$0xf]
        %v4117 = vld [vmem:[%s4111 + $0x14] sm:$0xf]
        %v4118 = vld [vmem:[%s4111 + $0x18] sm:$0xf]
        %v4119 = vld [vmem:[%s4111 + $0x1c] sm:$0xf]
        %s4120 = scalar_lea.vmem [#allocation17], 1
        %v4121 = vld [vmem:[%s4120] sm:$0x1]
        %v4123 = vlaneseq
        %v4124 = vshrl.u32 %v4123, 7
        %v4125 = vsub.s32 0, %v4124
        %v4126 = vrot.slane %v4121, %v4125
        %v4136 = vunpack.c.l.b16 %v4112
        %v4137 = vunpack.c.l.b16 %v4113
        %v4138 = vunpack.c.l.b16 %v4114
        %v4139 = vunpack.c.l.b16 %v4115
        %v4140 = vunpack.c.l.b16 %v4116
        %v4141 = vunpack.c.l.b16 %v4117
        %v4142 = vunpack.c.l.b16 %v4118
        %v4143 = vunpack.c.l.b16 %v4119
        %v4144 = vpack.c.b16 %v4137, %v4136
        %v4145 = vpack.c.b16 %v4139, %v4138
        %v4146 = vpack.c.b16 %v4141, %v4140
        %v4147 = vpack.c.b16 %v4143, %v4142
        %v4153 = vsel %vm865, %v4109, 0
        %v4156 = vsel %vm865, %v4110, 0
        %4158 = vmatprep.subr.bf16.mxu0 0
        %4159 = vmatpush1.bf16.msra.mxu0 %v4144
        %4160 = vmatprep.subr.bf16.mxu0 0
        %4161 = vmatpush1.bf16.msra.mxu0 %v4145
        %4162 = vmatprep.subr.bf16.mxu0 0
        %4163 = vmatpush1.bf16.msra.mxu0 %v4146
        %4164 = vmatprep.subr.bf16.mxu0 0
        %4165 = vmatpush1.bf16.msra.mxu0 %v4147
        %4166 = vmatprep.subr.bf16.mxu0 0
        %4167 = vmatpush1.bf16.msra.mxu0 0
        %4168 = vmatprep.subr.bf16.mxu0 0
        %4169 = vmatpush1.bf16.msra.mxu0 0
        %4170 = vmatprep.subr.bf16.mxu0 0
        %4171 = vmatpush1.bf16.msra.mxu0 0
        %4172 = vmatprep.subr.bf16.mxu0 0
        %4173 = vmatpush1.bf16.msra.mxu0 0
        %4174 = vmatprep.subr.bf16.mxu0 0
        %4175 = vmatpush1.bf16.msra.mxu0 0
        %4176 = vmatprep.subr.bf16.mxu0 0
        %4177 = vmatpush1.bf16.msra.mxu0 0
        %4178 = vmatprep.subr.bf16.mxu0 0
        %4179 = vmatpush1.bf16.msra.mxu0 0
        %4180 = vmatprep.subr.bf16.mxu0 0
        %4181 = vmatpush1.bf16.msra.mxu0 0
        %4182 = vmatprep.subr.bf16.mxu0 0
        %4183 = vmatpush1.bf16.msra.mxu0 0
        %4184 = vmatprep.subr.bf16.mxu0 0
        %4185 = vmatpush1.bf16.msra.mxu0 0
        %4186 = vmatprep.subr.bf16.mxu0 0
        %4187 = vmatpush1.bf16.msra.mxu0 0
        %4188 = vmatprep.subr.bf16.mxu0 0
        %4189 = vmatpush1.bf16.msra.mxu0 0
        %4190 = vmatprep.mubr.bf16.mxu0 0
        %4191 = vmatmul.mubr.bf16.gmra.mrb[0].mxu0 %v4153
        %v4192 = vpop.f32.mrb[0].mxu0
        %v4193 = vadd.f32 %v4126, %v4192
        %v4194 = vpop.f32.mrb[0].mxu0
        %v4195 = vpop.f32.mrb[0].mxu0
        %v4196 = vadd.f32 %v4126, %v4195
        %v4197 = vpop.f32.mrb[0].mxu0
        %4198 = vmatprep.mubr.bf16.mxu0 0
        %4199 = vmatmul.mubr.bf16.gmra.mrb[0].mxu0 %v4156
        %v4200 = vpop.f32.mrb[0].mxu0
        %v4201 = vadd.f32 %v4126, %v4200
        %v4202 = vpop.f32.mrb[0].mxu0
        %v4203 = vpop.f32.mrb[0].mxu0
        %v4204 = vpop.f32.mrb[0].mxu0
        %4205 = vdwg.mxu0
        %v4206 = vmul.f32 %v4193, 1.702
        %v4207 = vmul.f32 %v4196, 1.702
        %v4208 = vmul.f32 %v4201, 1.702
        %v4209 = vxor.u32 %v4206, 2147483648
        %v4210 = vxor.u32 %v4207, 2147483648
        %v4211 = vxor.u32 %v4208, 2147483648
        %v4212 = vmul.f32 %v4209, 1.442695
        %v4213 = vpow.pop %v4212
        %v4214 = vmul.f32 %v4210, 1.442695
        %v4215 = vpow.pop %v4214
        %v4216 = vmul.f32 %v4211, 1.442695
        %v4217 = vpow.pop %v4216
        %v4218 = vadd.f32 %v4213, 1.0
        %v4219 = vadd.f32 %v4215, 1.0
        %v4220 = vadd.f32 %v4217, 1.0
        %v4221 = vrcp.pop %v4218
        %v4222 = vmul.f32 1.0, %v4221
        %v4223 = vrcp.pop %v4219
        %v4224 = vmul.f32 1.0, %v4223
        %v4225 = vrcp.pop %v4220
        %v4226 = vmul.f32 1.0, %v4225
        %v4227 = vmul.f32 %v4193, %v4222
        %v4228 = vmul.f32 %v4196, %v4224
        %v4229 = vmul.f32 %v4201, %v4226
        %v4230 = vpack.c.bf16 %v4228, %v4227
        %v4231 = vpack.c.bf16 %v4229, %v4229
        %s4232 = scalar_lea.vmem %s15, 64
        %v4233 = vld [vmem:[%s4232] sm:$0xf]
        %v4234 = vld [vmem:[%s4232 + $0x4] sm:$0xf]
        %v4235 = vld [vmem:[%s4232 + $0x8] sm:$0xf]
        %v4236 = vld [vmem:[%s4232 + $0xc] sm:$0xf]
        %v4237 = vld [vmem:[%s4232 + $0x10] sm:$0xf]
        %v4238 = vld [vmem:[%s4232 + $0x14] sm:$0xf]
        %v4239 = vld [vmem:[%s4232 + $0x18] sm:$0xf]
        %v4240 = vld [vmem:[%s4232 + $0x1c] sm:$0xf]
        %v4241 = vld [vmem:[%s4232 + $0x20] sm:$0xf]
        %v4242 = vld [vmem:[%s4232 + $0x24] sm:$0xf]
        %v4243 = vld [vmem:[%s4232 + $0x28] sm:$0xf]
        %v4244 = vld [vmem:[%s4232 + $0x2c] sm:$0xf]
        %v4245 = vld [vmem:[%s4232 + $0x30] sm:$0xf]
        %v4246 = vld [vmem:[%s4232 + $0x34] sm:$0xf]
        %v4247 = vld [vmem:[%s4232 + $0x38] sm:$0xf]
        %v4248 = vld [vmem:[%s4232 + $0x3c] sm:$0xf]
        %s4249 = scalar_lea.vmem %s16, 1
        %v4250 = vld [vmem:[%s4249] sm:$0x1]
        %v4252 = vlaneseq
        %v4253 = vshrl.u32 %v4252, 7
        %v4254 = vsub.s32 0, %v4253
        %v4255 = vrot.slane %v4250, %v4254
        %v4273 = vunpack.c.l.b16 %v4233
        %v4274 = vunpack.c.l.b16 %v4234
        %v4275 = vunpack.c.l.b16 %v4235
        %v4276 = vunpack.c.l.b16 %v4236
        %v4277 = vunpack.c.l.b16 %v4237
        %v4278 = vunpack.c.l.b16 %v4238
        %v4279 = vunpack.c.l.b16 %v4239
        %v4280 = vunpack.c.l.b16 %v4240
        %v4281 = vunpack.c.l.b16 %v4241
        %v4282 = vunpack.c.l.b16 %v4242
        %v4283 = vunpack.c.l.b16 %v4243
        %v4284 = vunpack.c.l.b16 %v4244
        %v4285 = vunpack.c.l.b16 %v4245
        %v4286 = vunpack.c.l.b16 %v4246
        %v4287 = vunpack.c.l.b16 %v4247
        %v4288 = vunpack.c.l.b16 %v4248
        %v4289 = vpack.c.b16 %v4274, %v4273
        %v4290 = vpack.c.b16 %v4276, %v4275
        %v4291 = vpack.c.b16 %v4278, %v4277
        %v4292 = vpack.c.b16 %v4280, %v4279
        %v4293 = vpack.c.b16 %v4282, %v4281
        %v4294 = vpack.c.b16 %v4284, %v4283
        %v4295 = vpack.c.b16 %v4286, %v4285
        %v4296 = vpack.c.b16 %v4288, %v4287
        %4305 = vmatprep.subr.bf16.mxu0 0
        %4306 = vmatpush1.bf16.msra.mxu0 %v4289
        %4307 = vmatprep.subr.bf16.mxu0 0
        %4308 = vmatpush1.bf16.msra.mxu0 %v4290
        %4309 = vmatprep.subr.bf16.mxu0 0
        %4310 = vmatpush1.bf16.msra.mxu0 %v4291
        %4311 = vmatprep.subr.bf16.mxu0 0
        %4312 = vmatpush1.bf16.msra.mxu0 %v4292
        %4313 = vmatprep.subr.bf16.mxu0 0
        %4314 = vmatpush1.bf16.msra.mxu0 %v4293
        %4315 = vmatprep.subr.bf16.mxu0 0
        %4316 = vmatpush1.bf16.msra.mxu0 %v4294
        %4317 = vmatprep.subr.bf16.mxu0 0
        %4318 = vmatpush1.bf16.msra.mxu0 %v4295
        %4319 = vmatprep.subr.bf16.mxu0 0
        %4320 = vmatpush1.bf16.msra.mxu0 %v4296
        %4321 = vmatprep.subr.bf16.mxu0 0
        %4322 = vmatpush1.bf16.msra.mxu0 0
        %4323 = vmatprep.subr.bf16.mxu0 0
        %4324 = vmatpush1.bf16.msra.mxu0 0
        %4325 = vmatprep.subr.bf16.mxu0 0
        %4326 = vmatpush1.bf16.msra.mxu0 0
        %4327 = vmatprep.subr.bf16.mxu0 0
        %4328 = vmatpush1.bf16.msra.mxu0 0
        %4329 = vmatprep.subr.bf16.mxu0 0
        %4330 = vmatpush1.bf16.msra.mxu0 0
        %4331 = vmatprep.subr.bf16.mxu0 0
        %4332 = vmatpush1.bf16.msra.mxu0 0
        %4333 = vmatprep.subr.bf16.mxu0 0
        %4334 = vmatpush1.bf16.msra.mxu0 0
        %4335 = vmatprep.subr.bf16.mxu0 0
        %4336 = vmatpush1.bf16.msra.mxu0 0
        %4337 = vmatprep.mubr.bf16.mxu0 0
        %4338 = vmatmul.mubr.bf16.gmra.mrb[0].mxu0 %v4230
        %v4339 = vpop.f32.mrb[0].mxu0
        %v4340 = vadd.f32 %v4255, %v4339
        %v4341 = vpop.f32.mrb[0].mxu0
        %v4342 = vpop.f32.mrb[0].mxu0
        %v4343 = vadd.f32 %v4255, %v4342
        %v4344 = vpop.f32.mrb[0].mxu0
        %4345 = vmatprep.mubr.bf16.mxu0 0
        %4346 = vmatmul.mubr.bf16.gmra.mrb[0].mxu0 %v4231
        %v4347 = vpop.f32.mrb[0].mxu0
        %v4348 = vadd.f32 %v4255, %v4347
        %v4349 = vpop.f32.mrb[0].mxu0
        %v4350 = vpop.f32.mrb[0].mxu0
        %v4351 = vpop.f32.mrb[0].mxu0
        %4352 = vdwg.mxu0
        %v4353 = vadd.f32 %v4045, %v4340
        %v4354 = vadd.f32 %v4046, %v4343
        %v4355 = vadd.f32 %v4047, %v4348
        %4356 = vst.msk [vmem:[%s768] sm:$0xff] %vm865, %v4353
        %4357 = vst.msk [vmem:[%s768 + $0x8] sm:$0xff] %vm865, %v4354
        %4358 = vst.msk [vmem:[%s768 + $0x10] sm:$0x1] %vm872, %v4355
        %v4359 = vld [vmem:[%s17] sm:$0x1]
        %v4360 = vld [vmem:[%s18] sm:$0x1]
        %v4361 = vsel %vm872, %v4353, 0.0
        %4362 = vadd.xlane.f32.xlu0 %v4361
        %v4363 = vpop.xlane.xlu0 %4362
        %v4364 = vmul.f32 %v4363, %v876
        %v4365 = vsub.f32 %v4353, %v4364
        %v4366 = vmul.f32 %v4365, %v4365
        %v4367 = vsel %vm872, %v4366, 0.0
        %4368 = vadd.xlane.f32.xlu0 %v4367
        %v4369 = vpop.xlane.xlu0 %4368
        %v4370 = vmul.f32 %v4369, %v876
        %v4371 = vadd.f32 %v4370, 1e-05
        %v4372 = vrsqrt.pop %v4371
        %v4373 = vmul.f32 %v4365, %v4372
        %v4374 = vmul.f32 %v4373, %v4359
        %v4375 = vadd.f32 %v4374, %v4360
        %4376 = vst.msk [vmem:[%s758] sm:$0x1] %vm872, %v4375
        %p4377 = scmp.lt.s32.totalorder %s40, 1
        %s4378 = scalar_select %p4377, %s40, 1
        %s4379 = smul.addr %s4378, 3
        %s4380 = smul.addr %s4379, 8
        %s4381 = scalar_lea.vmem %s19, %s4380
        %s4382 = sand.u32 %s478, 1
        %s4383 = scalar_lea.sflag [#allocation5], %s4382
        %s4384 = sand.u32 %s478, 1
        %s4385 = scalar_lea.vmem [#allocation18], %s4384
        // Predicated region
        $region133: #{tpu_custom_call.1} parent=95 // pred_check
          %p4386 = pneg %p462
        $region134: #{tpu_custom_call.1} parent=95 // pred_check_branch
          %4388 = sbr.rel (%p4386) target = $region136
        $region135: #{tpu_custom_call.1} parent=95 // pred_region
          _
        $region136: #{tpu_custom_call.1} parent=95 // pred_fallthru
          _
        // Predicated region
        $region137: #{tpu_custom_call.1} parent=95 // pred_check
          %p4389 = pneg %p488
        $region138: #{tpu_custom_call.1} parent=95 // pred_check_branch
          %4391 = sbr.rel (%p4389) target = $region140
        $region139: #{tpu_custom_call.1} parent=95 // pred_region
          %s4393 = ssub.s32 16, 16
          %4394 = vsyncadd %s4383, %s4393
          %s4395 = smul.addr %s40, 16
          %s4396 = scalar_lea.hbm %s20, %s4395
          %s4398 = sshll.u32 %s4385, 4
          %s4399 = int_to_ptr.vmem [resolvable:$true] %s4398
          %4401 = dma.vmem_to_hbm [thread:$0]  %s4399, 16, %s4396, %s4383
        $region140: #{tpu_custom_call.1} parent=95 // pred_fallthru
          _
      $region96: #{tpu_custom_call.1} parent=5 // pred_fallthru
        _
      %p4402 = scmp.le.s32.totalorder 2, %s35
      // Predicated region
      $region141: #{tpu_custom_call.1} parent=5 // pred_check
        %p4403 = pneg %p4402
      $region142: #{tpu_custom_call.1} parent=5 // pred_check_branch
        %4405 = sbr.rel (%p4403) target = $region144
      $region143: #{tpu_custom_call.1} parent=5 // pred_region
        %s4406 = ssub.s32 %s35, 2
        // Predicated region
        $region145: #{tpu_custom_call.1} parent=143 // pred_check
          %p4407 = pneg %p468
        $region146: #{tpu_custom_call.1} parent=143 // pred_check_branch
          %4409 = sbr.rel (%p4407) target = $region148
        $region147: #{tpu_custom_call.1} parent=143 // pred_region
          %p4410 = scmp.lt.s32.totalorder %s41, 1
          %s4411 = scalar_select %p4410, %s41, 1
          %s4412 = smul.addr %s4411, 3
          %s4413 = smul.addr %s4412, 8
          %s4414 = scalar_lea.vmem %s19, %s4413
        $region148: #{tpu_custom_call.1} parent=143 // pred_fallthru
          _
        // Predicated region
        $region149: #{tpu_custom_call.1} parent=143 // pred_check
          %p4415 = pneg %p494
        $region150: #{tpu_custom_call.1} parent=143 // pred_check_branch
          %4417 = sbr.rel (%p4415) target = $region152
        $region151: #{tpu_custom_call.1} parent=143 // pred_region
          %s4418 = sand.u32 %s479, 1
          %s4419 = scalar_lea.sflag [#allocation5], %s4418
          %s4420 = sand.u32 %s479, 1
          %s4421 = scalar_lea.vmem [#allocation18], %s4420
          %4422 = dma.done %s4419, 16
        $region152: #{tpu_custom_call.1} parent=143 // pred_fallthru
          _
      $region144: #{tpu_custom_call.1} parent=5 // pred_fallthru
        _
    $region6: #{tpu_custom_call.1} parent=1 // loop_footer
      %s39 = sadd.s32 1, %s35
    $region7: #{tpu_custom_call.1} parent=1 // loop_footer_branch
      %34 = sbr.rel target = $region3
    $region8: #{tpu_custom_call.1} parent=1 // loop_exit
      _
    %4423 = vsyncpa [#allocation4], 1
    %s4424 = scalar_lea.sflag [#allocation4], 1
    %4425 = vsyncpa %s4424, 1
    %4426 = vsyncpa [#allocation7], 1
    %4427 = vsyncpa [#allocation10], 1
    %4428 = vsyncpa [#allocation13], 1
    %4429 = vsyncpa [#allocation16], 1
    %4430 = vsyncpa [#allocation5], 1
    %s4431 = scalar_lea.sflag [#allocation5], 1
    %4432 = vsyncpa %s4431, 1

</llo_original>
